<compile_context>
chip_gen: v5e
topology: v5e:2x2
jax: 0.10.0
libtpu: 0.0.40
codegen_flags: <defaults>
</compile_context>

<pallas_src>
import jax
import jax.numpy as jnp
from jax.experimental import pallas as pl
from jax.experimental.pallas import tpu as pltpu

# ---- small hyperparameters consistent with the module -----------------------
B = 2      # BATCH_SIZE
T = 8      # MAX_LENGTH (shrunk from 30 for the demo)
S = 8      # encoder source length
H = 32     # hidden_size  (4H == 128 -> fused h-projection fills one lane tile)
E = 32     # embed_dim
V = 16     # output_dim (target vocabulary size)
SOS = 0    # SOS_token


def _decoder_kernel(keys_ref, ua_keys_ref, h0_ref, emb_gates_ref, va_w_ref,
                    w_h_ref, wic_ref, b_hh_n_ref, fc_wt_ref, fc_b_ref, tgt_oh_ref,
                    tok_ref, attn_ref, loss_ref):
    Bk, Sk, Hk = keys_ref.shape
    Tk, _, Vk = tgt_oh_ref.shape

    # ---- hoisted loop-invariant VMEM loads (loaded once, reused by all steps) ----
    keys = keys_ref[...]              # (B,S,H) batch-major encoder states
    ua_keys = ua_keys_ref[...]        # (B,S,H) Ua(keys) + ua_b + wa_b
    emb_gates = emb_gates_ref[...]    # (V,3H)  relu(emb) @ Wie^T + (b_ih + b_hh[r,z])
    va_w = va_w_ref[...]              # (1,1,H)
    w_h = w_h_ref[...]                # (H,4H)  [Whh_r|Whh_z|Whh_n|Wa]^T
    wic = wic_ref[...]                # (H,3H)  context -> gates
    b_hh_n = b_hh_n_ref[...]          # (1,H)
    fc_wt = fc_wt_ref[...]            # (H,V)
    fc_b = fc_b_ref[...]              # (1,V)

    iota_v = jax.lax.broadcasted_iota(jnp.int32, (Bk, Vk), 1)        # (B,V)
    iota_tok = jax.lax.broadcasted_iota(jnp.int32, (Bk, Tk), 1)      # (B,T)   T on lanes
    iota_attn = jax.lax.broadcasted_iota(jnp.int32, (1, 1, Tk), 2)   # (1,1,T) T on lanes

    def step(i, carry):
        h, onehot, nll, tok_acc, attn_acc = carry   # (B,H),(B,V),(B,1),(B,T),(B,S,T)

        # ---- dot 1/4: fused hidden projection -> gh_r|gh_z|gh_n|wa_q (128 lanes) ----
        hproj = jnp.dot(h, w_h, preferred_element_type=jnp.float32)   # (B,4H)
        gh_r = hproj[:, 0 * Hk:1 * Hk]
        gh_z = hproj[:, 1 * Hk:2 * Hk]
        gh_n = hproj[:, 2 * Hk:3 * Hk] + b_hh_n
        wa_q = hproj[:, 3 * Hk:4 * Hk]                                # Wa(h) (bias in ua_keys)

        # ---- attention, batch-major: softmax over S (sublanes), exact divide -------
        t3 = jnp.tanh(wa_q[:, None, :] + ua_keys)                     # (B,S,H)
        scores = jnp.sum(t3 * va_w, axis=-1, keepdims=True)           # (B,S,1) (va_b dropped)
        m = jnp.max(scores, axis=1, keepdims=True)                    # (B,1,1)
        e = jnp.exp(scores - m)
        denom = jnp.sum(e, axis=1, keepdims=True)                     # (B,1,1)
        wts = e / denom                                               # (B,S,1) exact softmax
        context = jnp.sum(wts * keys, axis=1)                         # (B,H) == bmm(w, keys)

        # ---- dots 2,3/4: fused GRU input gates (embedding lookup folded into table) --
        gi = (jnp.dot(onehot, emb_gates, preferred_element_type=jnp.float32)
              + jnp.dot(context, wic, preferred_element_type=jnp.float32))   # (B,3H)
        r = jax.nn.sigmoid(gi[:, 0 * Hk:1 * Hk] + gh_r)
        z = jax.nn.sigmoid(gi[:, 1 * Hk:2 * Hk] + gh_z)
        n = jnp.tanh(gi[:, 2 * Hk:3 * Hk] + r * gh_n)
        h_new = (1.0 - z) * n + z * h                                 # (B,H)

        # ---- dot 4/4: fc + LogSoftmax -----------------------------------------------
        logits = jnp.dot(h_new, fc_wt, preferred_element_type=jnp.float32) + fc_b  # (B,V)
        lmax = jnp.max(logits, axis=-1, keepdims=True)
        lse = jnp.log(jnp.sum(jnp.exp(logits - lmax), axis=-1, keepdims=True)) + lmax
        logp = logits - lse                                           # (B,V)

        # ---- greedy token (topk(1), first-max tie break) ------------------------------
        is_max = logp == jnp.max(logp, axis=-1, keepdims=True)
        idx = jnp.min(jnp.where(is_max, iota_v, Vk), axis=-1, keepdims=True)  # (B,1) int32
        onehot_next = (iota_v == idx).astype(jnp.float32)             # next-step input

        # ---- lane-dense in-register output accumulation (single store after loop) ----
        tok_acc = tok_acc + jnp.where(iota_tok == i, idx, 0)          # (B,T)
        attn_acc = attn_acc + wts * (iota_attn == i).astype(jnp.float32)   # (B,S,T)

        # NLL kept as a per-batch vector; batch-mean reduction happens after the loop
        nll = nll + (-jnp.sum(tgt_oh_ref[i] * logp, axis=-1, keepdims=True))  # (B,1)

        return (h_new, onehot_next, nll, tok_acc, attn_acc)

    onehot0 = (iota_v == SOS).astype(jnp.float32)                     # initial input = SOS
    init = (h0_ref[...], onehot0,
            jnp.zeros((Bk, 1), jnp.float32),
            jnp.zeros((Bk, Tk), jnp.int32),
            jnp.zeros((Bk, Sk, Tk), jnp.float32))
    _, _, nll, tok_acc, attn_acc = jax.lax.fori_loop(0, Tk, step, init, unroll=True)

    tok_ref[...] = tok_acc
    attn_ref[...] = attn_acc
    loss_ref[...] = jnp.sum(nll, axis=0, keepdims=True) * (1.0 / Bk)  # sum_i mean_b NLL


def decoder_forward(params, current_state, encoder_final_layers, output_batch):
    """current_state: (num_layers=1, B, H) GRU hidden; encoder_final_layers: (S, B, H);
    output_batch: (B, T) int32 targets. Returns
    (decoder_actual_output (B,T) int32, attentions (T,B,1,S), loss scalar, correct scalar)."""
    h0 = current_state[-1]                                             # (B,H)
    keys_bm = jnp.transpose(encoder_final_layers, (1, 0, 2))           # (B,S,H) batch-major

    # ---- step-invariant precompute, hoisted out of the decode loop ---------------
    # Ua(keys) with wa_b folded in; va_b dropped (softmax is shift-invariant).
    ua_keys = (jnp.matmul(keys_bm, params['ua_w'].T)
               + params['ua_b'] + params['wa_b'])                      # (B,S,H)

    w_ih, w_hh = params['w_ih'], params['w_hh']                        # (3H,E+H), (3H,H)
    # Embedding gate table: relu(emb) @ Wie^T, with b_ih (all gates) and b_hh (r,z)
    # folded into the rows (exact, since the one-hot input sums to 1).
    bias_fold = params['b_ih'] + jnp.concatenate(
        [params['b_hh'][:2 * H], jnp.zeros((H,), jnp.float32)])
    emb_gates = jnp.maximum(params['emb'], 0.0) @ w_ih[:, :E].T + bias_fold[None, :]  # (V,3H)
    wic_all = w_ih[:, E:].T                                            # (H,3H) context part
    w_h = jnp.concatenate([w_hh.T, params['wa_w'].T], axis=1)          # (H,4H) = (32,128)
    b_hh_n = params['b_hh'][2 * H:][None, :]                           # (1,H) (r*gh_n needs it)
    va_w = params['va_w'].reshape(1, 1, H)
    fc_wt = params['fc_w'].T                                           # (H,V)
    fc_b = params['fc_b'][None, :]                                     # (1,V)
    tgt_onehot = jax.nn.one_hot(output_batch.T, V, dtype=jnp.float32)  # (T,B,V)

    kernel_inputs = (keys_bm, ua_keys, h0, emb_gates, va_w, w_h, wic_all,
                     b_hh_n, fc_wt, fc_b, tgt_onehot)

    def full(shape):
        return pl.BlockSpec(shape, lambda i, _n=len(shape): (0,) * _n)

    in_specs = [full(tuple(x.shape)) for x in kernel_inputs]
    out_specs = (
        full((B, T)),               # greedy tokens, lane-dense
        full((B, S, T)),            # attention weights, lane-dense
        full((1, 1)),               # accumulated loss
    )
    out_shape = (
        jax.ShapeDtypeStruct((B, T), jnp.int32),
        jax.ShapeDtypeStruct((B, S, T), jnp.float32),
        jax.ShapeDtypeStruct((1, 1), jnp.float32),
    )

    tok, attn, loss = pl.pallas_call(
        _decoder_kernel,
        out_shape=out_shape,
        grid_spec=pltpu.PrefetchScalarGridSpec(
            num_scalar_prefetch=0,
            grid=(1,),                       # recurrence runs entirely inside the kernel
            in_specs=in_specs,
            out_specs=out_specs,
        ),
        compiler_params=pltpu.CompilerParams(
            dimension_semantics=("arbitrary",)),
    )(*kernel_inputs)

    decoded = tok                                                       # (B,T)
    attentions = jnp.transpose(attn, (2, 0, 1))[:, :, None, :]          # (T,B,1,S)
    loss_scalar = loss[0, 0]
    correct = jnp.sum(jnp.all(decoded == output_batch, axis=1))
    return decoded, attentions, loss_scalar, correct


def init_params(key):
    ks = jax.random.split(key, 13)

    def U(k, shape, fan_in):
        b = 1.0 / float(fan_in) ** 0.5
        return jax.random.uniform(k, shape, jnp.float32, -b, b)

    return {
        'emb':  jax.random.normal(ks[0], (V, E), jnp.float32),       # nn.Embedding(V, E)
        'wa_w': U(ks[1], (H, H), H), 'wa_b': U(ks[2], (H,), H),      # Attention.Wa
        'ua_w': U(ks[3], (H, H), H), 'ua_b': U(ks[4], (H,), H),      # Attention.Ua
        'va_w': U(ks[5], (1, H), H), 'va_b': U(ks[6], (1,), H),      # Attention.Va (unused: shift-invariant)
        'w_ih': U(ks[7], (3 * H, E + H), H), 'b_ih': U(ks[8], (3 * H,), H),  # GRU ih
        'w_hh': U(ks[9], (3 * H, H), H), 'b_hh': U(ks[10], (3 * H,), H),     # GRU hh
        'fc_w': U(ks[11], (V, H), H), 'fc_b': U(ks[12], (V,), H),    # fc
    }


if __name__ == "__main__":
    key = jax.random.PRNGKey(0)
    kp, k1, k2, k3 = jax.random.split(key, 4)
    params = init_params(kp)
    current_state = jax.random.normal(k1, (1, B, H), jnp.float32)        # (num_layers, B, H)
    encoder_final_layers = jax.random.normal(k2, (S, B, H), jnp.float32) # (S, B, H)
    output_batch = jax.random.randint(k3, (B, T), 0, V, jnp.int32)       # (B, T)

    decoded, attentions, loss, correct = decoder_forward(
        params, current_state, encoder_final_layers, output_batch)
    jax.block_until_ready((decoded, attentions, loss, correct))

    assert decoded.shape == (B, T) and decoded.dtype == jnp.int32
    assert attentions.shape == (T, B, 1, S)
    assert bool(jnp.isfinite(loss))
    # attention rows must be (numerically) normalized now that the divide is exact
    assert bool(jnp.allclose(jnp.sum(attentions, axis=-1), 1.0, atol=1e-5))
    print("KERNEL_OK")
</pallas_src>

<mosaic_0001>
module attributes {stable_mosaic.version = 11 : i64} {
  func.func @_decoder_kernel(%arg0: i32, %arg1: memref<2x8x32xf32, #tpu.memory_space<vmem>>, %arg2: memref<2x8x32xf32, #tpu.memory_space<vmem>>, %arg3: memref<2x32xf32, #tpu.memory_space<vmem>>, %arg4: memref<16x96xf32, #tpu.memory_space<vmem>>, %arg5: memref<1x1x32xf32, #tpu.memory_space<vmem>>, %arg6: memref<32x128xf32, #tpu.memory_space<vmem>>, %arg7: memref<32x96xf32, #tpu.memory_space<vmem>>, %arg8: memref<1x32xf32, #tpu.memory_space<vmem>>, %arg9: memref<32x16xf32, #tpu.memory_space<vmem>>, %arg10: memref<1x16xf32, #tpu.memory_space<vmem>>, %arg11: memref<8x2x16xf32, #tpu.memory_space<vmem>>, %arg12: memref<2x8xi32, #tpu.memory_space<vmem>>, %arg13: memref<2x8x8xf32, #tpu.memory_space<vmem>>, %arg14: memref<1x1xf32, #tpu.memory_space<vmem>>) attributes {dimension_semantics = [#tpu.dimension_semantics<arbitrary>], iteration_bounds = array<i64: 1>, scalar_prefetch = 0 : i64, scratch_operands = 0 : i64, tpu.core_type = #tpu.core_type<tc>, window_params = [{pipeline_mode = #tpu.pipeline_mode<synchronous>, transform_indices = @transform_0, window_bounds = array<i64: 2, 8, 32>}, {pipeline_mode = #tpu.pipeline_mode<synchronous>, transform_indices = @transform_1, window_bounds = array<i64: 2, 8, 32>}, {pipeline_mode = #tpu.pipeline_mode<synchronous>, transform_indices = @transform_2, window_bounds = array<i64: 2, 32>}, {pipeline_mode = #tpu.pipeline_mode<synchronous>, transform_indices = @transform_3, window_bounds = array<i64: 16, 96>}, {pipeline_mode = #tpu.pipeline_mode<synchronous>, transform_indices = @transform_4, window_bounds = array<i64: 1, 1, 32>}, {pipeline_mode = #tpu.pipeline_mode<synchronous>, transform_indices = @transform_5, window_bounds = array<i64: 32, 128>}, {pipeline_mode = #tpu.pipeline_mode<synchronous>, transform_indices = @transform_6, window_bounds = array<i64: 32, 96>}, {pipeline_mode = #tpu.pipeline_mode<synchronous>, transform_indices = @transform_7, window_bounds = array<i64: 1, 32>}, {pipeline_mode = #tpu.pipeline_mode<synchronous>, transform_indices = @transform_8, window_bounds = array<i64: 32, 16>}, {pipeline_mode = #tpu.pipeline_mode<synchronous>, transform_indices = @transform_9, window_bounds = array<i64: 1, 16>}, {pipeline_mode = #tpu.pipeline_mode<synchronous>, transform_indices = @transform_10, window_bounds = array<i64: 8, 2, 16>}, {pipeline_mode = #tpu.pipeline_mode<synchronous>, transform_indices = @transform_11, window_bounds = array<i64: 2, 8>}, {pipeline_mode = #tpu.pipeline_mode<synchronous>, transform_indices = @transform_12, window_bounds = array<i64: 2, 8, 8>}, {pipeline_mode = #tpu.pipeline_mode<synchronous>, transform_indices = @transform_13, window_bounds = array<i64: 1, 1>}]} {
    %c0 = arith.constant 0 : index
    %c0_0 = arith.constant 0 : index
    %c0_1 = arith.constant 0 : index
    %0 = vector.load %arg1[%c0, %c0_0, %c0_1] : memref<2x8x32xf32, #tpu.memory_space<vmem>>, vector<2x8x32xf32>
    %c0_2 = arith.constant 0 : index
    %c0_3 = arith.constant 0 : index
    %c0_4 = arith.constant 0 : index
    %1 = vector.load %arg2[%c0_2, %c0_3, %c0_4] : memref<2x8x32xf32, #tpu.memory_space<vmem>>, vector<2x8x32xf32>
    %c0_5 = arith.constant 0 : index
    %c0_6 = arith.constant 0 : index
    %2 = vector.load %arg4[%c0_5, %c0_6] : memref<16x96xf32, #tpu.memory_space<vmem>>, vector<16x96xf32>
    %c0_7 = arith.constant 0 : index
    %c0_8 = arith.constant 0 : index
    %c0_9 = arith.constant 0 : index
    %3 = vector.load %arg5[%c0_7, %c0_8, %c0_9] : memref<1x1x32xf32, #tpu.memory_space<vmem>>, vector<1x1x32xf32>
    %c0_10 = arith.constant 0 : index
    %c0_11 = arith.constant 0 : index
    %4 = vector.load %arg6[%c0_10, %c0_11] : memref<32x128xf32, #tpu.memory_space<vmem>>, vector<32x128xf32>
    %c0_12 = arith.constant 0 : index
    %c0_13 = arith.constant 0 : index
    %5 = vector.load %arg7[%c0_12, %c0_13] : memref<32x96xf32, #tpu.memory_space<vmem>>, vector<32x96xf32>
    %c0_14 = arith.constant 0 : index
    %c0_15 = arith.constant 0 : index
    %6 = vector.load %arg8[%c0_14, %c0_15] : memref<1x32xf32, #tpu.memory_space<vmem>>, vector<1x32xf32>
    %c0_16 = arith.constant 0 : index
    %c0_17 = arith.constant 0 : index
    %7 = vector.load %arg9[%c0_16, %c0_17] : memref<32x16xf32, #tpu.memory_space<vmem>>, vector<32x16xf32>
    %c0_18 = arith.constant 0 : index
    %c0_19 = arith.constant 0 : index
    %8 = vector.load %arg10[%c0_18, %c0_19] : memref<1x16xf32, #tpu.memory_space<vmem>>, vector<1x16xf32>
    %9 = tpu.iota {dimensions = array<i32: 1>} : vector<2x16xi32>
    %10 = tpu.iota {dimensions = array<i32: 1>} : vector<2x8xi32>
    %11 = tpu.iota {dimensions = array<i32: 2>} : vector<1x1x8xi32>
    %c0_i32 = arith.constant 0 : i32
    %12 = vector.broadcast %c0_i32 : i32 to vector<2x16xi32>
    %13 = arith.cmpi eq, %9, %12 : vector<2x16xi32>
    %14 = arith.extui %13 : vector<2x16xi1> to vector<2x16xi32>
    %15 = arith.sitofp %14 : vector<2x16xi32> to vector<2x16xf32>
    %c0_20 = arith.constant 0 : index
    %c0_21 = arith.constant 0 : index
    %16 = vector.load %arg3[%c0_20, %c0_21] : memref<2x32xf32, #tpu.memory_space<vmem>>, vector<2x32xf32>
    %cst = arith.constant 0.000000e+00 : f32
    %17 = vector.broadcast %cst : f32 to vector<2x1xf32>
    %c0_i32_22 = arith.constant 0 : i32
    %18 = vector.broadcast %c0_i32_22 : i32 to vector<2x8xi32>
    %cst_23 = arith.constant 0.000000e+00 : f32
    %19 = vector.broadcast %cst_23 : f32 to vector<2x8x8xf32>
    %c0_i32_24 = arith.constant 0 : i32
    %cst_25 = arith.constant dense<0.000000e+00> : vector<2x128xf32>
    %20 = tpu.matmul %16, %4, %cst_25 {dimension_numbers = #tpu.dot_dimension_numbers<[1], [0], [0], [1], [0, 0, 1, 1], [], []>} : vector<2x32xf32>, vector<32x128xf32>, vector<2x128xf32> -> vector<2x128xf32>
    %21 = vector.extract_strided_slice %20 {offsets = [0, 0], sizes = [2, 32], strides = [1, 1]} : vector<2x128xf32> to vector<2x32xf32>
    %22 = vector.extract_strided_slice %20 {offsets = [0, 32], sizes = [2, 32], strides = [1, 1]} : vector<2x128xf32> to vector<2x32xf32>
    %23 = vector.extract_strided_slice %20 {offsets = [0, 64], sizes = [2, 32], strides = [1, 1]} : vector<2x128xf32> to vector<2x32xf32>
    %24 = vector.broadcast %6 : vector<1x32xf32> to vector<2x32xf32>
    %25 = arith.addf %23, %24 : vector<2x32xf32>
    %26 = vector.extract_strided_slice %20 {offsets = [0, 96], sizes = [2, 32], strides = [1, 1]} : vector<2x128xf32> to vector<2x32xf32>
    %27 = vector.shape_cast %26 : vector<2x32xf32> to vector<2x1x32xf32>
    %28 = vector.broadcast %27 : vector<2x1x32xf32> to vector<2x8x32xf32>
    %29 = arith.addf %28, %1 : vector<2x8x32xf32>
    %30 = math.tanh %29 : vector<2x8x32xf32>
    %31 = vector.broadcast %3 : vector<1x1x32xf32> to vector<2x8x32xf32>
    %32 = arith.mulf %30, %31 : vector<2x8x32xf32>
    %cst_26 = arith.constant dense<0.000000e+00> : vector<2x8xf32>
    %33 = vector.multi_reduction <add>, %32, %cst_26 [2] : vector<2x8x32xf32> to vector<2x8xf32>
    %34 = vector.shape_cast %33 : vector<2x8xf32> to vector<2x8x1xf32>
    %cst_27 = arith.constant dense<0xFF800000> : vector<2x1xf32>
    %35 = vector.multi_reduction <maximumf>, %34, %cst_27 [1] : vector<2x8x1xf32> to vector<2x1xf32>
    %36 = vector.shape_cast %35 : vector<2x1xf32> to vector<2x1x1xf32>
    %37 = vector.broadcast %36 : vector<2x1x1xf32> to vector<2x8x1xf32>
    %38 = arith.subf %34, %37 : vector<2x8x1xf32>
    %39 = math.exp %38 : vector<2x8x1xf32>
    %cst_28 = arith.constant dense<0.000000e+00> : vector<2x1xf32>
    %40 = vector.multi_reduction <add>, %39, %cst_28 [1] : vector<2x8x1xf32> to vector<2x1xf32>
    %41 = vector.shape_cast %40 : vector<2x1xf32> to vector<2x1x1xf32>
    %42 = vector.broadcast %41 : vector<2x1x1xf32> to vector<2x8x1xf32>
    %43 = arith.divf %39, %42 : vector<2x8x1xf32>
    %44 = vector.broadcast %43 : vector<2x8x1xf32> to vector<2x8x32xf32>
    %45 = arith.mulf %44, %0 : vector<2x8x32xf32>
    %cst_29 = arith.constant dense<0.000000e+00> : vector<2x32xf32>
    %46 = vector.multi_reduction <add>, %45, %cst_29 [1] : vector<2x8x32xf32> to vector<2x32xf32>
    %cst_30 = arith.constant dense<0.000000e+00> : vector<2x96xf32>
    %47 = tpu.matmul %15, %2, %cst_30 {dimension_numbers = #tpu.dot_dimension_numbers<[1], [0], [0], [1], [0, 0, 1, 1], [], []>} : vector<2x16xf32>, vector<16x96xf32>, vector<2x96xf32> -> vector<2x96xf32>
    %cst_31 = arith.constant dense<0.000000e+00> : vector<2x96xf32>
    %48 = tpu.matmul %46, %5, %cst_31 {dimension_numbers = #tpu.dot_dimension_numbers<[1], [0], [0], [1], [0, 0, 1, 1], [], []>} : vector<2x32xf32>, vector<32x96xf32>, vector<2x96xf32> -> vector<2x96xf32>
    %49 = arith.addf %47, %48 : vector<2x96xf32>
    %50 = vector.extract_strided_slice %49 {offsets = [0, 0], sizes = [2, 32], strides = [1, 1]} : vector<2x96xf32> to vector<2x32xf32>
    %51 = arith.addf %50, %21 : vector<2x32xf32>
    %52 = arith.negf %51 : vector<2x32xf32>
    %53 = math.exp %52 : vector<2x32xf32>
    %cst_32 = arith.constant 1.000000e+00 : f32
    %54 = vector.broadcast %cst_32 : f32 to vector<2x32xf32>
    %55 = arith.addf %54, %53 : vector<2x32xf32>
    %56 = arith.divf %54, %55 : vector<2x32xf32>
    %57 = vector.extract_strided_slice %49 {offsets = [0, 32], sizes = [2, 32], strides = [1, 1]} : vector<2x96xf32> to vector<2x32xf32>
    %58 = arith.addf %57, %22 : vector<2x32xf32>
    %59 = arith.negf %58 : vector<2x32xf32>
    %60 = math.exp %59 : vector<2x32xf32>
    %cst_33 = arith.constant 1.000000e+00 : f32
    %61 = vector.broadcast %cst_33 : f32 to vector<2x32xf32>
    %62 = arith.addf %61, %60 : vector<2x32xf32>
    %63 = arith.divf %61, %62 : vector<2x32xf32>
    %64 = vector.extract_strided_slice %49 {offsets = [0, 64], sizes = [2, 32], strides = [1, 1]} : vector<2x96xf32> to vector<2x32xf32>
    %65 = arith.mulf %56, %25 : vector<2x32xf32>
    %66 = arith.addf %64, %65 : vector<2x32xf32>
    %67 = math.tanh %66 : vector<2x32xf32>
    %cst_34 = arith.constant 1.000000e+00 : f32
    %68 = vector.broadcast %cst_34 : f32 to vector<2x32xf32>
    %69 = arith.subf %68, %63 : vector<2x32xf32>
    %70 = arith.mulf %69, %67 : vector<2x32xf32>
    %71 = arith.mulf %63, %16 : vector<2x32xf32>
    %72 = arith.addf %70, %71 : vector<2x32xf32>
    %cst_35 = arith.constant dense<0.000000e+00> : vector<2x16xf32>
    %73 = tpu.matmul %72, %7, %cst_35 {dimension_numbers = #tpu.dot_dimension_numbers<[1], [0], [0], [1], [0, 0, 1, 1], [], []>} : vector<2x32xf32>, vector<32x16xf32>, vector<2x16xf32> -> vector<2x16xf32>
    %74 = vector.broadcast %8 : vector<1x16xf32> to vector<2x16xf32>
    %75 = arith.addf %73, %74 : vector<2x16xf32>
    %cst_36 = arith.constant dense<0xFF800000> : vector<2xf32>
    %76 = vector.multi_reduction <maximumf>, %75, %cst_36 [1] : vector<2x16xf32> to vector<2xf32>
    %77 = vector.shape_cast %76 : vector<2xf32> to vector<2x1xf32>
    %78 = vector.broadcast %77 : vector<2x1xf32> to vector<2x16xf32>
    %79 = arith.subf %75, %78 : vector<2x16xf32>
    %80 = math.exp %79 : vector<2x16xf32>
    %cst_37 = arith.constant dense<0.000000e+00> : vector<2xf32>
    %81 = vector.multi_reduction <add>, %80, %cst_37 [1] : vector<2x16xf32> to vector<2xf32>
    %82 = vector.shape_cast %81 : vector<2xf32> to vector<2x1xf32>
    %83 = math.log %82 : vector<2x1xf32>
    %84 = arith.addf %83, %77 : vector<2x1xf32>
    %85 = vector.broadcast %84 : vector<2x1xf32> to vector<2x16xf32>
    %86 = arith.subf %75, %85 : vector<2x16xf32>
    %cst_38 = arith.constant dense<0xFF800000> : vector<2xf32>
    %87 = vector.multi_reduction <maximumf>, %86, %cst_38 [1] : vector<2x16xf32> to vector<2xf32>
    %88 = vector.shape_cast %87 : vector<2xf32> to vector<2x1xf32>
    %89 = vector.broadcast %88 : vector<2x1xf32> to vector<2x16xf32>
    %90 = arith.cmpf oeq, %86, %89 : vector<2x16xf32>
    %c16_i32 = arith.constant 16 : i32
    %91 = vector.broadcast %c16_i32 : i32 to vector<2x16xi32>
    %92 = arith.select %90, %9, %91 : vector<2x16xi1>, vector<2x16xi32>
    %cst_39 = arith.constant dense<2147483647> : vector<2xi32>
    %93 = vector.multi_reduction <minsi>, %92, %cst_39 [1] : vector<2x16xi32> to vector<2xi32>
    %94 = vector.shape_cast %93 : vector<2xi32> to vector<2x1xi32>
    %95 = vector.broadcast %94 : vector<2x1xi32> to vector<2x16xi32>
    %96 = arith.cmpi eq, %9, %95 : vector<2x16xi32>
    %97 = arith.extui %96 : vector<2x16xi1> to vector<2x16xi32>
    %98 = arith.sitofp %97 : vector<2x16xi32> to vector<2x16xf32>
    %99 = vector.broadcast %c0_i32_24 : i32 to vector<2x8xi32>
    %100 = arith.cmpi eq, %10, %99 : vector<2x8xi32>
    %c0_i32_40 = arith.constant 0 : i32
    %101 = vector.shape_cast %94 : vector<2x1xi32> to vector<2x1xi32>
    %102 = vector.broadcast %101 : vector<2x1xi32> to vector<2x8xi32>
    %103 = vector.broadcast %c0_i32_40 : i32 to vector<2x8xi32>
    %104 = arith.select %100, %102, %103 : vector<2x8xi1>, vector<2x8xi32>
    %105 = arith.addi %18, %104 : vector<2x8xi32>
    %106 = vector.broadcast %c0_i32_24 : i32 to vector<1x1x8xi32>
    %107 = arith.cmpi eq, %11, %106 : vector<1x1x8xi32>
    %108 = arith.extui %107 : vector<1x1x8xi1> to vector<1x1x8xi32>
    %109 = arith.sitofp %108 : vector<1x1x8xi32> to vector<1x1x8xf32>
    %110 = vector.broadcast %43 : vector<2x8x1xf32> to vector<2x8x8xf32>
    %111 = vector.broadcast %109 : vector<1x1x8xf32> to vector<2x8x8xf32>
    %112 = arith.mulf %110, %111 : vector<2x8x8xf32>
    %113 = arith.addf %19, %112 : vector<2x8x8xf32>
    %114 = arith.index_cast %c0_i32_24 : i32 to index
    %c0_41 = arith.constant 0 : index
    %c0_42 = arith.constant 0 : index
    %115 = vector.load %arg11[%114, %c0_41, %c0_42] : memref<8x2x16xf32, #tpu.memory_space<vmem>>, vector<1x2x16xf32>
    %116 = vector.shape_cast %115 : vector<1x2x16xf32> to vector<2x16xf32>
    %117 = arith.mulf %116, %86 : vector<2x16xf32>
    %cst_43 = arith.constant dense<0.000000e+00> : vector<2xf32>
    %118 = vector.multi_reduction <add>, %117, %cst_43 [1] : vector<2x16xf32> to vector<2xf32>
    %119 = vector.shape_cast %118 : vector<2xf32> to vector<2x1xf32>
    %cst_44 = arith.constant 0.000000e+00 : f32
    %120 = vector.broadcast %cst_44 : f32 to vector<2x1xf32>
    %121 = arith.subf %120, %119 : vector<2x1xf32>
    %122 = arith.addf %17, %121 : vector<2x1xf32>
    %c1_i32 = arith.constant 1 : i32
    %cst_45 = arith.constant dense<0.000000e+00> : vector<2x128xf32>
    %123 = tpu.matmul %72, %4, %cst_45 {dimension_numbers = #tpu.dot_dimension_numbers<[1], [0], [0], [1], [0, 0, 1, 1], [], []>} : vector<2x32xf32>, vector<32x128xf32>, vector<2x128xf32> -> vector<2x128xf32>
    %124 = vector.extract_strided_slice %123 {offsets = [0, 0], sizes = [2, 32], strides = [1, 1]} : vector<2x128xf32> to vector<2x32xf32>
    %125 = vector.extract_strided_slice %123 {offsets = [0, 32], sizes = [2, 32], strides = [1, 1]} : vector<2x128xf32> to vector<2x32xf32>
    %126 = vector.extract_strided_slice %123 {offsets = [0, 64], sizes = [2, 32], strides = [1, 1]} : vector<2x128xf32> to vector<2x32xf32>
    %127 = vector.broadcast %6 : vector<1x32xf32> to vector<2x32xf32>
    %128 = arith.addf %126, %127 : vector<2x32xf32>
    %129 = vector.extract_strided_slice %123 {offsets = [0, 96], sizes = [2, 32], strides = [1, 1]} : vector<2x128xf32> to vector<2x32xf32>
    %130 = vector.shape_cast %129 : vector<2x32xf32> to vector<2x1x32xf32>
    %131 = vector.broadcast %130 : vector<2x1x32xf32> to vector<2x8x32xf32>
    %132 = arith.addf %131, %1 : vector<2x8x32xf32>
    %133 = math.tanh %132 : vector<2x8x32xf32>
    %134 = vector.broadcast %3 : vector<1x1x32xf32> to vector<2x8x32xf32>
    %135 = arith.mulf %133, %134 : vector<2x8x32xf32>
    %cst_46 = arith.constant dense<0.000000e+00> : vector<2x8xf32>
    %136 = vector.multi_reduction <add>, %135, %cst_46 [2] : vector<2x8x32xf32> to vector<2x8xf32>
    %137 = vector.shape_cast %136 : vector<2x8xf32> to vector<2x8x1xf32>
    %cst_47 = arith.constant dense<0xFF800000> : vector<2x1xf32>
    %138 = vector.multi_reduction <maximumf>, %137, %cst_47 [1] : vector<2x8x1xf32> to vector<2x1xf32>
    %139 = vector.shape_cast %138 : vector<2x1xf32> to vector<2x1x1xf32>
    %140 = vector.broadcast %139 : vector<2x1x1xf32> to vector<2x8x1xf32>
    %141 = arith.subf %137, %140 : vector<2x8x1xf32>
    %142 = math.exp %141 : vector<2x8x1xf32>
    %cst_48 = arith.constant dense<0.000000e+00> : vector<2x1xf32>
    %143 = vector.multi_reduction <add>, %142, %cst_48 [1] : vector<2x8x1xf32> to vector<2x1xf32>
    %144 = vector.shape_cast %143 : vector<2x1xf32> to vector<2x1x1xf32>
    %145 = vector.broadcast %144 : vector<2x1x1xf32> to vector<2x8x1xf32>
    %146 = arith.divf %142, %145 : vector<2x8x1xf32>
    %147 = vector.broadcast %146 : vector<2x8x1xf32> to vector<2x8x32xf32>
    %148 = arith.mulf %147, %0 : vector<2x8x32xf32>
    %cst_49 = arith.constant dense<0.000000e+00> : vector<2x32xf32>
    %149 = vector.multi_reduction <add>, %148, %cst_49 [1] : vector<2x8x32xf32> to vector<2x32xf32>
    %cst_50 = arith.constant dense<0.000000e+00> : vector<2x96xf32>
    %150 = tpu.matmul %98, %2, %cst_50 {dimension_numbers = #tpu.dot_dimension_numbers<[1], [0], [0], [1], [0, 0, 1, 1], [], []>} : vector<2x16xf32>, vector<16x96xf32>, vector<2x96xf32> -> vector<2x96xf32>
    %cst_51 = arith.constant dense<0.000000e+00> : vector<2x96xf32>
    %151 = tpu.matmul %149, %5, %cst_51 {dimension_numbers = #tpu.dot_dimension_numbers<[1], [0], [0], [1], [0, 0, 1, 1], [], []>} : vector<2x32xf32>, vector<32x96xf32>, vector<2x96xf32> -> vector<2x96xf32>
    %152 = arith.addf %150, %151 : vector<2x96xf32>
    %153 = vector.extract_strided_slice %152 {offsets = [0, 0], sizes = [2, 32], strides = [1, 1]} : vector<2x96xf32> to vector<2x32xf32>
    %154 = arith.addf %153, %124 : vector<2x32xf32>
    %155 = arith.negf %154 : vector<2x32xf32>
    %156 = math.exp %155 : vector<2x32xf32>
    %cst_52 = arith.constant 1.000000e+00 : f32
    %157 = vector.broadcast %cst_52 : f32 to vector<2x32xf32>
    %158 = arith.addf %157, %156 : vector<2x32xf32>
    %159 = arith.divf %157, %158 : vector<2x32xf32>
    %160 = vector.extract_strided_slice %152 {offsets = [0, 32], sizes = [2, 32], strides = [1, 1]} : vector<2x96xf32> to vector<2x32xf32>
    %161 = arith.addf %160, %125 : vector<2x32xf32>
    %162 = arith.negf %161 : vector<2x32xf32>
    %163 = math.exp %162 : vector<2x32xf32>
    %cst_53 = arith.constant 1.000000e+00 : f32
    %164 = vector.broadcast %cst_53 : f32 to vector<2x32xf32>
    %165 = arith.addf %164, %163 : vector<2x32xf32>
    %166 = arith.divf %164, %165 : vector<2x32xf32>
    %167 = vector.extract_strided_slice %152 {offsets = [0, 64], sizes = [2, 32], strides = [1, 1]} : vector<2x96xf32> to vector<2x32xf32>
    %168 = arith.mulf %159, %128 : vector<2x32xf32>
    %169 = arith.addf %167, %168 : vector<2x32xf32>
    %170 = math.tanh %169 : vector<2x32xf32>
    %cst_54 = arith.constant 1.000000e+00 : f32
    %171 = vector.broadcast %cst_54 : f32 to vector<2x32xf32>
    %172 = arith.subf %171, %166 : vector<2x32xf32>
    %173 = arith.mulf %172, %170 : vector<2x32xf32>
    %174 = arith.mulf %166, %72 : vector<2x32xf32>
    %175 = arith.addf %173, %174 : vector<2x32xf32>
    %cst_55 = arith.constant dense<0.000000e+00> : vector<2x16xf32>
    %176 = tpu.matmul %175, %7, %cst_55 {dimension_numbers = #tpu.dot_dimension_numbers<[1], [0], [0], [1], [0, 0, 1, 1], [], []>} : vector<2x32xf32>, vector<32x16xf32>, vector<2x16xf32> -> vector<2x16xf32>
    %177 = vector.broadcast %8 : vector<1x16xf32> to vector<2x16xf32>
    %178 = arith.addf %176, %177 : vector<2x16xf32>
    %cst_56 = arith.constant dense<0xFF800000> : vector<2xf32>
    %179 = vector.multi_reduction <maximumf>, %178, %cst_56 [1] : vector<2x16xf32> to vector<2xf32>
    %180 = vector.shape_cast %179 : vector<2xf32> to vector<2x1xf32>
    %181 = vector.broadcast %180 : vector<2x1xf32> to vector<2x16xf32>
    %182 = arith.subf %178, %181 : vector<2x16xf32>
    %183 = math.exp %182 : vector<2x16xf32>
    %cst_57 = arith.constant dense<0.000000e+00> : vector<2xf32>
    %184 = vector.multi_reduction <add>, %183, %cst_57 [1] : vector<2x16xf32> to vector<2xf32>
    %185 = vector.shape_cast %184 : vector<2xf32> to vector<2x1xf32>
    %186 = math.log %185 : vector<2x1xf32>
    %187 = arith.addf %186, %180 : vector<2x1xf32>
    %188 = vector.broadcast %187 : vector<2x1xf32> to vector<2x16xf32>
    %189 = arith.subf %178, %188 : vector<2x16xf32>
    %cst_58 = arith.constant dense<0xFF800000> : vector<2xf32>
    %190 = vector.multi_reduction <maximumf>, %189, %cst_58 [1] : vector<2x16xf32> to vector<2xf32>
    %191 = vector.shape_cast %190 : vector<2xf32> to vector<2x1xf32>
    %192 = vector.broadcast %191 : vector<2x1xf32> to vector<2x16xf32>
    %193 = arith.cmpf oeq, %189, %192 : vector<2x16xf32>
    %c16_i32_59 = arith.constant 16 : i32
    %194 = vector.broadcast %c16_i32_59 : i32 to vector<2x16xi32>
    %195 = arith.select %193, %9, %194 : vector<2x16xi1>, vector<2x16xi32>
    %cst_60 = arith.constant dense<2147483647> : vector<2xi32>
    %196 = vector.multi_reduction <minsi>, %195, %cst_60 [1] : vector<2x16xi32> to vector<2xi32>
    %197 = vector.shape_cast %196 : vector<2xi32> to vector<2x1xi32>
    %198 = vector.broadcast %197 : vector<2x1xi32> to vector<2x16xi32>
    %199 = arith.cmpi eq, %9, %198 : vector<2x16xi32>
    %200 = arith.extui %199 : vector<2x16xi1> to vector<2x16xi32>
    %201 = arith.sitofp %200 : vector<2x16xi32> to vector<2x16xf32>
    %202 = vector.broadcast %c1_i32 : i32 to vector<2x8xi32>
    %203 = arith.cmpi eq, %10, %202 : vector<2x8xi32>
    %c0_i32_61 = arith.constant 0 : i32
    %204 = vector.shape_cast %197 : vector<2x1xi32> to vector<2x1xi32>
    %205 = vector.broadcast %204 : vector<2x1xi32> to vector<2x8xi32>
    %206 = vector.broadcast %c0_i32_61 : i32 to vector<2x8xi32>
    %207 = arith.select %203, %205, %206 : vector<2x8xi1>, vector<2x8xi32>
    %208 = arith.addi %105, %207 : vector<2x8xi32>
    %209 = vector.broadcast %c1_i32 : i32 to vector<1x1x8xi32>
    %210 = arith.cmpi eq, %11, %209 : vector<1x1x8xi32>
    %211 = arith.extui %210 : vector<1x1x8xi1> to vector<1x1x8xi32>
    %212 = arith.sitofp %211 : vector<1x1x8xi32> to vector<1x1x8xf32>
    %213 = vector.broadcast %146 : vector<2x8x1xf32> to vector<2x8x8xf32>
    %214 = vector.broadcast %212 : vector<1x1x8xf32> to vector<2x8x8xf32>
    %215 = arith.mulf %213, %214 : vector<2x8x8xf32>
    %216 = arith.addf %113, %215 : vector<2x8x8xf32>
    %217 = arith.index_cast %c1_i32 : i32 to index
    %c0_62 = arith.constant 0 : index
    %c0_63 = arith.constant 0 : index
    %218 = vector.load %arg11[%217, %c0_62, %c0_63] : memref<8x2x16xf32, #tpu.memory_space<vmem>>, vector<1x2x16xf32>
    %219 = vector.shape_cast %218 : vector<1x2x16xf32> to vector<2x16xf32>
    %220 = arith.mulf %219, %189 : vector<2x16xf32>
    %cst_64 = arith.constant dense<0.000000e+00> : vector<2xf32>
    %221 = vector.multi_reduction <add>, %220, %cst_64 [1] : vector<2x16xf32> to vector<2xf32>
    %222 = vector.shape_cast %221 : vector<2xf32> to vector<2x1xf32>
    %cst_65 = arith.constant 0.000000e+00 : f32
    %223 = vector.broadcast %cst_65 : f32 to vector<2x1xf32>
    %224 = arith.subf %223, %222 : vector<2x1xf32>
    %225 = arith.addf %122, %224 : vector<2x1xf32>
    %c2_i32 = arith.constant 2 : i32
    %cst_66 = arith.constant dense<0.000000e+00> : vector<2x128xf32>
    %226 = tpu.matmul %175, %4, %cst_66 {dimension_numbers = #tpu.dot_dimension_numbers<[1], [0], [0], [1], [0, 0, 1, 1], [], []>} : vector<2x32xf32>, vector<32x128xf32>, vector<2x128xf32> -> vector<2x128xf32>
    %227 = vector.extract_strided_slice %226 {offsets = [0, 0], sizes = [2, 32], strides = [1, 1]} : vector<2x128xf32> to vector<2x32xf32>
    %228 = vector.extract_strided_slice %226 {offsets = [0, 32], sizes = [2, 32], strides = [1, 1]} : vector<2x128xf32> to vector<2x32xf32>
    %229 = vector.extract_strided_slice %226 {offsets = [0, 64], sizes = [2, 32], strides = [1, 1]} : vector<2x128xf32> to vector<2x32xf32>
    %230 = vector.broadcast %6 : vector<1x32xf32> to vector<2x32xf32>
    %231 = arith.addf %229, %230 : vector<2x32xf32>
    %232 = vector.extract_strided_slice %226 {offsets = [0, 96], sizes = [2, 32], strides = [1, 1]} : vector<2x128xf32> to vector<2x32xf32>
    %233 = vector.shape_cast %232 : vector<2x32xf32> to vector<2x1x32xf32>
    %234 = vector.broadcast %233 : vector<2x1x32xf32> to vector<2x8x32xf32>
    %235 = arith.addf %234, %1 : vector<2x8x32xf32>
    %236 = math.tanh %235 : vector<2x8x32xf32>
    %237 = vector.broadcast %3 : vector<1x1x32xf32> to vector<2x8x32xf32>
    %238 = arith.mulf %236, %237 : vector<2x8x32xf32>
    %cst_67 = arith.constant dense<0.000000e+00> : vector<2x8xf32>
    %239 = vector.multi_reduction <add>, %238, %cst_67 [2] : vector<2x8x32xf32> to vector<2x8xf32>
    %240 = vector.shape_cast %239 : vector<2x8xf32> to vector<2x8x1xf32>
    %cst_68 = arith.constant dense<0xFF800000> : vector<2x1xf32>
    %241 = vector.multi_reduction <maximumf>, %240, %cst_68 [1] : vector<2x8x1xf32> to vector<2x1xf32>
    %242 = vector.shape_cast %241 : vector<2x1xf32> to vector<2x1x1xf32>
    %243 = vector.broadcast %242 : vector<2x1x1xf32> to vector<2x8x1xf32>
    %244 = arith.subf %240, %243 : vector<2x8x1xf32>
    %245 = math.exp %244 : vector<2x8x1xf32>
    %cst_69 = arith.constant dense<0.000000e+00> : vector<2x1xf32>
    %246 = vector.multi_reduction <add>, %245, %cst_69 [1] : vector<2x8x1xf32> to vector<2x1xf32>
    %247 = vector.shape_cast %246 : vector<2x1xf32> to vector<2x1x1xf32>
    %248 = vector.broadcast %247 : vector<2x1x1xf32> to vector<2x8x1xf32>
    %249 = arith.divf %245, %248 : vector<2x8x1xf32>
    %250 = vector.broadcast %249 : vector<2x8x1xf32> to vector<2x8x32xf32>
    %251 = arith.mulf %250, %0 : vector<2x8x32xf32>
    %cst_70 = arith.constant dense<0.000000e+00> : vector<2x32xf32>
    %252 = vector.multi_reduction <add>, %251, %cst_70 [1] : vector<2x8x32xf32> to vector<2x32xf32>
    %cst_71 = arith.constant dense<0.000000e+00> : vector<2x96xf32>
    %253 = tpu.matmul %201, %2, %cst_71 {dimension_numbers = #tpu.dot_dimension_numbers<[1], [0], [0], [1], [0, 0, 1, 1], [], []>} : vector<2x16xf32>, vector<16x96xf32>, vector<2x96xf32> -> vector<2x96xf32>
    %cst_72 = arith.constant dense<0.000000e+00> : vector<2x96xf32>
    %254 = tpu.matmul %252, %5, %cst_72 {dimension_numbers = #tpu.dot_dimension_numbers<[1], [0], [0], [1], [0, 0, 1, 1], [], []>} : vector<2x32xf32>, vector<32x96xf32>, vector<2x96xf32> -> vector<2x96xf32>
    %255 = arith.addf %253, %254 : vector<2x96xf32>
    %256 = vector.extract_strided_slice %255 {offsets = [0, 0], sizes = [2, 32], strides = [1, 1]} : vector<2x96xf32> to vector<2x32xf32>
    %257 = arith.addf %256, %227 : vector<2x32xf32>
    %258 = arith.negf %257 : vector<2x32xf32>
    %259 = math.exp %258 : vector<2x32xf32>
    %cst_73 = arith.constant 1.000000e+00 : f32
    %260 = vector.broadcast %cst_73 : f32 to vector<2x32xf32>
    %261 = arith.addf %260, %259 : vector<2x32xf32>
    %262 = arith.divf %260, %261 : vector<2x32xf32>
    %263 = vector.extract_strided_slice %255 {offsets = [0, 32], sizes = [2, 32], strides = [1, 1]} : vector<2x96xf32> to vector<2x32xf32>
    %264 = arith.addf %263, %228 : vector<2x32xf32>
    %265 = arith.negf %264 : vector<2x32xf32>
    %266 = math.exp %265 : vector<2x32xf32>
    %cst_74 = arith.constant 1.000000e+00 : f32
    %267 = vector.broadcast %cst_74 : f32 to vector<2x32xf32>
    %268 = arith.addf %267, %266 : vector<2x32xf32>
    %269 = arith.divf %267, %268 : vector<2x32xf32>
    %270 = vector.extract_strided_slice %255 {offsets = [0, 64], sizes = [2, 32], strides = [1, 1]} : vector<2x96xf32> to vector<2x32xf32>
    %271 = arith.mulf %262, %231 : vector<2x32xf32>
    %272 = arith.addf %270, %271 : vector<2x32xf32>
    %273 = math.tanh %272 : vector<2x32xf32>
    %cst_75 = arith.constant 1.000000e+00 : f32
    %274 = vector.broadcast %cst_75 : f32 to vector<2x32xf32>
    %275 = arith.subf %274, %269 : vector<2x32xf32>
    %276 = arith.mulf %275, %273 : vector<2x32xf32>
    %277 = arith.mulf %269, %175 : vector<2x32xf32>
    %278 = arith.addf %276, %277 : vector<2x32xf32>
    %cst_76 = arith.constant dense<0.000000e+00> : vector<2x16xf32>
    %279 = tpu.matmul %278, %7, %cst_76 {dimension_numbers = #tpu.dot_dimension_numbers<[1], [0], [0], [1], [0, 0, 1, 1], [], []>} : vector<2x32xf32>, vector<32x16xf32>, vector<2x16xf32> -> vector<2x16xf32>
    %280 = vector.broadcast %8 : vector<1x16xf32> to vector<2x16xf32>
    %281 = arith.addf %279, %280 : vector<2x16xf32>
    %cst_77 = arith.constant dense<0xFF800000> : vector<2xf32>
    %282 = vector.multi_reduction <maximumf>, %281, %cst_77 [1] : vector<2x16xf32> to vector<2xf32>
    %283 = vector.shape_cast %282 : vector<2xf32> to vector<2x1xf32>
    %284 = vector.broadcast %283 : vector<2x1xf32> to vector<2x16xf32>
    %285 = arith.subf %281, %284 : vector<2x16xf32>
    %286 = math.exp %285 : vector<2x16xf32>
    %cst_78 = arith.constant dense<0.000000e+00> : vector<2xf32>
    %287 = vector.multi_reduction <add>, %286, %cst_78 [1] : vector<2x16xf32> to vector<2xf32>
    %288 = vector.shape_cast %287 : vector<2xf32> to vector<2x1xf32>
    %289 = math.log %288 : vector<2x1xf32>
    %290 = arith.addf %289, %283 : vector<2x1xf32>
    %291 = vector.broadcast %290 : vector<2x1xf32> to vector<2x16xf32>
    %292 = arith.subf %281, %291 : vector<2x16xf32>
    %cst_79 = arith.constant dense<0xFF800000> : vector<2xf32>
    %293 = vector.multi_reduction <maximumf>, %292, %cst_79 [1] : vector<2x16xf32> to vector<2xf32>
    %294 = vector.shape_cast %293 : vector<2xf32> to vector<2x1xf32>
    %295 = vector.broadcast %294 : vector<2x1xf32> to vector<2x16xf32>
    %296 = arith.cmpf oeq, %292, %295 : vector<2x16xf32>
    %c16_i32_80 = arith.constant 16 : i32
    %297 = vector.broadcast %c16_i32_80 : i32 to vector<2x16xi32>
    %298 = arith.select %296, %9, %297 : vector<2x16xi1>, vector<2x16xi32>
    %cst_81 = arith.constant dense<2147483647> : vector<2xi32>
    %299 = vector.multi_reduction <minsi>, %298, %cst_81 [1] : vector<2x16xi32> to vector<2xi32>
    %300 = vector.shape_cast %299 : vector<2xi32> to vector<2x1xi32>
    %301 = vector.broadcast %300 : vector<2x1xi32> to vector<2x16xi32>
    %302 = arith.cmpi eq, %9, %301 : vector<2x16xi32>
    %303 = arith.extui %302 : vector<2x16xi1> to vector<2x16xi32>
    %304 = arith.sitofp %303 : vector<2x16xi32> to vector<2x16xf32>
    %305 = vector.broadcast %c2_i32 : i32 to vector<2x8xi32>
    %306 = arith.cmpi eq, %10, %305 : vector<2x8xi32>
    %c0_i32_82 = arith.constant 0 : i32
    %307 = vector.shape_cast %300 : vector<2x1xi32> to vector<2x1xi32>
    %308 = vector.broadcast %307 : vector<2x1xi32> to vector<2x8xi32>
    %309 = vector.broadcast %c0_i32_82 : i32 to vector<2x8xi32>
    %310 = arith.select %306, %308, %309 : vector<2x8xi1>, vector<2x8xi32>
    %311 = arith.addi %208, %310 : vector<2x8xi32>
    %312 = vector.broadcast %c2_i32 : i32 to vector<1x1x8xi32>
    %313 = arith.cmpi eq, %11, %312 : vector<1x1x8xi32>
    %314 = arith.extui %313 : vector<1x1x8xi1> to vector<1x1x8xi32>
    %315 = arith.sitofp %314 : vector<1x1x8xi32> to vector<1x1x8xf32>
    %316 = vector.broadcast %249 : vector<2x8x1xf32> to vector<2x8x8xf32>
    %317 = vector.broadcast %315 : vector<1x1x8xf32> to vector<2x8x8xf32>
    %318 = arith.mulf %316, %317 : vector<2x8x8xf32>
    %319 = arith.addf %216, %318 : vector<2x8x8xf32>
    %320 = arith.index_cast %c2_i32 : i32 to index
    %c0_83 = arith.constant 0 : index
    %c0_84 = arith.constant 0 : index
    %321 = vector.load %arg11[%320, %c0_83, %c0_84] : memref<8x2x16xf32, #tpu.memory_space<vmem>>, vector<1x2x16xf32>
    %322 = vector.shape_cast %321 : vector<1x2x16xf32> to vector<2x16xf32>
    %323 = arith.mulf %322, %292 : vector<2x16xf32>
    %cst_85 = arith.constant dense<0.000000e+00> : vector<2xf32>
    %324 = vector.multi_reduction <add>, %323, %cst_85 [1] : vector<2x16xf32> to vector<2xf32>
    %325 = vector.shape_cast %324 : vector<2xf32> to vector<2x1xf32>
    %cst_86 = arith.constant 0.000000e+00 : f32
    %326 = vector.broadcast %cst_86 : f32 to vector<2x1xf32>
    %327 = arith.subf %326, %325 : vector<2x1xf32>
    %328 = arith.addf %225, %327 : vector<2x1xf32>
    %c3_i32 = arith.constant 3 : i32
    %cst_87 = arith.constant dense<0.000000e+00> : vector<2x128xf32>
    %329 = tpu.matmul %278, %4, %cst_87 {dimension_numbers = #tpu.dot_dimension_numbers<[1], [0], [0], [1], [0, 0, 1, 1], [], []>} : vector<2x32xf32>, vector<32x128xf32>, vector<2x128xf32> -> vector<2x128xf32>
    %330 = vector.extract_strided_slice %329 {offsets = [0, 0], sizes = [2, 32], strides = [1, 1]} : vector<2x128xf32> to vector<2x32xf32>
    %331 = vector.extract_strided_slice %329 {offsets = [0, 32], sizes = [2, 32], strides = [1, 1]} : vector<2x128xf32> to vector<2x32xf32>
    %332 = vector.extract_strided_slice %329 {offsets = [0, 64], sizes = [2, 32], strides = [1, 1]} : vector<2x128xf32> to vector<2x32xf32>
    %333 = vector.broadcast %6 : vector<1x32xf32> to vector<2x32xf32>
    %334 = arith.addf %332, %333 : vector<2x32xf32>
    %335 = vector.extract_strided_slice %329 {offsets = [0, 96], sizes = [2, 32], strides = [1, 1]} : vector<2x128xf32> to vector<2x32xf32>
    %336 = vector.shape_cast %335 : vector<2x32xf32> to vector<2x1x32xf32>
    %337 = vector.broadcast %336 : vector<2x1x32xf32> to vector<2x8x32xf32>
    %338 = arith.addf %337, %1 : vector<2x8x32xf32>
    %339 = math.tanh %338 : vector<2x8x32xf32>
    %340 = vector.broadcast %3 : vector<1x1x32xf32> to vector<2x8x32xf32>
    %341 = arith.mulf %339, %340 : vector<2x8x32xf32>
    %cst_88 = arith.constant dense<0.000000e+00> : vector<2x8xf32>
    %342 = vector.multi_reduction <add>, %341, %cst_88 [2] : vector<2x8x32xf32> to vector<2x8xf32>
    %343 = vector.shape_cast %342 : vector<2x8xf32> to vector<2x8x1xf32>
    %cst_89 = arith.constant dense<0xFF800000> : vector<2x1xf32>
    %344 = vector.multi_reduction <maximumf>, %343, %cst_89 [1] : vector<2x8x1xf32> to vector<2x1xf32>
    %345 = vector.shape_cast %344 : vector<2x1xf32> to vector<2x1x1xf32>
    %346 = vector.broadcast %345 : vector<2x1x1xf32> to vector<2x8x1xf32>
    %347 = arith.subf %343, %346 : vector<2x8x1xf32>
    %348 = math.exp %347 : vector<2x8x1xf32>
    %cst_90 = arith.constant dense<0.000000e+00> : vector<2x1xf32>
    %349 = vector.multi_reduction <add>, %348, %cst_90 [1] : vector<2x8x1xf32> to vector<2x1xf32>
    %350 = vector.shape_cast %349 : vector<2x1xf32> to vector<2x1x1xf32>
    %351 = vector.broadcast %350 : vector<2x1x1xf32> to vector<2x8x1xf32>
    %352 = arith.divf %348, %351 : vector<2x8x1xf32>
    %353 = vector.broadcast %352 : vector<2x8x1xf32> to vector<2x8x32xf32>
    %354 = arith.mulf %353, %0 : vector<2x8x32xf32>
    %cst_91 = arith.constant dense<0.000000e+00> : vector<2x32xf32>
    %355 = vector.multi_reduction <add>, %354, %cst_91 [1] : vector<2x8x32xf32> to vector<2x32xf32>
    %cst_92 = arith.constant dense<0.000000e+00> : vector<2x96xf32>
    %356 = tpu.matmul %304, %2, %cst_92 {dimension_numbers = #tpu.dot_dimension_numbers<[1], [0], [0], [1], [0, 0, 1, 1], [], []>} : vector<2x16xf32>, vector<16x96xf32>, vector<2x96xf32> -> vector<2x96xf32>
    %cst_93 = arith.constant dense<0.000000e+00> : vector<2x96xf32>
    %357 = tpu.matmul %355, %5, %cst_93 {dimension_numbers = #tpu.dot_dimension_numbers<[1], [0], [0], [1], [0, 0, 1, 1], [], []>} : vector<2x32xf32>, vector<32x96xf32>, vector<2x96xf32> -> vector<2x96xf32>
    %358 = arith.addf %356, %357 : vector<2x96xf32>
    %359 = vector.extract_strided_slice %358 {offsets = [0, 0], sizes = [2, 32], strides = [1, 1]} : vector<2x96xf32> to vector<2x32xf32>
    %360 = arith.addf %359, %330 : vector<2x32xf32>
    %361 = arith.negf %360 : vector<2x32xf32>
    %362 = math.exp %361 : vector<2x32xf32>
    %cst_94 = arith.constant 1.000000e+00 : f32
    %363 = vector.broadcast %cst_94 : f32 to vector<2x32xf32>
    %364 = arith.addf %363, %362 : vector<2x32xf32>
    %365 = arith.divf %363, %364 : vector<2x32xf32>
    %366 = vector.extract_strided_slice %358 {offsets = [0, 32], sizes = [2, 32], strides = [1, 1]} : vector<2x96xf32> to vector<2x32xf32>
    %367 = arith.addf %366, %331 : vector<2x32xf32>
    %368 = arith.negf %367 : vector<2x32xf32>
    %369 = math.exp %368 : vector<2x32xf32>
    %cst_95 = arith.constant 1.000000e+00 : f32
    %370 = vector.broadcast %cst_95 : f32 to vector<2x32xf32>
    %371 = arith.addf %370, %369 : vector<2x32xf32>
    %372 = arith.divf %370, %371 : vector<2x32xf32>
    %373 = vector.extract_strided_slice %358 {offsets = [0, 64], sizes = [2, 32], strides = [1, 1]} : vector<2x96xf32> to vector<2x32xf32>
    %374 = arith.mulf %365, %334 : vector<2x32xf32>
    %375 = arith.addf %373, %374 : vector<2x32xf32>
    %376 = math.tanh %375 : vector<2x32xf32>
    %cst_96 = arith.constant 1.000000e+00 : f32
    %377 = vector.broadcast %cst_96 : f32 to vector<2x32xf32>
    %378 = arith.subf %377, %372 : vector<2x32xf32>
    %379 = arith.mulf %378, %376 : vector<2x32xf32>
    %380 = arith.mulf %372, %278 : vector<2x32xf32>
    %381 = arith.addf %379, %380 : vector<2x32xf32>
    %cst_97 = arith.constant dense<0.000000e+00> : vector<2x16xf32>
    %382 = tpu.matmul %381, %7, %cst_97 {dimension_numbers = #tpu.dot_dimension_numbers<[1], [0], [0], [1], [0, 0, 1, 1], [], []>} : vector<2x32xf32>, vector<32x16xf32>, vector<2x16xf32> -> vector<2x16xf32>
    %383 = vector.broadcast %8 : vector<1x16xf32> to vector<2x16xf32>
    %384 = arith.addf %382, %383 : vector<2x16xf32>
    %cst_98 = arith.constant dense<0xFF800000> : vector<2xf32>
    %385 = vector.multi_reduction <maximumf>, %384, %cst_98 [1] : vector<2x16xf32> to vector<2xf32>
    %386 = vector.shape_cast %385 : vector<2xf32> to vector<2x1xf32>
    %387 = vector.broadcast %386 : vector<2x1xf32> to vector<2x16xf32>
    %388 = arith.subf %384, %387 : vector<2x16xf32>
    %389 = math.exp %388 : vector<2x16xf32>
    %cst_99 = arith.constant dense<0.000000e+00> : vector<2xf32>
    %390 = vector.multi_reduction <add>, %389, %cst_99 [1] : vector<2x16xf32> to vector<2xf32>
    %391 = vector.shape_cast %390 : vector<2xf32> to vector<2x1xf32>
    %392 = math.log %391 : vector<2x1xf32>
    %393 = arith.addf %392, %386 : vector<2x1xf32>
    %394 = vector.broadcast %393 : vector<2x1xf32> to vector<2x16xf32>
    %395 = arith.subf %384, %394 : vector<2x16xf32>
    %cst_100 = arith.constant dense<0xFF800000> : vector<2xf32>
    %396 = vector.multi_reduction <maximumf>, %395, %cst_100 [1] : vector<2x16xf32> to vector<2xf32>
    %397 = vector.shape_cast %396 : vector<2xf32> to vector<2x1xf32>
    %398 = vector.broadcast %397 : vector<2x1xf32> to vector<2x16xf32>
    %399 = arith.cmpf oeq, %395, %398 : vector<2x16xf32>
    %c16_i32_101 = arith.constant 16 : i32
    %400 = vector.broadcast %c16_i32_101 : i32 to vector<2x16xi32>
    %401 = arith.select %399, %9, %400 : vector<2x16xi1>, vector<2x16xi32>
    %cst_102 = arith.constant dense<2147483647> : vector<2xi32>
    %402 = vector.multi_reduction <minsi>, %401, %cst_102 [1] : vector<2x16xi32> to vector<2xi32>
    %403 = vector.shape_cast %402 : vector<2xi32> to vector<2x1xi32>
    %404 = vector.broadcast %403 : vector<2x1xi32> to vector<2x16xi32>
    %405 = arith.cmpi eq, %9, %404 : vector<2x16xi32>
    %406 = arith.extui %405 : vector<2x16xi1> to vector<2x16xi32>
    %407 = arith.sitofp %406 : vector<2x16xi32> to vector<2x16xf32>
    %408 = vector.broadcast %c3_i32 : i32 to vector<2x8xi32>
    %409 = arith.cmpi eq, %10, %408 : vector<2x8xi32>
    %c0_i32_103 = arith.constant 0 : i32
    %410 = vector.shape_cast %403 : vector<2x1xi32> to vector<2x1xi32>
    %411 = vector.broadcast %410 : vector<2x1xi32> to vector<2x8xi32>
    %412 = vector.broadcast %c0_i32_103 : i32 to vector<2x8xi32>
    %413 = arith.select %409, %411, %412 : vector<2x8xi1>, vector<2x8xi32>
    %414 = arith.addi %311, %413 : vector<2x8xi32>
    %415 = vector.broadcast %c3_i32 : i32 to vector<1x1x8xi32>
    %416 = arith.cmpi eq, %11, %415 : vector<1x1x8xi32>
    %417 = arith.extui %416 : vector<1x1x8xi1> to vector<1x1x8xi32>
    %418 = arith.sitofp %417 : vector<1x1x8xi32> to vector<1x1x8xf32>
    %419 = vector.broadcast %352 : vector<2x8x1xf32> to vector<2x8x8xf32>
    %420 = vector.broadcast %418 : vector<1x1x8xf32> to vector<2x8x8xf32>
    %421 = arith.mulf %419, %420 : vector<2x8x8xf32>
    %422 = arith.addf %319, %421 : vector<2x8x8xf32>
    %423 = arith.index_cast %c3_i32 : i32 to index
    %c0_104 = arith.constant 0 : index
    %c0_105 = arith.constant 0 : index
    %424 = vector.load %arg11[%423, %c0_104, %c0_105] : memref<8x2x16xf32, #tpu.memory_space<vmem>>, vector<1x2x16xf32>
    %425 = vector.shape_cast %424 : vector<1x2x16xf32> to vector<2x16xf32>
    %426 = arith.mulf %425, %395 : vector<2x16xf32>
    %cst_106 = arith.constant dense<0.000000e+00> : vector<2xf32>
    %427 = vector.multi_reduction <add>, %426, %cst_106 [1] : vector<2x16xf32> to vector<2xf32>
    %428 = vector.shape_cast %427 : vector<2xf32> to vector<2x1xf32>
    %cst_107 = arith.constant 0.000000e+00 : f32
    %429 = vector.broadcast %cst_107 : f32 to vector<2x1xf32>
    %430 = arith.subf %429, %428 : vector<2x1xf32>
    %431 = arith.addf %328, %430 : vector<2x1xf32>
    %c4_i32 = arith.constant 4 : i32
    %cst_108 = arith.constant dense<0.000000e+00> : vector<2x128xf32>
    %432 = tpu.matmul %381, %4, %cst_108 {dimension_numbers = #tpu.dot_dimension_numbers<[1], [0], [0], [1], [0, 0, 1, 1], [], []>} : vector<2x32xf32>, vector<32x128xf32>, vector<2x128xf32> -> vector<2x128xf32>
    %433 = vector.extract_strided_slice %432 {offsets = [0, 0], sizes = [2, 32], strides = [1, 1]} : vector<2x128xf32> to vector<2x32xf32>
    %434 = vector.extract_strided_slice %432 {offsets = [0, 32], sizes = [2, 32], strides = [1, 1]} : vector<2x128xf32> to vector<2x32xf32>
    %435 = vector.extract_strided_slice %432 {offsets = [0, 64], sizes = [2, 32], strides = [1, 1]} : vector<2x128xf32> to vector<2x32xf32>
    %436 = vector.broadcast %6 : vector<1x32xf32> to vector<2x32xf32>
    %437 = arith.addf %435, %436 : vector<2x32xf32>
    %438 = vector.extract_strided_slice %432 {offsets = [0, 96], sizes = [2, 32], strides = [1, 1]} : vector<2x128xf32> to vector<2x32xf32>
    %439 = vector.shape_cast %438 : vector<2x32xf32> to vector<2x1x32xf32>
    %440 = vector.broadcast %439 : vector<2x1x32xf32> to vector<2x8x32xf32>
    %441 = arith.addf %440, %1 : vector<2x8x32xf32>
    %442 = math.tanh %441 : vector<2x8x32xf32>
    %443 = vector.broadcast %3 : vector<1x1x32xf32> to vector<2x8x32xf32>
    %444 = arith.mulf %442, %443 : vector<2x8x32xf32>
    %cst_109 = arith.constant dense<0.000000e+00> : vector<2x8xf32>
    %445 = vector.multi_reduction <add>, %444, %cst_109 [2] : vector<2x8x32xf32> to vector<2x8xf32>
    %446 = vector.shape_cast %445 : vector<2x8xf32> to vector<2x8x1xf32>
    %cst_110 = arith.constant dense<0xFF800000> : vector<2x1xf32>
    %447 = vector.multi_reduction <maximumf>, %446, %cst_110 [1] : vector<2x8x1xf32> to vector<2x1xf32>
    %448 = vector.shape_cast %447 : vector<2x1xf32> to vector<2x1x1xf32>
    %449 = vector.broadcast %448 : vector<2x1x1xf32> to vector<2x8x1xf32>
    %450 = arith.subf %446, %449 : vector<2x8x1xf32>
    %451 = math.exp %450 : vector<2x8x1xf32>
    %cst_111 = arith.constant dense<0.000000e+00> : vector<2x1xf32>
    %452 = vector.multi_reduction <add>, %451, %cst_111 [1] : vector<2x8x1xf32> to vector<2x1xf32>
    %453 = vector.shape_cast %452 : vector<2x1xf32> to vector<2x1x1xf32>
    %454 = vector.broadcast %453 : vector<2x1x1xf32> to vector<2x8x1xf32>
    %455 = arith.divf %451, %454 : vector<2x8x1xf32>
    %456 = vector.broadcast %455 : vector<2x8x1xf32> to vector<2x8x32xf32>
    %457 = arith.mulf %456, %0 : vector<2x8x32xf32>
    %cst_112 = arith.constant dense<0.000000e+00> : vector<2x32xf32>
    %458 = vector.multi_reduction <add>, %457, %cst_112 [1] : vector<2x8x32xf32> to vector<2x32xf32>
    %cst_113 = arith.constant dense<0.000000e+00> : vector<2x96xf32>
    %459 = tpu.matmul %407, %2, %cst_113 {dimension_numbers = #tpu.dot_dimension_numbers<[1], [0], [0], [1], [0, 0, 1, 1], [], []>} : vector<2x16xf32>, vector<16x96xf32>, vector<2x96xf32> -> vector<2x96xf32>
    %cst_114 = arith.constant dense<0.000000e+00> : vector<2x96xf32>
    %460 = tpu.matmul %458, %5, %cst_114 {dimension_numbers = #tpu.dot_dimension_numbers<[1], [0], [0], [1], [0, 0, 1, 1], [], []>} : vector<2x32xf32>, vector<32x96xf32>, vector<2x96xf32> -> vector<2x96xf32>
    %461 = arith.addf %459, %460 : vector<2x96xf32>
    %462 = vector.extract_strided_slice %461 {offsets = [0, 0], sizes = [2, 32], strides = [1, 1]} : vector<2x96xf32> to vector<2x32xf32>
    %463 = arith.addf %462, %433 : vector<2x32xf32>
    %464 = arith.negf %463 : vector<2x32xf32>
    %465 = math.exp %464 : vector<2x32xf32>
    %cst_115 = arith.constant 1.000000e+00 : f32
    %466 = vector.broadcast %cst_115 : f32 to vector<2x32xf32>
    %467 = arith.addf %466, %465 : vector<2x32xf32>
    %468 = arith.divf %466, %467 : vector<2x32xf32>
    %469 = vector.extract_strided_slice %461 {offsets = [0, 32], sizes = [2, 32], strides = [1, 1]} : vector<2x96xf32> to vector<2x32xf32>
    %470 = arith.addf %469, %434 : vector<2x32xf32>
    %471 = arith.negf %470 : vector<2x32xf32>
    %472 = math.exp %471 : vector<2x32xf32>
    %cst_116 = arith.constant 1.000000e+00 : f32
    %473 = vector.broadcast %cst_116 : f32 to vector<2x32xf32>
    %474 = arith.addf %473, %472 : vector<2x32xf32>
    %475 = arith.divf %473, %474 : vector<2x32xf32>
    %476 = vector.extract_strided_slice %461 {offsets = [0, 64], sizes = [2, 32], strides = [1, 1]} : vector<2x96xf32> to vector<2x32xf32>
    %477 = arith.mulf %468, %437 : vector<2x32xf32>
    %478 = arith.addf %476, %477 : vector<2x32xf32>
    %479 = math.tanh %478 : vector<2x32xf32>
    %cst_117 = arith.constant 1.000000e+00 : f32
    %480 = vector.broadcast %cst_117 : f32 to vector<2x32xf32>
    %481 = arith.subf %480, %475 : vector<2x32xf32>
    %482 = arith.mulf %481, %479 : vector<2x32xf32>
    %483 = arith.mulf %475, %381 : vector<2x32xf32>
    %484 = arith.addf %482, %483 : vector<2x32xf32>
    %cst_118 = arith.constant dense<0.000000e+00> : vector<2x16xf32>
    %485 = tpu.matmul %484, %7, %cst_118 {dimension_numbers = #tpu.dot_dimension_numbers<[1], [0], [0], [1], [0, 0, 1, 1], [], []>} : vector<2x32xf32>, vector<32x16xf32>, vector<2x16xf32> -> vector<2x16xf32>
    %486 = vector.broadcast %8 : vector<1x16xf32> to vector<2x16xf32>
    %487 = arith.addf %485, %486 : vector<2x16xf32>
    %cst_119 = arith.constant dense<0xFF800000> : vector<2xf32>
    %488 = vector.multi_reduction <maximumf>, %487, %cst_119 [1] : vector<2x16xf32> to vector<2xf32>
    %489 = vector.shape_cast %488 : vector<2xf32> to vector<2x1xf32>
    %490 = vector.broadcast %489 : vector<2x1xf32> to vector<2x16xf32>
    %491 = arith.subf %487, %490 : vector<2x16xf32>
    %492 = math.exp %491 : vector<2x16xf32>
    %cst_120 = arith.constant dense<0.000000e+00> : vector<2xf32>
    %493 = vector.multi_reduction <add>, %492, %cst_120 [1] : vector<2x16xf32> to vector<2xf32>
    %494 = vector.shape_cast %493 : vector<2xf32> to vector<2x1xf32>
    %495 = math.log %494 : vector<2x1xf32>
    %496 = arith.addf %495, %489 : vector<2x1xf32>
    %497 = vector.broadcast %496 : vector<2x1xf32> to vector<2x16xf32>
    %498 = arith.subf %487, %497 : vector<2x16xf32>
    %cst_121 = arith.constant dense<0xFF800000> : vector<2xf32>
    %499 = vector.multi_reduction <maximumf>, %498, %cst_121 [1] : vector<2x16xf32> to vector<2xf32>
    %500 = vector.shape_cast %499 : vector<2xf32> to vector<2x1xf32>
    %501 = vector.broadcast %500 : vector<2x1xf32> to vector<2x16xf32>
    %502 = arith.cmpf oeq, %498, %501 : vector<2x16xf32>
    %c16_i32_122 = arith.constant 16 : i32
    %503 = vector.broadcast %c16_i32_122 : i32 to vector<2x16xi32>
    %504 = arith.select %502, %9, %503 : vector<2x16xi1>, vector<2x16xi32>
    %cst_123 = arith.constant dense<2147483647> : vector<2xi32>
    %505 = vector.multi_reduction <minsi>, %504, %cst_123 [1] : vector<2x16xi32> to vector<2xi32>
    %506 = vector.shape_cast %505 : vector<2xi32> to vector<2x1xi32>
    %507 = vector.broadcast %506 : vector<2x1xi32> to vector<2x16xi32>
    %508 = arith.cmpi eq, %9, %507 : vector<2x16xi32>
    %509 = arith.extui %508 : vector<2x16xi1> to vector<2x16xi32>
    %510 = arith.sitofp %509 : vector<2x16xi32> to vector<2x16xf32>
    %511 = vector.broadcast %c4_i32 : i32 to vector<2x8xi32>
    %512 = arith.cmpi eq, %10, %511 : vector<2x8xi32>
    %c0_i32_124 = arith.constant 0 : i32
    %513 = vector.shape_cast %506 : vector<2x1xi32> to vector<2x1xi32>
    %514 = vector.broadcast %513 : vector<2x1xi32> to vector<2x8xi32>
    %515 = vector.broadcast %c0_i32_124 : i32 to vector<2x8xi32>
    %516 = arith.select %512, %514, %515 : vector<2x8xi1>, vector<2x8xi32>
    %517 = arith.addi %414, %516 : vector<2x8xi32>
    %518 = vector.broadcast %c4_i32 : i32 to vector<1x1x8xi32>
    %519 = arith.cmpi eq, %11, %518 : vector<1x1x8xi32>
    %520 = arith.extui %519 : vector<1x1x8xi1> to vector<1x1x8xi32>
    %521 = arith.sitofp %520 : vector<1x1x8xi32> to vector<1x1x8xf32>
    %522 = vector.broadcast %455 : vector<2x8x1xf32> to vector<2x8x8xf32>
    %523 = vector.broadcast %521 : vector<1x1x8xf32> to vector<2x8x8xf32>
    %524 = arith.mulf %522, %523 : vector<2x8x8xf32>
    %525 = arith.addf %422, %524 : vector<2x8x8xf32>
    %526 = arith.index_cast %c4_i32 : i32 to index
    %c0_125 = arith.constant 0 : index
    %c0_126 = arith.constant 0 : index
    %527 = vector.load %arg11[%526, %c0_125, %c0_126] : memref<8x2x16xf32, #tpu.memory_space<vmem>>, vector<1x2x16xf32>
    %528 = vector.shape_cast %527 : vector<1x2x16xf32> to vector<2x16xf32>
    %529 = arith.mulf %528, %498 : vector<2x16xf32>
    %cst_127 = arith.constant dense<0.000000e+00> : vector<2xf32>
    %530 = vector.multi_reduction <add>, %529, %cst_127 [1] : vector<2x16xf32> to vector<2xf32>
    %531 = vector.shape_cast %530 : vector<2xf32> to vector<2x1xf32>
    %cst_128 = arith.constant 0.000000e+00 : f32
    %532 = vector.broadcast %cst_128 : f32 to vector<2x1xf32>
    %533 = arith.subf %532, %531 : vector<2x1xf32>
    %534 = arith.addf %431, %533 : vector<2x1xf32>
    %c5_i32 = arith.constant 5 : i32
    %cst_129 = arith.constant dense<0.000000e+00> : vector<2x128xf32>
    %535 = tpu.matmul %484, %4, %cst_129 {dimension_numbers = #tpu.dot_dimension_numbers<[1], [0], [0], [1], [0, 0, 1, 1], [], []>} : vector<2x32xf32>, vector<32x128xf32>, vector<2x128xf32> -> vector<2x128xf32>
    %536 = vector.extract_strided_slice %535 {offsets = [0, 0], sizes = [2, 32], strides = [1, 1]} : vector<2x128xf32> to vector<2x32xf32>
    %537 = vector.extract_strided_slice %535 {offsets = [0, 32], sizes = [2, 32], strides = [1, 1]} : vector<2x128xf32> to vector<2x32xf32>
    %538 = vector.extract_strided_slice %535 {offsets = [0, 64], sizes = [2, 32], strides = [1, 1]} : vector<2x128xf32> to vector<2x32xf32>
    %539 = vector.broadcast %6 : vector<1x32xf32> to vector<2x32xf32>
    %540 = arith.addf %538, %539 : vector<2x32xf32>
    %541 = vector.extract_strided_slice %535 {offsets = [0, 96], sizes = [2, 32], strides = [1, 1]} : vector<2x128xf32> to vector<2x32xf32>
    %542 = vector.shape_cast %541 : vector<2x32xf32> to vector<2x1x32xf32>
    %543 = vector.broadcast %542 : vector<2x1x32xf32> to vector<2x8x32xf32>
    %544 = arith.addf %543, %1 : vector<2x8x32xf32>
    %545 = math.tanh %544 : vector<2x8x32xf32>
    %546 = vector.broadcast %3 : vector<1x1x32xf32> to vector<2x8x32xf32>
    %547 = arith.mulf %545, %546 : vector<2x8x32xf32>
    %cst_130 = arith.constant dense<0.000000e+00> : vector<2x8xf32>
    %548 = vector.multi_reduction <add>, %547, %cst_130 [2] : vector<2x8x32xf32> to vector<2x8xf32>
    %549 = vector.shape_cast %548 : vector<2x8xf32> to vector<2x8x1xf32>
    %cst_131 = arith.constant dense<0xFF800000> : vector<2x1xf32>
    %550 = vector.multi_reduction <maximumf>, %549, %cst_131 [1] : vector<2x8x1xf32> to vector<2x1xf32>
    %551 = vector.shape_cast %550 : vector<2x1xf32> to vector<2x1x1xf32>
    %552 = vector.broadcast %551 : vector<2x1x1xf32> to vector<2x8x1xf32>
    %553 = arith.subf %549, %552 : vector<2x8x1xf32>
    %554 = math.exp %553 : vector<2x8x1xf32>
    %cst_132 = arith.constant dense<0.000000e+00> : vector<2x1xf32>
    %555 = vector.multi_reduction <add>, %554, %cst_132 [1] : vector<2x8x1xf32> to vector<2x1xf32>
    %556 = vector.shape_cast %555 : vector<2x1xf32> to vector<2x1x1xf32>
    %557 = vector.broadcast %556 : vector<2x1x1xf32> to vector<2x8x1xf32>
    %558 = arith.divf %554, %557 : vector<2x8x1xf32>
    %559 = vector.broadcast %558 : vector<2x8x1xf32> to vector<2x8x32xf32>
    %560 = arith.mulf %559, %0 : vector<2x8x32xf32>
    %cst_133 = arith.constant dense<0.000000e+00> : vector<2x32xf32>
    %561 = vector.multi_reduction <add>, %560, %cst_133 [1] : vector<2x8x32xf32> to vector<2x32xf32>
    %cst_134 = arith.constant dense<0.000000e+00> : vector<2x96xf32>
    %562 = tpu.matmul %510, %2, %cst_134 {dimension_numbers = #tpu.dot_dimension_numbers<[1], [0], [0], [1], [0, 0, 1, 1], [], []>} : vector<2x16xf32>, vector<16x96xf32>, vector<2x96xf32> -> vector<2x96xf32>
    %cst_135 = arith.constant dense<0.000000e+00> : vector<2x96xf32>
    %563 = tpu.matmul %561, %5, %cst_135 {dimension_numbers = #tpu.dot_dimension_numbers<[1], [0], [0], [1], [0, 0, 1, 1], [], []>} : vector<2x32xf32>, vector<32x96xf32>, vector<2x96xf32> -> vector<2x96xf32>
    %564 = arith.addf %562, %563 : vector<2x96xf32>
    %565 = vector.extract_strided_slice %564 {offsets = [0, 0], sizes = [2, 32], strides = [1, 1]} : vector<2x96xf32> to vector<2x32xf32>
    %566 = arith.addf %565, %536 : vector<2x32xf32>
    %567 = arith.negf %566 : vector<2x32xf32>
    %568 = math.exp %567 : vector<2x32xf32>
    %cst_136 = arith.constant 1.000000e+00 : f32
    %569 = vector.broadcast %cst_136 : f32 to vector<2x32xf32>
    %570 = arith.addf %569, %568 : vector<2x32xf32>
    %571 = arith.divf %569, %570 : vector<2x32xf32>
    %572 = vector.extract_strided_slice %564 {offsets = [0, 32], sizes = [2, 32], strides = [1, 1]} : vector<2x96xf32> to vector<2x32xf32>
    %573 = arith.addf %572, %537 : vector<2x32xf32>
    %574 = arith.negf %573 : vector<2x32xf32>
    %575 = math.exp %574 : vector<2x32xf32>
    %cst_137 = arith.constant 1.000000e+00 : f32
    %576 = vector.broadcast %cst_137 : f32 to vector<2x32xf32>
    %577 = arith.addf %576, %575 : vector<2x32xf32>
    %578 = arith.divf %576, %577 : vector<2x32xf32>
    %579 = vector.extract_strided_slice %564 {offsets = [0, 64], sizes = [2, 32], strides = [1, 1]} : vector<2x96xf32> to vector<2x32xf32>
    %580 = arith.mulf %571, %540 : vector<2x32xf32>
    %581 = arith.addf %579, %580 : vector<2x32xf32>
    %582 = math.tanh %581 : vector<2x32xf32>
    %cst_138 = arith.constant 1.000000e+00 : f32
    %583 = vector.broadcast %cst_138 : f32 to vector<2x32xf32>
    %584 = arith.subf %583, %578 : vector<2x32xf32>
    %585 = arith.mulf %584, %582 : vector<2x32xf32>
    %586 = arith.mulf %578, %484 : vector<2x32xf32>
    %587 = arith.addf %585, %586 : vector<2x32xf32>
    %cst_139 = arith.constant dense<0.000000e+00> : vector<2x16xf32>
    %588 = tpu.matmul %587, %7, %cst_139 {dimension_numbers = #tpu.dot_dimension_numbers<[1], [0], [0], [1], [0, 0, 1, 1], [], []>} : vector<2x32xf32>, vector<32x16xf32>, vector<2x16xf32> -> vector<2x16xf32>
    %589 = vector.broadcast %8 : vector<1x16xf32> to vector<2x16xf32>
    %590 = arith.addf %588, %589 : vector<2x16xf32>
    %cst_140 = arith.constant dense<0xFF800000> : vector<2xf32>
    %591 = vector.multi_reduction <maximumf>, %590, %cst_140 [1] : vector<2x16xf32> to vector<2xf32>
    %592 = vector.shape_cast %591 : vector<2xf32> to vector<2x1xf32>
    %593 = vector.broadcast %592 : vector<2x1xf32> to vector<2x16xf32>
    %594 = arith.subf %590, %593 : vector<2x16xf32>
    %595 = math.exp %594 : vector<2x16xf32>
    %cst_141 = arith.constant dense<0.000000e+00> : vector<2xf32>
    %596 = vector.multi_reduction <add>, %595, %cst_141 [1] : vector<2x16xf32> to vector<2xf32>
    %597 = vector.shape_cast %596 : vector<2xf32> to vector<2x1xf32>
    %598 = math.log %597 : vector<2x1xf32>
    %599 = arith.addf %598, %592 : vector<2x1xf32>
    %600 = vector.broadcast %599 : vector<2x1xf32> to vector<2x16xf32>
    %601 = arith.subf %590, %600 : vector<2x16xf32>
    %cst_142 = arith.constant dense<0xFF800000> : vector<2xf32>
    %602 = vector.multi_reduction <maximumf>, %601, %cst_142 [1] : vector<2x16xf32> to vector<2xf32>
    %603 = vector.shape_cast %602 : vector<2xf32> to vector<2x1xf32>
    %604 = vector.broadcast %603 : vector<2x1xf32> to vector<2x16xf32>
    %605 = arith.cmpf oeq, %601, %604 : vector<2x16xf32>
    %c16_i32_143 = arith.constant 16 : i32
    %606 = vector.broadcast %c16_i32_143 : i32 to vector<2x16xi32>
    %607 = arith.select %605, %9, %606 : vector<2x16xi1>, vector<2x16xi32>
    %cst_144 = arith.constant dense<2147483647> : vector<2xi32>
    %608 = vector.multi_reduction <minsi>, %607, %cst_144 [1] : vector<2x16xi32> to vector<2xi32>
    %609 = vector.shape_cast %608 : vector<2xi32> to vector<2x1xi32>
    %610 = vector.broadcast %609 : vector<2x1xi32> to vector<2x16xi32>
    %611 = arith.cmpi eq, %9, %610 : vector<2x16xi32>
    %612 = arith.extui %611 : vector<2x16xi1> to vector<2x16xi32>
    %613 = arith.sitofp %612 : vector<2x16xi32> to vector<2x16xf32>
    %614 = vector.broadcast %c5_i32 : i32 to vector<2x8xi32>
    %615 = arith.cmpi eq, %10, %614 : vector<2x8xi32>
    %c0_i32_145 = arith.constant 0 : i32
    %616 = vector.shape_cast %609 : vector<2x1xi32> to vector<2x1xi32>
    %617 = vector.broadcast %616 : vector<2x1xi32> to vector<2x8xi32>
    %618 = vector.broadcast %c0_i32_145 : i32 to vector<2x8xi32>
    %619 = arith.select %615, %617, %618 : vector<2x8xi1>, vector<2x8xi32>
    %620 = arith.addi %517, %619 : vector<2x8xi32>
    %621 = vector.broadcast %c5_i32 : i32 to vector<1x1x8xi32>
    %622 = arith.cmpi eq, %11, %621 : vector<1x1x8xi32>
    %623 = arith.extui %622 : vector<1x1x8xi1> to vector<1x1x8xi32>
    %624 = arith.sitofp %623 : vector<1x1x8xi32> to vector<1x1x8xf32>
    %625 = vector.broadcast %558 : vector<2x8x1xf32> to vector<2x8x8xf32>
    %626 = vector.broadcast %624 : vector<1x1x8xf32> to vector<2x8x8xf32>
    %627 = arith.mulf %625, %626 : vector<2x8x8xf32>
    %628 = arith.addf %525, %627 : vector<2x8x8xf32>
    %629 = arith.index_cast %c5_i32 : i32 to index
    %c0_146 = arith.constant 0 : index
    %c0_147 = arith.constant 0 : index
    %630 = vector.load %arg11[%629, %c0_146, %c0_147] : memref<8x2x16xf32, #tpu.memory_space<vmem>>, vector<1x2x16xf32>
    %631 = vector.shape_cast %630 : vector<1x2x16xf32> to vector<2x16xf32>
    %632 = arith.mulf %631, %601 : vector<2x16xf32>
    %cst_148 = arith.constant dense<0.000000e+00> : vector<2xf32>
    %633 = vector.multi_reduction <add>, %632, %cst_148 [1] : vector<2x16xf32> to vector<2xf32>
    %634 = vector.shape_cast %633 : vector<2xf32> to vector<2x1xf32>
    %cst_149 = arith.constant 0.000000e+00 : f32
    %635 = vector.broadcast %cst_149 : f32 to vector<2x1xf32>
    %636 = arith.subf %635, %634 : vector<2x1xf32>
    %637 = arith.addf %534, %636 : vector<2x1xf32>
    %c6_i32 = arith.constant 6 : i32
    %cst_150 = arith.constant dense<0.000000e+00> : vector<2x128xf32>
    %638 = tpu.matmul %587, %4, %cst_150 {dimension_numbers = #tpu.dot_dimension_numbers<[1], [0], [0], [1], [0, 0, 1, 1], [], []>} : vector<2x32xf32>, vector<32x128xf32>, vector<2x128xf32> -> vector<2x128xf32>
    %639 = vector.extract_strided_slice %638 {offsets = [0, 0], sizes = [2, 32], strides = [1, 1]} : vector<2x128xf32> to vector<2x32xf32>
    %640 = vector.extract_strided_slice %638 {offsets = [0, 32], sizes = [2, 32], strides = [1, 1]} : vector<2x128xf32> to vector<2x32xf32>
    %641 = vector.extract_strided_slice %638 {offsets = [0, 64], sizes = [2, 32], strides = [1, 1]} : vector<2x128xf32> to vector<2x32xf32>
    %642 = vector.broadcast %6 : vector<1x32xf32> to vector<2x32xf32>
    %643 = arith.addf %641, %642 : vector<2x32xf32>
    %644 = vector.extract_strided_slice %638 {offsets = [0, 96], sizes = [2, 32], strides = [1, 1]} : vector<2x128xf32> to vector<2x32xf32>
    %645 = vector.shape_cast %644 : vector<2x32xf32> to vector<2x1x32xf32>
    %646 = vector.broadcast %645 : vector<2x1x32xf32> to vector<2x8x32xf32>
    %647 = arith.addf %646, %1 : vector<2x8x32xf32>
    %648 = math.tanh %647 : vector<2x8x32xf32>
    %649 = vector.broadcast %3 : vector<1x1x32xf32> to vector<2x8x32xf32>
    %650 = arith.mulf %648, %649 : vector<2x8x32xf32>
    %cst_151 = arith.constant dense<0.000000e+00> : vector<2x8xf32>
    %651 = vector.multi_reduction <add>, %650, %cst_151 [2] : vector<2x8x32xf32> to vector<2x8xf32>
    %652 = vector.shape_cast %651 : vector<2x8xf32> to vector<2x8x1xf32>
    %cst_152 = arith.constant dense<0xFF800000> : vector<2x1xf32>
    %653 = vector.multi_reduction <maximumf>, %652, %cst_152 [1] : vector<2x8x1xf32> to vector<2x1xf32>
    %654 = vector.shape_cast %653 : vector<2x1xf32> to vector<2x1x1xf32>
    %655 = vector.broadcast %654 : vector<2x1x1xf32> to vector<2x8x1xf32>
    %656 = arith.subf %652, %655 : vector<2x8x1xf32>
    %657 = math.exp %656 : vector<2x8x1xf32>
    %cst_153 = arith.constant dense<0.000000e+00> : vector<2x1xf32>
    %658 = vector.multi_reduction <add>, %657, %cst_153 [1] : vector<2x8x1xf32> to vector<2x1xf32>
    %659 = vector.shape_cast %658 : vector<2x1xf32> to vector<2x1x1xf32>
    %660 = vector.broadcast %659 : vector<2x1x1xf32> to vector<2x8x1xf32>
    %661 = arith.divf %657, %660 : vector<2x8x1xf32>
    %662 = vector.broadcast %661 : vector<2x8x1xf32> to vector<2x8x32xf32>
    %663 = arith.mulf %662, %0 : vector<2x8x32xf32>
    %cst_154 = arith.constant dense<0.000000e+00> : vector<2x32xf32>
    %664 = vector.multi_reduction <add>, %663, %cst_154 [1] : vector<2x8x32xf32> to vector<2x32xf32>
    %cst_155 = arith.constant dense<0.000000e+00> : vector<2x96xf32>
    %665 = tpu.matmul %613, %2, %cst_155 {dimension_numbers = #tpu.dot_dimension_numbers<[1], [0], [0], [1], [0, 0, 1, 1], [], []>} : vector<2x16xf32>, vector<16x96xf32>, vector<2x96xf32> -> vector<2x96xf32>
    %cst_156 = arith.constant dense<0.000000e+00> : vector<2x96xf32>
    %666 = tpu.matmul %664, %5, %cst_156 {dimension_numbers = #tpu.dot_dimension_numbers<[1], [0], [0], [1], [0, 0, 1, 1], [], []>} : vector<2x32xf32>, vector<32x96xf32>, vector<2x96xf32> -> vector<2x96xf32>
    %667 = arith.addf %665, %666 : vector<2x96xf32>
    %668 = vector.extract_strided_slice %667 {offsets = [0, 0], sizes = [2, 32], strides = [1, 1]} : vector<2x96xf32> to vector<2x32xf32>
    %669 = arith.addf %668, %639 : vector<2x32xf32>
    %670 = arith.negf %669 : vector<2x32xf32>
    %671 = math.exp %670 : vector<2x32xf32>
    %cst_157 = arith.constant 1.000000e+00 : f32
    %672 = vector.broadcast %cst_157 : f32 to vector<2x32xf32>
    %673 = arith.addf %672, %671 : vector<2x32xf32>
    %674 = arith.divf %672, %673 : vector<2x32xf32>
    %675 = vector.extract_strided_slice %667 {offsets = [0, 32], sizes = [2, 32], strides = [1, 1]} : vector<2x96xf32> to vector<2x32xf32>
    %676 = arith.addf %675, %640 : vector<2x32xf32>
    %677 = arith.negf %676 : vector<2x32xf32>
    %678 = math.exp %677 : vector<2x32xf32>
    %cst_158 = arith.constant 1.000000e+00 : f32
    %679 = vector.broadcast %cst_158 : f32 to vector<2x32xf32>
    %680 = arith.addf %679, %678 : vector<2x32xf32>
    %681 = arith.divf %679, %680 : vector<2x32xf32>
    %682 = vector.extract_strided_slice %667 {offsets = [0, 64], sizes = [2, 32], strides = [1, 1]} : vector<2x96xf32> to vector<2x32xf32>
    %683 = arith.mulf %674, %643 : vector<2x32xf32>
    %684 = arith.addf %682, %683 : vector<2x32xf32>
    %685 = math.tanh %684 : vector<2x32xf32>
    %cst_159 = arith.constant 1.000000e+00 : f32
    %686 = vector.broadcast %cst_159 : f32 to vector<2x32xf32>
    %687 = arith.subf %686, %681 : vector<2x32xf32>
    %688 = arith.mulf %687, %685 : vector<2x32xf32>
    %689 = arith.mulf %681, %587 : vector<2x32xf32>
    %690 = arith.addf %688, %689 : vector<2x32xf32>
    %cst_160 = arith.constant dense<0.000000e+00> : vector<2x16xf32>
    %691 = tpu.matmul %690, %7, %cst_160 {dimension_numbers = #tpu.dot_dimension_numbers<[1], [0], [0], [1], [0, 0, 1, 1], [], []>} : vector<2x32xf32>, vector<32x16xf32>, vector<2x16xf32> -> vector<2x16xf32>
    %692 = vector.broadcast %8 : vector<1x16xf32> to vector<2x16xf32>
    %693 = arith.addf %691, %692 : vector<2x16xf32>
    %cst_161 = arith.constant dense<0xFF800000> : vector<2xf32>
    %694 = vector.multi_reduction <maximumf>, %693, %cst_161 [1] : vector<2x16xf32> to vector<2xf32>
    %695 = vector.shape_cast %694 : vector<2xf32> to vector<2x1xf32>
    %696 = vector.broadcast %695 : vector<2x1xf32> to vector<2x16xf32>
    %697 = arith.subf %693, %696 : vector<2x16xf32>
    %698 = math.exp %697 : vector<2x16xf32>
    %cst_162 = arith.constant dense<0.000000e+00> : vector<2xf32>
    %699 = vector.multi_reduction <add>, %698, %cst_162 [1] : vector<2x16xf32> to vector<2xf32>
    %700 = vector.shape_cast %699 : vector<2xf32> to vector<2x1xf32>
    %701 = math.log %700 : vector<2x1xf32>
    %702 = arith.addf %701, %695 : vector<2x1xf32>
    %703 = vector.broadcast %702 : vector<2x1xf32> to vector<2x16xf32>
    %704 = arith.subf %693, %703 : vector<2x16xf32>
    %cst_163 = arith.constant dense<0xFF800000> : vector<2xf32>
    %705 = vector.multi_reduction <maximumf>, %704, %cst_163 [1] : vector<2x16xf32> to vector<2xf32>
    %706 = vector.shape_cast %705 : vector<2xf32> to vector<2x1xf32>
    %707 = vector.broadcast %706 : vector<2x1xf32> to vector<2x16xf32>
    %708 = arith.cmpf oeq, %704, %707 : vector<2x16xf32>
    %c16_i32_164 = arith.constant 16 : i32
    %709 = vector.broadcast %c16_i32_164 : i32 to vector<2x16xi32>
    %710 = arith.select %708, %9, %709 : vector<2x16xi1>, vector<2x16xi32>
    %cst_165 = arith.constant dense<2147483647> : vector<2xi32>
    %711 = vector.multi_reduction <minsi>, %710, %cst_165 [1] : vector<2x16xi32> to vector<2xi32>
    %712 = vector.shape_cast %711 : vector<2xi32> to vector<2x1xi32>
    %713 = vector.broadcast %712 : vector<2x1xi32> to vector<2x16xi32>
    %714 = arith.cmpi eq, %9, %713 : vector<2x16xi32>
    %715 = arith.extui %714 : vector<2x16xi1> to vector<2x16xi32>
    %716 = arith.sitofp %715 : vector<2x16xi32> to vector<2x16xf32>
    %717 = vector.broadcast %c6_i32 : i32 to vector<2x8xi32>
    %718 = arith.cmpi eq, %10, %717 : vector<2x8xi32>
    %c0_i32_166 = arith.constant 0 : i32
    %719 = vector.shape_cast %712 : vector<2x1xi32> to vector<2x1xi32>
    %720 = vector.broadcast %719 : vector<2x1xi32> to vector<2x8xi32>
    %721 = vector.broadcast %c0_i32_166 : i32 to vector<2x8xi32>
    %722 = arith.select %718, %720, %721 : vector<2x8xi1>, vector<2x8xi32>
    %723 = arith.addi %620, %722 : vector<2x8xi32>
    %724 = vector.broadcast %c6_i32 : i32 to vector<1x1x8xi32>
    %725 = arith.cmpi eq, %11, %724 : vector<1x1x8xi32>
    %726 = arith.extui %725 : vector<1x1x8xi1> to vector<1x1x8xi32>
    %727 = arith.sitofp %726 : vector<1x1x8xi32> to vector<1x1x8xf32>
    %728 = vector.broadcast %661 : vector<2x8x1xf32> to vector<2x8x8xf32>
    %729 = vector.broadcast %727 : vector<1x1x8xf32> to vector<2x8x8xf32>
    %730 = arith.mulf %728, %729 : vector<2x8x8xf32>
    %731 = arith.addf %628, %730 : vector<2x8x8xf32>
    %732 = arith.index_cast %c6_i32 : i32 to index
    %c0_167 = arith.constant 0 : index
    %c0_168 = arith.constant 0 : index
    %733 = vector.load %arg11[%732, %c0_167, %c0_168] : memref<8x2x16xf32, #tpu.memory_space<vmem>>, vector<1x2x16xf32>
    %734 = vector.shape_cast %733 : vector<1x2x16xf32> to vector<2x16xf32>
    %735 = arith.mulf %734, %704 : vector<2x16xf32>
    %cst_169 = arith.constant dense<0.000000e+00> : vector<2xf32>
    %736 = vector.multi_reduction <add>, %735, %cst_169 [1] : vector<2x16xf32> to vector<2xf32>
    %737 = vector.shape_cast %736 : vector<2xf32> to vector<2x1xf32>
    %cst_170 = arith.constant 0.000000e+00 : f32
    %738 = vector.broadcast %cst_170 : f32 to vector<2x1xf32>
    %739 = arith.subf %738, %737 : vector<2x1xf32>
    %740 = arith.addf %637, %739 : vector<2x1xf32>
    %c7_i32 = arith.constant 7 : i32
    %cst_171 = arith.constant dense<0.000000e+00> : vector<2x128xf32>
    %741 = tpu.matmul %690, %4, %cst_171 {dimension_numbers = #tpu.dot_dimension_numbers<[1], [0], [0], [1], [0, 0, 1, 1], [], []>} : vector<2x32xf32>, vector<32x128xf32>, vector<2x128xf32> -> vector<2x128xf32>
    %742 = vector.extract_strided_slice %741 {offsets = [0, 0], sizes = [2, 32], strides = [1, 1]} : vector<2x128xf32> to vector<2x32xf32>
    %743 = vector.extract_strided_slice %741 {offsets = [0, 32], sizes = [2, 32], strides = [1, 1]} : vector<2x128xf32> to vector<2x32xf32>
    %744 = vector.extract_strided_slice %741 {offsets = [0, 64], sizes = [2, 32], strides = [1, 1]} : vector<2x128xf32> to vector<2x32xf32>
    %745 = vector.broadcast %6 : vector<1x32xf32> to vector<2x32xf32>
    %746 = arith.addf %744, %745 : vector<2x32xf32>
    %747 = vector.extract_strided_slice %741 {offsets = [0, 96], sizes = [2, 32], strides = [1, 1]} : vector<2x128xf32> to vector<2x32xf32>
    %748 = vector.shape_cast %747 : vector<2x32xf32> to vector<2x1x32xf32>
    %749 = vector.broadcast %748 : vector<2x1x32xf32> to vector<2x8x32xf32>
    %750 = arith.addf %749, %1 : vector<2x8x32xf32>
    %751 = math.tanh %750 : vector<2x8x32xf32>
    %752 = vector.broadcast %3 : vector<1x1x32xf32> to vector<2x8x32xf32>
    %753 = arith.mulf %751, %752 : vector<2x8x32xf32>
    %cst_172 = arith.constant dense<0.000000e+00> : vector<2x8xf32>
    %754 = vector.multi_reduction <add>, %753, %cst_172 [2] : vector<2x8x32xf32> to vector<2x8xf32>
    %755 = vector.shape_cast %754 : vector<2x8xf32> to vector<2x8x1xf32>
    %cst_173 = arith.constant dense<0xFF800000> : vector<2x1xf32>
    %756 = vector.multi_reduction <maximumf>, %755, %cst_173 [1] : vector<2x8x1xf32> to vector<2x1xf32>
    %757 = vector.shape_cast %756 : vector<2x1xf32> to vector<2x1x1xf32>
    %758 = vector.broadcast %757 : vector<2x1x1xf32> to vector<2x8x1xf32>
    %759 = arith.subf %755, %758 : vector<2x8x1xf32>
    %760 = math.exp %759 : vector<2x8x1xf32>
    %cst_174 = arith.constant dense<0.000000e+00> : vector<2x1xf32>
    %761 = vector.multi_reduction <add>, %760, %cst_174 [1] : vector<2x8x1xf32> to vector<2x1xf32>
    %762 = vector.shape_cast %761 : vector<2x1xf32> to vector<2x1x1xf32>
    %763 = vector.broadcast %762 : vector<2x1x1xf32> to vector<2x8x1xf32>
    %764 = arith.divf %760, %763 : vector<2x8x1xf32>
    %765 = vector.broadcast %764 : vector<2x8x1xf32> to vector<2x8x32xf32>
    %766 = arith.mulf %765, %0 : vector<2x8x32xf32>
    %cst_175 = arith.constant dense<0.000000e+00> : vector<2x32xf32>
    %767 = vector.multi_reduction <add>, %766, %cst_175 [1] : vector<2x8x32xf32> to vector<2x32xf32>
    %cst_176 = arith.constant dense<0.000000e+00> : vector<2x96xf32>
    %768 = tpu.matmul %716, %2, %cst_176 {dimension_numbers = #tpu.dot_dimension_numbers<[1], [0], [0], [1], [0, 0, 1, 1], [], []>} : vector<2x16xf32>, vector<16x96xf32>, vector<2x96xf32> -> vector<2x96xf32>
    %cst_177 = arith.constant dense<0.000000e+00> : vector<2x96xf32>
    %769 = tpu.matmul %767, %5, %cst_177 {dimension_numbers = #tpu.dot_dimension_numbers<[1], [0], [0], [1], [0, 0, 1, 1], [], []>} : vector<2x32xf32>, vector<32x96xf32>, vector<2x96xf32> -> vector<2x96xf32>
    %770 = arith.addf %768, %769 : vector<2x96xf32>
    %771 = vector.extract_strided_slice %770 {offsets = [0, 0], sizes = [2, 32], strides = [1, 1]} : vector<2x96xf32> to vector<2x32xf32>
    %772 = arith.addf %771, %742 : vector<2x32xf32>
    %773 = arith.negf %772 : vector<2x32xf32>
    %774 = math.exp %773 : vector<2x32xf32>
    %cst_178 = arith.constant 1.000000e+00 : f32
    %775 = vector.broadcast %cst_178 : f32 to vector<2x32xf32>
    %776 = arith.addf %775, %774 : vector<2x32xf32>
    %777 = arith.divf %775, %776 : vector<2x32xf32>
    %778 = vector.extract_strided_slice %770 {offsets = [0, 32], sizes = [2, 32], strides = [1, 1]} : vector<2x96xf32> to vector<2x32xf32>
    %779 = arith.addf %778, %743 : vector<2x32xf32>
    %780 = arith.negf %779 : vector<2x32xf32>
    %781 = math.exp %780 : vector<2x32xf32>
    %cst_179 = arith.constant 1.000000e+00 : f32
    %782 = vector.broadcast %cst_179 : f32 to vector<2x32xf32>
    %783 = arith.addf %782, %781 : vector<2x32xf32>
    %784 = arith.divf %782, %783 : vector<2x32xf32>
    %785 = vector.extract_strided_slice %770 {offsets = [0, 64], sizes = [2, 32], strides = [1, 1]} : vector<2x96xf32> to vector<2x32xf32>
    %786 = arith.mulf %777, %746 : vector<2x32xf32>
    %787 = arith.addf %785, %786 : vector<2x32xf32>
    %788 = math.tanh %787 : vector<2x32xf32>
    %cst_180 = arith.constant 1.000000e+00 : f32
    %789 = vector.broadcast %cst_180 : f32 to vector<2x32xf32>
    %790 = arith.subf %789, %784 : vector<2x32xf32>
    %791 = arith.mulf %790, %788 : vector<2x32xf32>
    %792 = arith.mulf %784, %690 : vector<2x32xf32>
    %793 = arith.addf %791, %792 : vector<2x32xf32>
    %cst_181 = arith.constant dense<0.000000e+00> : vector<2x16xf32>
    %794 = tpu.matmul %793, %7, %cst_181 {dimension_numbers = #tpu.dot_dimension_numbers<[1], [0], [0], [1], [0, 0, 1, 1], [], []>} : vector<2x32xf32>, vector<32x16xf32>, vector<2x16xf32> -> vector<2x16xf32>
    %795 = vector.broadcast %8 : vector<1x16xf32> to vector<2x16xf32>
    %796 = arith.addf %794, %795 : vector<2x16xf32>
    %cst_182 = arith.constant dense<0xFF800000> : vector<2xf32>
    %797 = vector.multi_reduction <maximumf>, %796, %cst_182 [1] : vector<2x16xf32> to vector<2xf32>
    %798 = vector.shape_cast %797 : vector<2xf32> to vector<2x1xf32>
    %799 = vector.broadcast %798 : vector<2x1xf32> to vector<2x16xf32>
    %800 = arith.subf %796, %799 : vector<2x16xf32>
    %801 = math.exp %800 : vector<2x16xf32>
    %cst_183 = arith.constant dense<0.000000e+00> : vector<2xf32>
    %802 = vector.multi_reduction <add>, %801, %cst_183 [1] : vector<2x16xf32> to vector<2xf32>
    %803 = vector.shape_cast %802 : vector<2xf32> to vector<2x1xf32>
    %804 = math.log %803 : vector<2x1xf32>
    %805 = arith.addf %804, %798 : vector<2x1xf32>
    %806 = vector.broadcast %805 : vector<2x1xf32> to vector<2x16xf32>
    %807 = arith.subf %796, %806 : vector<2x16xf32>
    %cst_184 = arith.constant dense<0xFF800000> : vector<2xf32>
    %808 = vector.multi_reduction <maximumf>, %807, %cst_184 [1] : vector<2x16xf32> to vector<2xf32>
    %809 = vector.shape_cast %808 : vector<2xf32> to vector<2x1xf32>
    %810 = vector.broadcast %809 : vector<2x1xf32> to vector<2x16xf32>
    %811 = arith.cmpf oeq, %807, %810 : vector<2x16xf32>
    %c16_i32_185 = arith.constant 16 : i32
    %812 = vector.broadcast %c16_i32_185 : i32 to vector<2x16xi32>
    %813 = arith.select %811, %9, %812 : vector<2x16xi1>, vector<2x16xi32>
    %cst_186 = arith.constant dense<2147483647> : vector<2xi32>
    %814 = vector.multi_reduction <minsi>, %813, %cst_186 [1] : vector<2x16xi32> to vector<2xi32>
    %815 = vector.shape_cast %814 : vector<2xi32> to vector<2x1xi32>
    %816 = vector.broadcast %815 : vector<2x1xi32> to vector<2x16xi32>
    %817 = arith.cmpi eq, %9, %816 : vector<2x16xi32>
    %818 = arith.extui %817 : vector<2x16xi1> to vector<2x16xi32>
    %819 = arith.sitofp %818 : vector<2x16xi32> to vector<2x16xf32>
    %820 = vector.broadcast %c7_i32 : i32 to vector<2x8xi32>
    %821 = arith.cmpi eq, %10, %820 : vector<2x8xi32>
    %c0_i32_187 = arith.constant 0 : i32
    %822 = vector.shape_cast %815 : vector<2x1xi32> to vector<2x1xi32>
    %823 = vector.broadcast %822 : vector<2x1xi32> to vector<2x8xi32>
    %824 = vector.broadcast %c0_i32_187 : i32 to vector<2x8xi32>
    %825 = arith.select %821, %823, %824 : vector<2x8xi1>, vector<2x8xi32>
    %826 = arith.addi %723, %825 : vector<2x8xi32>
    %827 = vector.broadcast %c7_i32 : i32 to vector<1x1x8xi32>
    %828 = arith.cmpi eq, %11, %827 : vector<1x1x8xi32>
    %829 = arith.extui %828 : vector<1x1x8xi1> to vector<1x1x8xi32>
    %830 = arith.sitofp %829 : vector<1x1x8xi32> to vector<1x1x8xf32>
    %831 = vector.broadcast %764 : vector<2x8x1xf32> to vector<2x8x8xf32>
    %832 = vector.broadcast %830 : vector<1x1x8xf32> to vector<2x8x8xf32>
    %833 = arith.mulf %831, %832 : vector<2x8x8xf32>
    %834 = arith.addf %731, %833 : vector<2x8x8xf32>
    %835 = arith.index_cast %c7_i32 : i32 to index
    %c0_188 = arith.constant 0 : index
    %c0_189 = arith.constant 0 : index
    %836 = vector.load %arg11[%835, %c0_188, %c0_189] : memref<8x2x16xf32, #tpu.memory_space<vmem>>, vector<1x2x16xf32>
    %837 = vector.shape_cast %836 : vector<1x2x16xf32> to vector<2x16xf32>
    %838 = arith.mulf %837, %807 : vector<2x16xf32>
    %cst_190 = arith.constant dense<0.000000e+00> : vector<2xf32>
    %839 = vector.multi_reduction <add>, %838, %cst_190 [1] : vector<2x16xf32> to vector<2xf32>
    %840 = vector.shape_cast %839 : vector<2xf32> to vector<2x1xf32>
    %cst_191 = arith.constant 0.000000e+00 : f32
    %841 = vector.broadcast %cst_191 : f32 to vector<2x1xf32>
    %842 = arith.subf %841, %840 : vector<2x1xf32>
    %843 = arith.addf %740, %842 : vector<2x1xf32>
    %c8_i32 = arith.constant 8 : i32
    %c0_192 = arith.constant 0 : index
    %c0_193 = arith.constant 0 : index
    %844 = vector.load %arg12[%c0_192, %c0_193] : memref<2x8xi32, #tpu.memory_space<vmem>>, vector<2x8xi32>
    tpu.vector_store %arg12[%c0_192, %c0_193], %826 {strides = array<i32>} : memref<2x8xi32, #tpu.memory_space<vmem>>, vector<2x8xi32>,
    %c0_194 = arith.constant 0 : index
    %c0_195 = arith.constant 0 : index
    %c0_196 = arith.constant 0 : index
    %845 = vector.load %arg13[%c0_194, %c0_195, %c0_196] : memref<2x8x8xf32, #tpu.memory_space<vmem>>, vector<2x8x8xf32>
    tpu.vector_store %arg13[%c0_194, %c0_195, %c0_196], %834 {strides = array<i32>} : memref<2x8x8xf32, #tpu.memory_space<vmem>>, vector<2x8x8xf32>,
    %cst_197 = arith.constant dense<0.000000e+00> : vector<1xf32>
    %846 = vector.multi_reduction <add>, %843, %cst_197 [0] : vector<2x1xf32> to vector<1xf32>
    %847 = vector.shape_cast %846 : vector<1xf32> to vector<1x1xf32>
    %cst_198 = arith.constant 5.000000e-01 : f32
    %848 = vector.broadcast %cst_198 : f32 to vector<1x1xf32>
    %849 = arith.mulf %847, %848 : vector<1x1xf32>
    %c0_199 = arith.constant 0 : index
    %c0_200 = arith.constant 0 : index
    %850 = vector.load %arg14[%c0_199, %c0_200] : memref<1x1xf32, #tpu.memory_space<vmem>>, vector<1x1xf32>
    tpu.vector_store %arg14[%c0_199, %c0_200], %849 {strides = array<i32>} : memref<1x1xf32, #tpu.memory_space<vmem>>, vector<1x1xf32>,
    return
  }
  func.func @transform_0(%arg0: i32) -> (i32, i32, i32) {
    %c0_i32 = arith.constant 0 : i32
    %c0_i32_0 = arith.constant 0 : i32
    %c0_i32_1 = arith.constant 0 : i32
    %c0_i32_2 = arith.constant 0 : i32
    return %c0_i32, %c0_i32_0, %c0_i32_1 : i32, i32, i32
  }
  func.func @transform_1(%arg0: i32) -> (i32, i32, i32) {
    %c0_i32 = arith.constant 0 : i32
    %c0_i32_0 = arith.constant 0 : i32
    %c0_i32_1 = arith.constant 0 : i32
    %c0_i32_2 = arith.constant 0 : i32
    return %c0_i32, %c0_i32_0, %c0_i32_1 : i32, i32, i32
  }
  func.func @transform_2(%arg0: i32) -> (i32, i32) {
    %c0_i32 = arith.constant 0 : i32
    %c0_i32_0 = arith.constant 0 : i32
    %c0_i32_1 = arith.constant 0 : i32
    return %c0_i32, %c0_i32_0 : i32, i32
  }
  func.func @transform_3(%arg0: i32) -> (i32, i32) {
    %c0_i32 = arith.constant 0 : i32
    %c0_i32_0 = arith.constant 0 : i32
    %c0_i32_1 = arith.constant 0 : i32
    return %c0_i32, %c0_i32_0 : i32, i32
  }
  func.func @transform_4(%arg0: i32) -> (i32, i32, i32) {
    %c0_i32 = arith.constant 0 : i32
    %c0_i32_0 = arith.constant 0 : i32
    %c0_i32_1 = arith.constant 0 : i32
    %c0_i32_2 = arith.constant 0 : i32
    return %c0_i32, %c0_i32_0, %c0_i32_1 : i32, i32, i32
  }
  func.func @transform_5(%arg0: i32) -> (i32, i32) {
    %c0_i32 = arith.constant 0 : i32
    %c0_i32_0 = arith.constant 0 : i32
    %c0_i32_1 = arith.constant 0 : i32
    return %c0_i32, %c0_i32_0 : i32, i32
  }
  func.func @transform_6(%arg0: i32) -> (i32, i32) {
    %c0_i32 = arith.constant 0 : i32
    %c0_i32_0 = arith.constant 0 : i32
    %c0_i32_1 = arith.constant 0 : i32
    return %c0_i32, %c0_i32_0 : i32, i32
  }
  func.func @transform_7(%arg0: i32) -> (i32, i32) {
    %c0_i32 = arith.constant 0 : i32
    %c0_i32_0 = arith.constant 0 : i32
    %c0_i32_1 = arith.constant 0 : i32
    return %c0_i32, %c0_i32_0 : i32, i32
  }
  func.func @transform_8(%arg0: i32) -> (i32, i32) {
    %c0_i32 = arith.constant 0 : i32
    %c0_i32_0 = arith.constant 0 : i32
    %c0_i32_1 = arith.constant 0 : i32
    return %c0_i32, %c0_i32_0 : i32, i32
  }
  func.func @transform_9(%arg0: i32) -> (i32, i32) {
    %c0_i32 = arith.constant 0 : i32
    %c0_i32_0 = arith.constant 0 : i32
    %c0_i32_1 = arith.constant 0 : i32
    return %c0_i32, %c0_i32_0 : i32, i32
  }
  func.func @transform_10(%arg0: i32) -> (i32, i32, i32) {
    %c0_i32 = arith.constant 0 : i32
    %c0_i32_0 = arith.constant 0 : i32
    %c0_i32_1 = arith.constant 0 : i32
    %c0_i32_2 = arith.constant 0 : i32
    return %c0_i32, %c0_i32_0, %c0_i32_1 : i32, i32, i32
  }
  func.func @transform_11(%arg0: i32) -> (i32, i32) {
    %c0_i32 = arith.constant 0 : i32
    %c0_i32_0 = arith.constant 0 : i32
    %c0_i32_1 = arith.constant 0 : i32
    return %c0_i32, %c0_i32_0 : i32, i32
  }
  func.func @transform_12(%arg0: i32) -> (i32, i32, i32) {
    %c0_i32 = arith.constant 0 : i32
    %c0_i32_0 = arith.constant 0 : i32
    %c0_i32_1 = arith.constant 0 : i32
    %c0_i32_2 = arith.constant 0 : i32
    return %c0_i32, %c0_i32_0, %c0_i32_1 : i32, i32, i32
  }
  func.func @transform_13(%arg0: i32) -> (i32, i32) {
    %c0_i32 = arith.constant 0 : i32
    %c0_i32_0 = arith.constant 0 : i32
    %c0_i32_1 = arith.constant 0 : i32
    return %c0_i32, %c0_i32_0 : i32, i32
  }
}

</mosaic_0001>

<llo_original>
// kernel: tpu_custom_call.1
$region0: #{tpu_custom_call.1}
  #allocation0 [shape = 'u32[]', space=smem, size = 0x4, offset = 0x4, fixed_abs, tag = 'smem constant byte address 0x4 - core index']
  #allocation1 [shape = 'u32[72,128]{1,0:T(1,128)}', space=vmem, size = 0x9000, scoped, tag = 'internal scratch']
  %s0 = inlined_call_operand.vmem [shape: f32[2,8,32], index: 0, kind: input, shape index: {}]
  %s1 = inlined_call_operand.hbm [shape: f32[2,8,32], index: 1, kind: input, shape index: {}]
  %s2 = inlined_call_operand.vmem [shape: f32[2,32], index: 2, kind: input, shape index: {}]
  %s3 = inlined_call_operand.hbm [shape: f32[16,96], index: 3, kind: input, shape index: {}]
  %s4 = inlined_call_operand.vmem [shape: f32[1,1,32], index: 4, kind: input, shape index: {}]
  %s5 = inlined_call_operand.vmem [shape: f32[32,128], index: 5, kind: input, shape index: {}]
  %s6 = inlined_call_operand.hbm [shape: f32[32,96], index: 6, kind: input, shape index: {}]
  %s7 = inlined_call_operand.vmem [shape: f32[1,32], index: 7, kind: input, shape index: {}]
  %s8 = inlined_call_operand.vmem [shape: f32[32,16], index: 8, kind: input, shape index: {}]
  %s9 = inlined_call_operand.vmem [shape: f32[1,16], index: 9, kind: input, shape index: {}]
  %s10 = inlined_call_operand.hbm [shape: f32[8,2,16], index: 10, kind: input, shape index: {}]
  %s11 = inlined_call_operand.hbm [shape: s32[2,8], index: 11, kind: output, shape index: {0}]
  %s12 = inlined_call_operand.hbm [shape: f32[2,8,8], index: 12, kind: output, shape index: {1}]
  %s13 = inlined_call_operand.hbm [shape: f32[1,1], index: 13, kind: output, shape index: {2}]
  %14 = xla_tuple %s11, %s12, %s13
  %s15 = sld [smem:[#allocation0]]
  $region86: #{tpu_custom_call.1} parent=0
    _
  %s17 = ssub.s32 1, %s15
  %s18 = scalar_select 0, %s17, %s15
  $region1: #{tpu_custom_call.1} parent=0
    #allocation2 [shape = 'u8[8192]{0}', space=vmem, size = 0x2000, scoped, tag = 'input window, operand 1, single buffered']
    #allocation3 [shape = 's32[1]{0}', space=sflag, size = 0x4, scoped, tag = 'scoped memory for tpu_custom_call.1']
    #allocation4 [shape = 's32[1]{0}', space=sflag, size = 0x4, scoped, tag = 'scoped memory for tpu_custom_call.1']
    #allocation5 [shape = 'u8[8192]{0}', space=vmem, size = 0x2000, scoped, tag = 'input window, operand 3, single buffered']
    #allocation6 [shape = 's32[1]{0}', space=sflag, size = 0x4, scoped, tag = 'scoped memory for tpu_custom_call.1']
    #allocation7 [shape = 'u8[16384]{0}', space=vmem, size = 0x4000, scoped, tag = 'input window, operand 6, single buffered']
    #allocation8 [shape = 'u8[8192]{0}', space=vmem, size = 0x2000, scoped, tag = 'input window, operand 10, single buffered']
    #allocation9 [shape = 's32[1]{0}', space=sflag, size = 0x4, scoped, tag = 'scoped memory for tpu_custom_call.1']
    #allocation10 [shape = 'u8[1024]{0}', space=vmem, size = 0x400, scoped, tag = 'output window, operand 0, single buffered']
    #allocation11 [shape = 'u8[8192]{0}', space=vmem, size = 0x2000, scoped, tag = 'output window, operand 1, single buffered']
    #allocation12 [shape = 's32[1]{0}', space=sflag, size = 0x4, scoped, tag = 'scoped memory for tpu_custom_call.1']
    #allocation13 [shape = 'u8[512]{0}', space=vmem, size = 0x400, scoped, tag = 'output window, operand 2, single buffered']
    %19 = vsyncpa [#allocation3], 0
    %20 = vsyncpa [#allocation6], 0
    %21 = vsyncpa [#allocation9], 0
    %22 = vsyncpa [#allocation4], 0
    %23 = vsyncpa [#allocation12], 0
    // Predicated region
    $region2: #{tpu_custom_call.1} parent=1 // pred_check
      _
    $region3: #{tpu_custom_call.1} parent=1 // pred_check_branch
      %25 = sbr.rel (0) target = $region5
    $region4: #{tpu_custom_call.1} parent=1 // pred_region
      _
    $region5: #{tpu_custom_call.1} parent=1 // pred_fallthru
      _
    // Predicated region
    $region6: #{tpu_custom_call.1} parent=1 // pred_check
      _
    $region7: #{tpu_custom_call.1} parent=1 // pred_check_branch
      %27 = sbr.rel (0) target = $region9
    $region8: #{tpu_custom_call.1} parent=1 // pred_region
      %29 = vsyncadd [#allocation3], 0
      %s30 = sshll.u32 %s1, 4
      %s31 = int_to_ptr.hbm [resolvable:$true] %s30
      %s32 = sshll.u32 [#allocation2], 4
      %s33 = int_to_ptr.vmem [resolvable:$true] %s32
      %38 = dma.hbm_to_vmem [thread:$0]  %s31, 256, %s33, [#allocation3], 128, 128, 8
    $region9: #{tpu_custom_call.1} parent=1 // pred_fallthru
      _
    // Predicated region
    $region10: #{tpu_custom_call.1} parent=1 // pred_check
      _
    $region11: #{tpu_custom_call.1} parent=1 // pred_check_branch
      %40 = sbr.rel (0) target = $region13
    $region12: #{tpu_custom_call.1} parent=1 // pred_region
      _
    $region13: #{tpu_custom_call.1} parent=1 // pred_fallthru
      _
    // Predicated region
    $region14: #{tpu_custom_call.1} parent=1 // pred_check
      _
    $region15: #{tpu_custom_call.1} parent=1 // pred_check_branch
      %42 = sbr.rel (0) target = $region17
    $region16: #{tpu_custom_call.1} parent=1 // pred_region
      %44 = vsyncadd [#allocation6], 0
      %s45 = sshll.u32 %s3, 4
      %s46 = int_to_ptr.hbm [resolvable:$true] %s45
      %s47 = sshll.u32 [#allocation5], 4
      %s48 = int_to_ptr.vmem [resolvable:$true] %s47
      %53 = dma.hbm_to_vmem [thread:$0]  %s46, 256, %s48, [#allocation6], 128, 128, 8
    $region17: #{tpu_custom_call.1} parent=1 // pred_fallthru
      _
    // Predicated region
    $region18: #{tpu_custom_call.1} parent=1 // pred_check
      _
    $region19: #{tpu_custom_call.1} parent=1 // pred_check_branch
      %55 = sbr.rel (0) target = $region21
    $region20: #{tpu_custom_call.1} parent=1 // pred_region
      _
    $region21: #{tpu_custom_call.1} parent=1 // pred_fallthru
      _
    // Predicated region
    $region22: #{tpu_custom_call.1} parent=1 // pred_check
      _
    $region23: #{tpu_custom_call.1} parent=1 // pred_check_branch
      %57 = sbr.rel (0) target = $region25
    $region24: #{tpu_custom_call.1} parent=1 // pred_region
      _
    $region25: #{tpu_custom_call.1} parent=1 // pred_fallthru
      _
    // Predicated region
    $region26: #{tpu_custom_call.1} parent=1 // pred_check
      _
    $region27: #{tpu_custom_call.1} parent=1 // pred_check_branch
      %59 = sbr.rel (0) target = $region29
    $region28: #{tpu_custom_call.1} parent=1 // pred_region
      %61 = vsyncadd [#allocation6], 0
      %s62 = sshll.u32 %s6, 4
      %s63 = int_to_ptr.hbm [resolvable:$true] %s62
      %s64 = sshll.u32 [#allocation7], 4
      %s65 = int_to_ptr.vmem [resolvable:$true] %s64
      %70 = dma.hbm_to_vmem [thread:$0]  %s63, 512, %s65, [#allocation6], 128, 128, 8
    $region29: #{tpu_custom_call.1} parent=1 // pred_fallthru
      _
    // Predicated region
    $region30: #{tpu_custom_call.1} parent=1 // pred_check
      _
    $region31: #{tpu_custom_call.1} parent=1 // pred_check_branch
      %72 = sbr.rel (0) target = $region33
    $region32: #{tpu_custom_call.1} parent=1 // pred_region
      _
    $region33: #{tpu_custom_call.1} parent=1 // pred_fallthru
      _
    // Predicated region
    $region34: #{tpu_custom_call.1} parent=1 // pred_check
      _
    $region35: #{tpu_custom_call.1} parent=1 // pred_check_branch
      %74 = sbr.rel (0) target = $region37
    $region36: #{tpu_custom_call.1} parent=1 // pred_region
      _
    $region37: #{tpu_custom_call.1} parent=1 // pred_fallthru
      _
    // Predicated region
    $region38: #{tpu_custom_call.1} parent=1 // pred_check
      _
    $region39: #{tpu_custom_call.1} parent=1 // pred_check_branch
      %76 = sbr.rel (0) target = $region41
    $region40: #{tpu_custom_call.1} parent=1 // pred_region
      _
    $region41: #{tpu_custom_call.1} parent=1 // pred_fallthru
      _
    // Predicated region
    $region42: #{tpu_custom_call.1} parent=1 // pred_check
      _
    $region43: #{tpu_custom_call.1} parent=1 // pred_check_branch
      %78 = sbr.rel (0) target = $region45
    $region44: #{tpu_custom_call.1} parent=1 // pred_region
      %80 = vsyncadd [#allocation9], 0
      %s81 = sshll.u32 %s10, 4
      %s82 = int_to_ptr.hbm [resolvable:$true] %s81
      %s83 = sshll.u32 [#allocation8], 4
      %s84 = int_to_ptr.vmem [resolvable:$true] %s83
      %89 = dma.hbm_to_vmem [thread:$0]  %s82, 256, %s84, [#allocation9], 32, 32, 2
    $region45: #{tpu_custom_call.1} parent=1 // pred_fallthru
      _
    // Predicated region
    $region46: #{tpu_custom_call.1} parent=1 // pred_check
      _
    $region47: #{tpu_custom_call.1} parent=1 // pred_check_branch
      %91 = sbr.rel (0) target = $region49
    $region48: #{tpu_custom_call.1} parent=1 // pred_region
      %93 = dma.done [#allocation3], 256
    $region49: #{tpu_custom_call.1} parent=1 // pred_fallthru
      _
    // Predicated region
    $region50: #{tpu_custom_call.1} parent=1 // pred_check
      _
    $region51: #{tpu_custom_call.1} parent=1 // pred_check_branch
      %95 = sbr.rel (0) target = $region53
    $region52: #{tpu_custom_call.1} parent=1 // pred_region
      %97 = dma.done [#allocation6], 256
    $region53: #{tpu_custom_call.1} parent=1 // pred_fallthru
      _
    // Predicated region
    $region54: #{tpu_custom_call.1} parent=1 // pred_check
      _
    $region55: #{tpu_custom_call.1} parent=1 // pred_check_branch
      %99 = sbr.rel (0) target = $region57
    $region56: #{tpu_custom_call.1} parent=1 // pred_region
      %101 = dma.done [#allocation6], 512
    $region57: #{tpu_custom_call.1} parent=1 // pred_fallthru
      _
    // Predicated region
    $region58: #{tpu_custom_call.1} parent=1 // pred_check
      _
    $region59: #{tpu_custom_call.1} parent=1 // pred_check_branch
      %103 = sbr.rel (0) target = $region61
    $region60: #{tpu_custom_call.1} parent=1 // pred_region
      %105 = dma.done [#allocation9], 256
    $region61: #{tpu_custom_call.1} parent=1 // pred_fallthru
      _
    %v106 = vld [vmem:[%s0] sm:$0xff]
    %v107 = vld [vmem:[%s0 + $0x8] sm:$0xff]
    %v108 = vld [vmem:[#allocation2] sm:$0xff]
    %v109 = vld [vmem:[#allocation2 + $0x8] sm:$0xff]
    %v110 = vld [vmem:[#allocation5] sm:$0xff]
    %v111 = vld [vmem:[#allocation5 + $0x8] sm:$0xff]
    %v112 = vld [vmem:[%s4] sm:$0x1]
    %v113 = vld [vmem:[%s5] sm:$0xff]
    %v114 = vld [vmem:[%s5 + $0x8] sm:$0xff]
    %v115 = vld [vmem:[%s5 + $0x10] sm:$0xff]
    %v116 = vld [vmem:[%s5 + $0x18] sm:$0xff]
    %v117 = vld [vmem:[#allocation7] sm:$0xff]
    %v118 = vld [vmem:[#allocation7 + $0x8] sm:$0xff]
    %v119 = vld [vmem:[#allocation7 + $0x10] sm:$0xff]
    %v120 = vld [vmem:[#allocation7 + $0x18] sm:$0xff]
    %v121 = vld [vmem:[%s7] sm:$0x1]
    %v122 = vld [vmem:[%s8] sm:$0xff]
    %v123 = vld [vmem:[%s8 + $0x8] sm:$0xff]
    %v124 = vld [vmem:[%s8 + $0x10] sm:$0xff]
    %v125 = vld [vmem:[%s8 + $0x18] sm:$0xff]
    %v126 = vld [vmem:[%s9] sm:$0x1]
    %v127 = vlaneseq
    %v128 = vand.u32 %v127, 127
    %vm129 = vcmp.eq.s32.totalorder %v128, 0
    %v130 = vsel %vm129, 1, 0
    %v131 = vcvt.s32.f32 %v130
    %v132 = vld [vmem:[%s2] sm:$0x3]
    %vm133 = vcmask 261120
    %v135 = vsel %vm133, %v132, 0
    %137 = vmatpush.msra.mxu0 0.0
    %138 = vmatpush.msra.mxu0 0.0
    %139 = vmatpush.msra.mxu0 0.0
    %140 = vmatpush.msra.mxu0 0.0
    %141 = vmatpush.msra.mxu0 0.0
    %142 = vmatpush.msra.mxu0 0.0
    %143 = vmatpush.msra.mxu0 0.0
    %144 = vmatpush.msra.mxu0 0.0
    %145 = vmatpush.msra.mxu0 0.0
    %146 = vmatpush.msra.mxu0 0.0
    %147 = vmatpush.msra.mxu0 0.0
    %148 = vmatpush.msra.mxu0 0.0
    %149 = vmatpush.msra.mxu0 %v116
    %150 = vmatpush.msra.mxu0 %v115
    %151 = vmatpush.msra.mxu0 %v114
    %152 = vmatpush.msra.mxu0 %v113
    %153 = vmatmul.f32.gmra.mxu0 %v135
    %v154 = vpop.f32.mrf.mxu0
    %v155 = vadd.f32 0.0, %v154
    %156 = vdwg.mxu0
    %v158 = vperm.slane %v121, 0
    %159 = vrot.lane.b32.xlu0 %v158, 64
    %v160 = vpop.permute.xlu0 %159
    %v162 = vadd.f32 %v155, %v160
    %v164 = vrot.slane %v155, 1
    %v165 = vperm.slane %v155, 0
    %v166 = vperm.slane %v164, 0
    %171 = vrot.lane.b32.xlu0 %v108, 96
    %v172 = vpop.permute.xlu0 %171
    %173 = vrot.lane.b32.xlu0 %v109, 96
    %v174 = vpop.permute.xlu0 %173
    %v177 = vadd.f32 %v165, %v172
    %v178 = vadd.f32 %v166, %v174
    %v179 = vtanh.pop %v177
    %v180 = vtanh.pop %v178
    %v182 = vperm.slane %v112, 0
    %183 = vrot.lane.b32.xlu0 %v182, 96
    %v184 = vpop.permute.xlu0 %183
    %v186 = vmul.f32 %v179, %v184
    %v187 = vmul.f32 %v180, %v184
    %190 = vrot.lane.b32.xlu0 %v186, 32
    %v191 = vpop.permute.xlu0 %190
    %192 = vrot.lane.b32.xlu0 %v187, 32
    %v193 = vpop.permute.xlu0 %192
    %v196 = vsel %vm133, %v191, 0.0
    %197 = vadd.xlane.f32.xlu0 %v196
    %v198 = vpop.xlane.xlu0 %197
    %v199 = vsel %vm133, %v193, 0.0
    %200 = vadd.xlane.f32.xlu0 %v199
    %v201 = vpop.xlane.xlu0 %200
    %v202 = vrot.slane %v198, 4
    %v203 = vmax.f32 %v198, %v202
    %v204 = vrot.slane %v203, 2
    %v205 = vmax.f32 %v203, %v204
    %v206 = vrot.slane %v205, 1
    %v207 = vmax.f32 %v205, %v206
    %v208 = vrot.slane %v201, 4
    %v209 = vmax.f32 %v201, %v208
    %v210 = vrot.slane %v209, 2
    %v211 = vmax.f32 %v209, %v210
    %v212 = vrot.slane %v211, 1
    %v213 = vmax.f32 %v211, %v212
    %v214 = vsub.f32 %v198, %v207
    %v215 = vsub.f32 %v201, %v213
    %v216 = vmul.f32 %v214, 1.442695
    %v217 = vpow.pop %v216
    %v218 = vmul.f32 %v215, 1.442695
    %v219 = vpow.pop %v218
    %v220 = vrot.slane %v217, 4
    %v221 = vadd.f32 %v217, %v220
    %v222 = vrot.slane %v221, 2
    %v223 = vadd.f32 %v221, %v222
    %v224 = vrot.slane %v223, 1
    %v225 = vadd.f32 %v223, %v224
    %v226 = vrot.slane %v219, 4
    %v227 = vadd.f32 %v219, %v226
    %v228 = vrot.slane %v227, 2
    %v229 = vadd.f32 %v227, %v228
    %v230 = vrot.slane %v229, 1
    %v231 = vadd.f32 %v229, %v230
    %v232 = vrcp.pop %v225
    %v233 = vmul.f32 %v225, %v232
    %v234 = vsub.f32 1.0, %v233
    %v235 = vmul.f32 %v232, %v234
    %v236 = vadd.f32 %v232, %v235
    %vm237 = vweird.f32 %v225
    %vm238 = vweird.f32 %v232
    %vm239 = vmor %vm237, %vm238
    %v240 = vsel %vm239, %v232, %v236
    %v241 = vand.u32 2147483647, %v225
    %vm242 = vcmp.eq.f32.partialorder %v241, 8.507059e+37
    %v243 = vand.u32 %v225, 2147483648
    %v244 = vor.u32 1.1754944e-38, %v243
    %v245 = vsel %vm242, %v244, %v240
    %v246 = vmul.f32 %v217, %v245
    %v247 = vrcp.pop %v231
    %v248 = vmul.f32 %v231, %v247
    %v249 = vsub.f32 1.0, %v248
    %v250 = vmul.f32 %v247, %v249
    %v251 = vadd.f32 %v247, %v250
    %vm252 = vweird.f32 %v231
    %vm253 = vweird.f32 %v247
    %vm254 = vmor %vm252, %vm253
    %v255 = vsel %vm254, %v247, %v251
    %v256 = vand.u32 2147483647, %v231
    %vm257 = vcmp.eq.f32.partialorder %v256, 8.507059e+37
    %v258 = vand.u32 %v231, 2147483648
    %v259 = vor.u32 1.1754944e-38, %v258
    %v260 = vsel %vm257, %v259, %v255
    %v261 = vmul.f32 %v219, %v260
    %v262 = vmul.f32 %v246, %v106
    %v263 = vmul.f32 %v261, %v107
    %v264 = vsel %vm133, %v262, 0.0
    %v265 = vrot.slane %v264, 4
    %v266 = vadd.f32 %v264, %v265
    %v267 = vrot.slane %v266, 2
    %v268 = vadd.f32 %v266, %v267
    %v269 = vrot.slane %v268, 1
    %v270 = vadd.f32 %v268, %v269
    %v271 = vsel %vm133, %v263, 0.0
    %v272 = vrot.slane %v271, 4
    %v273 = vadd.f32 %v271, %v272
    %v274 = vrot.slane %v273, 2
    %v275 = vadd.f32 %v273, %v274
    %v276 = vrot.slane %v275, 1
    %v277 = vadd.f32 %v275, %v276
    %vm280 = vcmask 1041409
    %v281 = vsel %vm280, %v277, %v270
    %v282 = vsel %vm133, %v281, 0
    %284 = vmatpush.msra.mxu0 0.0
    %285 = vmatpush.msra.mxu0 0.0
    %286 = vmatpush.msra.mxu0 0.0
    %287 = vmatpush.msra.mxu0 0.0
    %288 = vmatpush.msra.mxu0 0.0
    %289 = vmatpush.msra.mxu0 0.0
    %290 = vmatpush.msra.mxu0 0.0
    %291 = vmatpush.msra.mxu0 0.0
    %292 = vmatpush.msra.mxu0 0.0
    %293 = vmatpush.msra.mxu0 0.0
    %294 = vmatpush.msra.mxu0 0.0
    %295 = vmatpush.msra.mxu0 0.0
    %296 = vmatpush.msra.mxu0 %v120
    %297 = vmatpush.msra.mxu0 %v119
    %298 = vmatpush.msra.mxu0 %v118
    %299 = vmatpush.msra.mxu0 %v117
    %300 = vmatmul.f32.gmra.mxu0 %v282
    %v301 = vpop.f32.mrf.mxu0
    %v302 = vadd.f32 0.0, %v301
    %303 = vdwg.mxu0
    %vm304 = vcmask 130048
    %v306 = vsel %vm304, %v131, 0
    %308 = vmatpush.msra.mxu0 0.0
    %309 = vmatpush.msra.mxu0 0.0
    %310 = vmatpush.msra.mxu0 0.0
    %311 = vmatpush.msra.mxu0 0.0
    %312 = vmatpush.msra.mxu0 0.0
    %313 = vmatpush.msra.mxu0 0.0
    %314 = vmatpush.msra.mxu0 0.0
    %315 = vmatpush.msra.mxu0 0.0
    %316 = vmatpush.msra.mxu0 0.0
    %317 = vmatpush.msra.mxu0 0.0
    %318 = vmatpush.msra.mxu0 0.0
    %319 = vmatpush.msra.mxu0 0.0
    %320 = vmatpush.msra.mxu0 0.0
    %321 = vmatpush.msra.mxu0 0.0
    %322 = vmatpush.msra.mxu0 %v111
    %323 = vmatpush.msra.mxu0 %v110
    %324 = vmatmul.f32.gmra.mxu0 %v306
    %v325 = vpop.f32.mrf.mxu0
    %v326 = vadd.f32 %v302, %v325
    %327 = vdwg.mxu0
    %v328 = vadd.f32 %v326, %v155
    %v329 = vxor.u32 %v328, 2147483648
    %v330 = vmul.f32 %v329, 1.442695
    %v331 = vpow.pop %v330
    %v332 = vadd.f32 %v331, 1.0
    %v333 = vrcp.pop %v332
    %v334 = vmul.f32 %v332, %v333
    %v335 = vsub.f32 1.0, %v334
    %v336 = vmul.f32 %v333, %v335
    %v337 = vadd.f32 %v333, %v336
    %vm338 = vweird.f32 %v332
    %vm339 = vweird.f32 %v333
    %vm340 = vmor %vm338, %vm339
    %v341 = vsel %vm340, %v333, %v337
    %v342 = vand.u32 2147483647, %v332
    %vm343 = vcmp.eq.f32.partialorder %v342, 8.507059e+37
    %v344 = vand.u32 %v332, 2147483648
    %v345 = vor.u32 1.1754944e-38, %v344
    %v346 = vsel %vm343, %v345, %v341
    %v347 = vmul.f32 1.0, %v346
    %349 = vrot.lane.b32.xlu0 %v162, 64
    %v350 = vpop.permute.xlu0 %349
    %v352 = vmul.f32 %v347, %v350
    %354 = vrot.lane.b32.xlu0 %v352, 64
    %v355 = vpop.permute.xlu0 %354
    %v357 = vadd.f32 %v326, %v355
    %v358 = vtanh.pop %v357
    %v359 = vsub.f32 1.0, %v347
    %361 = vrot.lane.b32.xlu0 %v358, 96
    %v362 = vpop.permute.xlu0 %361
    %v364 = vmul.f32 %v359, %v362
    %365 = vrot.lane.b32.xlu0 %v132, 32
    %v366 = vpop.permute.xlu0 %365
    %v368 = vmul.f32 %v347, %v366
    %v369 = vadd.f32 %v364, %v368
    %v371 = vperm.slane %v126, 0
    %374 = vrot.lane.b32.xlu0 %v369, 96
    %v375 = vpop.permute.xlu0 %374
    %v376 = vsel %vm133, %v375, 0
    %378 = vmatpush.msra.mxu0 0.0
    %379 = vmatpush.msra.mxu0 0.0
    %380 = vmatpush.msra.mxu0 0.0
    %381 = vmatpush.msra.mxu0 0.0
    %382 = vmatpush.msra.mxu0 0.0
    %383 = vmatpush.msra.mxu0 0.0
    %384 = vmatpush.msra.mxu0 0.0
    %385 = vmatpush.msra.mxu0 0.0
    %386 = vmatpush.msra.mxu0 0.0
    %387 = vmatpush.msra.mxu0 0.0
    %388 = vmatpush.msra.mxu0 0.0
    %389 = vmatpush.msra.mxu0 0.0
    %390 = vmatpush.msra.mxu0 %v125
    %391 = vmatpush.msra.mxu0 %v124
    %392 = vmatpush.msra.mxu0 %v123
    %393 = vmatpush.msra.mxu0 %v122
    %394 = vmatmul.f32.gmra.mxu0 %v376
    %v395 = vpop.f32.mrf.mxu0
    %v396 = vadd.f32 %v371, %v395
    %397 = vdwg.mxu0
    %vm398 = vcmask 123904
    %v399 = vsel %vm398, %v396, -inf
    %400 = vmax.xlane.f32.xlu0 %v399
    %v401 = vpop.xlane.xlu0 %400
    %v402 = vsub.f32 %v396, %v401
    %v403 = vmul.f32 %v402, 1.442695
    %v404 = vpow.pop %v403
    %v405 = vsel %vm398, %v404, 0.0
    %406 = vadd.xlane.f32.xlu0 %v405
    %v407 = vpop.xlane.xlu0 %406
    %v408 = vlog2.pop %v407
    %v409 = vmul.f32 %v408, 0.6931472
    %v410 = vadd.f32 %v409, %v401
    %v411 = vsub.f32 %v396, %v410
    %v412 = vsel %vm398, %v411, -inf
    %413 = vmax.xlane.f32.xlu0 %v412
    %v414 = vpop.xlane.xlu0 %413
    %vm415 = vcmp.eq.f32.partialorder %v411, %v414
    %v416 = vsel %vm415, %v128, 16
    %v417 = vsel %vm398, %v416, 2147483647
    %v418 = vand.u32 %v417, 65535
    %v419 = vshra.s32 %v417, 16
    %v420 = vcvt.s32.f32 %v418
    %v421 = vcvt.s32.f32 %v419
    %422 = vmin.xlane.f32.xlu0 %v421
    %v423 = vpop.xlane.xlu0 %422
    %vm424 = vcmp.eq.f32.partialorder %v421, %v423
    %v425 = vsel %vm424, %v420, inf
    %426 = vmin.xlane.f32.xlu0 %v425
    %v427 = vpop.xlane.xlu0 %426
    %v428 = vcvt.f32.s32 %v427
    %v429 = vcvt.f32.s32 %v423
    %v430 = vshll.u32 %v429, 16
    %v431 = vadd.s32 %v430, %v428
    %vm432 = vcmp.eq.s32.totalorder %v128, %v431
    %v433 = vsel %vm432, 1, 0
    %v434 = vcvt.s32.f32 %v433
    %v435 = vsel %vm129, %v431, 0
    %v436 = vmul.f32 %v246, %v131
    %v437 = vmul.f32 %v261, %v131
    %v438 = vadd.f32 %v436, 0.0
    %v439 = vadd.f32 %v437, 0.0
    %v440 = vld [vmem:[#allocation8] sm:$0x3]
    %v441 = vmul.f32 %v440, %v411
    %v442 = vsel %vm398, %v441, 0.0
    %443 = vadd.xlane.f32.xlu0 %v442
    %v444 = vpop.xlane.xlu0 %443
    %v445 = vsub.f32 0.0, %v444
    %v446 = vadd.f32 %v445, 0.0
    %447 = vmatpush.msra.mxu0 0.0
    %448 = vmatpush.msra.mxu0 0.0
    %449 = vmatpush.msra.mxu0 0.0
    %450 = vmatpush.msra.mxu0 0.0
    %451 = vmatpush.msra.mxu0 0.0
    %452 = vmatpush.msra.mxu0 0.0
    %453 = vmatpush.msra.mxu0 0.0
    %454 = vmatpush.msra.mxu0 0.0
    %455 = vmatpush.msra.mxu0 0.0
    %456 = vmatpush.msra.mxu0 0.0
    %457 = vmatpush.msra.mxu0 0.0
    %458 = vmatpush.msra.mxu0 0.0
    %459 = vmatpush.msra.mxu0 %v116
    %460 = vmatpush.msra.mxu0 %v115
    %461 = vmatpush.msra.mxu0 %v114
    %462 = vmatpush.msra.mxu0 %v113
    %463 = vmatmul.f32.gmra.mxu0 %v376
    %v464 = vpop.f32.mrf.mxu0
    %v465 = vadd.f32 0.0, %v464
    %466 = vdwg.mxu0
    %v467 = vadd.f32 %v465, %v160
    %v469 = vrot.slane %v465, 1
    %v470 = vperm.slane %v465, 0
    %v471 = vperm.slane %v469, 0
    %v474 = vadd.f32 %v470, %v172
    %v475 = vadd.f32 %v471, %v174
    %v476 = vtanh.pop %v474
    %v477 = vtanh.pop %v475
    %v478 = vmul.f32 %v476, %v184
    %v479 = vmul.f32 %v477, %v184
    %482 = vrot.lane.b32.xlu0 %v478, 32
    %v483 = vpop.permute.xlu0 %482
    %484 = vrot.lane.b32.xlu0 %v479, 32
    %v485 = vpop.permute.xlu0 %484
    %v488 = vsel %vm133, %v483, 0.0
    %489 = vadd.xlane.f32.xlu0 %v488
    %v490 = vpop.xlane.xlu0 %489
    %v491 = vsel %vm133, %v485, 0.0
    %492 = vadd.xlane.f32.xlu0 %v491
    %v493 = vpop.xlane.xlu0 %492
    %v494 = vrot.slane %v490, 4
    %v495 = vmax.f32 %v490, %v494
    %v496 = vrot.slane %v495, 2
    %v497 = vmax.f32 %v495, %v496
    %v498 = vrot.slane %v497, 1
    %v499 = vmax.f32 %v497, %v498
    %v500 = vrot.slane %v493, 4
    %v501 = vmax.f32 %v493, %v500
    %v502 = vrot.slane %v501, 2
    %v503 = vmax.f32 %v501, %v502
    %v504 = vrot.slane %v503, 1
    %v505 = vmax.f32 %v503, %v504
    %v506 = vsub.f32 %v490, %v499
    %v507 = vsub.f32 %v493, %v505
    %v508 = vmul.f32 %v506, 1.442695
    %v509 = vpow.pop %v508
    %v510 = vmul.f32 %v507, 1.442695
    %v511 = vpow.pop %v510
    %v512 = vrot.slane %v509, 4
    %v513 = vadd.f32 %v509, %v512
    %v514 = vrot.slane %v513, 2
    %v515 = vadd.f32 %v513, %v514
    %v516 = vrot.slane %v515, 1
    %v517 = vadd.f32 %v515, %v516
    %v518 = vrot.slane %v511, 4
    %v519 = vadd.f32 %v511, %v518
    %v520 = vrot.slane %v519, 2
    %v521 = vadd.f32 %v519, %v520
    %v522 = vrot.slane %v521, 1
    %v523 = vadd.f32 %v521, %v522
    %v524 = vrcp.pop %v517
    %v525 = vmul.f32 %v517, %v524
    %v526 = vsub.f32 1.0, %v525
    %v527 = vmul.f32 %v524, %v526
    %v528 = vadd.f32 %v524, %v527
    %vm529 = vweird.f32 %v517
    %vm530 = vweird.f32 %v524
    %vm531 = vmor %vm529, %vm530
    %v532 = vsel %vm531, %v524, %v528
    %v533 = vand.u32 2147483647, %v517
    %vm534 = vcmp.eq.f32.partialorder %v533, 8.507059e+37
    %v535 = vand.u32 %v517, 2147483648
    %v536 = vor.u32 1.1754944e-38, %v535
    %v537 = vsel %vm534, %v536, %v532
    %v538 = vmul.f32 %v509, %v537
    %v539 = vrcp.pop %v523
    %v540 = vmul.f32 %v523, %v539
    %v541 = vsub.f32 1.0, %v540
    %v542 = vmul.f32 %v539, %v541
    %v543 = vadd.f32 %v539, %v542
    %vm544 = vweird.f32 %v523
    %vm545 = vweird.f32 %v539
    %vm546 = vmor %vm544, %vm545
    %v547 = vsel %vm546, %v539, %v543
    %v548 = vand.u32 2147483647, %v523
    %vm549 = vcmp.eq.f32.partialorder %v548, 8.507059e+37
    %v550 = vand.u32 %v523, 2147483648
    %v551 = vor.u32 1.1754944e-38, %v550
    %v552 = vsel %vm549, %v551, %v547
    %v553 = vmul.f32 %v511, %v552
    %v554 = vmul.f32 %v538, %v106
    %v555 = vmul.f32 %v553, %v107
    %v556 = vsel %vm133, %v554, 0.0
    %v557 = vrot.slane %v556, 4
    %v558 = vadd.f32 %v556, %v557
    %v559 = vrot.slane %v558, 2
    %v560 = vadd.f32 %v558, %v559
    %v561 = vrot.slane %v560, 1
    %v562 = vadd.f32 %v560, %v561
    %v563 = vsel %vm133, %v555, 0.0
    %v564 = vrot.slane %v563, 4
    %v565 = vadd.f32 %v563, %v564
    %v566 = vrot.slane %v565, 2
    %v567 = vadd.f32 %v565, %v566
    %v568 = vrot.slane %v567, 1
    %v569 = vadd.f32 %v567, %v568
    %v572 = vsel %vm280, %v569, %v562
    %v573 = vsel %vm133, %v572, 0
    %575 = vmatpush.msra.mxu0 0.0
    %576 = vmatpush.msra.mxu0 0.0
    %577 = vmatpush.msra.mxu0 0.0
    %578 = vmatpush.msra.mxu0 0.0
    %579 = vmatpush.msra.mxu0 0.0
    %580 = vmatpush.msra.mxu0 0.0
    %581 = vmatpush.msra.mxu0 0.0
    %582 = vmatpush.msra.mxu0 0.0
    %583 = vmatpush.msra.mxu0 0.0
    %584 = vmatpush.msra.mxu0 0.0
    %585 = vmatpush.msra.mxu0 0.0
    %586 = vmatpush.msra.mxu0 0.0
    %587 = vmatpush.msra.mxu0 %v120
    %588 = vmatpush.msra.mxu0 %v119
    %589 = vmatpush.msra.mxu0 %v118
    %590 = vmatpush.msra.mxu0 %v117
    %591 = vmatmul.f32.gmra.mxu0 %v573
    %v592 = vpop.f32.mrf.mxu0
    %v593 = vadd.f32 0.0, %v592
    %594 = vdwg.mxu0
    %v596 = vsel %vm304, %v434, 0
    %598 = vmatpush.msra.mxu0 0.0
    %599 = vmatpush.msra.mxu0 0.0
    %600 = vmatpush.msra.mxu0 0.0
    %601 = vmatpush.msra.mxu0 0.0
    %602 = vmatpush.msra.mxu0 0.0
    %603 = vmatpush.msra.mxu0 0.0
    %604 = vmatpush.msra.mxu0 0.0
    %605 = vmatpush.msra.mxu0 0.0
    %606 = vmatpush.msra.mxu0 0.0
    %607 = vmatpush.msra.mxu0 0.0
    %608 = vmatpush.msra.mxu0 0.0
    %609 = vmatpush.msra.mxu0 0.0
    %610 = vmatpush.msra.mxu0 0.0
    %611 = vmatpush.msra.mxu0 0.0
    %612 = vmatpush.msra.mxu0 %v111
    %613 = vmatpush.msra.mxu0 %v110
    %614 = vmatmul.f32.gmra.mxu0 %v596
    %v615 = vpop.f32.mrf.mxu0
    %v616 = vadd.f32 %v593, %v615
    %617 = vdwg.mxu0
    %v618 = vadd.f32 %v616, %v465
    %v619 = vxor.u32 %v618, 2147483648
    %v620 = vmul.f32 %v619, 1.442695
    %v621 = vpow.pop %v620
    %v622 = vadd.f32 %v621, 1.0
    %v623 = vrcp.pop %v622
    %v624 = vmul.f32 %v622, %v623
    %v625 = vsub.f32 1.0, %v624
    %v626 = vmul.f32 %v623, %v625
    %v627 = vadd.f32 %v623, %v626
    %vm628 = vweird.f32 %v622
    %vm629 = vweird.f32 %v623
    %vm630 = vmor %vm628, %vm629
    %v631 = vsel %vm630, %v623, %v627
    %v632 = vand.u32 2147483647, %v622
    %vm633 = vcmp.eq.f32.partialorder %v632, 8.507059e+37
    %v634 = vand.u32 %v622, 2147483648
    %v635 = vor.u32 1.1754944e-38, %v634
    %v636 = vsel %vm633, %v635, %v631
    %v637 = vmul.f32 1.0, %v636
    %639 = vrot.lane.b32.xlu0 %v467, 64
    %v640 = vpop.permute.xlu0 %639
    %v642 = vmul.f32 %v637, %v640
    %644 = vrot.lane.b32.xlu0 %v642, 64
    %v645 = vpop.permute.xlu0 %644
    %v647 = vadd.f32 %v616, %v645
    %v648 = vtanh.pop %v647
    %v649 = vsub.f32 1.0, %v637
    %651 = vrot.lane.b32.xlu0 %v648, 96
    %v652 = vpop.permute.xlu0 %651
    %v654 = vmul.f32 %v649, %v652
    %v655 = vmul.f32 %v637, %v369
    %v656 = vadd.f32 %v654, %v655
    %658 = vrot.lane.b32.xlu0 %v656, 96
    %v659 = vpop.permute.xlu0 %658
    %v660 = vsel %vm133, %v659, 0
    %662 = vmatpush.msra.mxu0 0.0
    %663 = vmatpush.msra.mxu0 0.0
    %664 = vmatpush.msra.mxu0 0.0
    %665 = vmatpush.msra.mxu0 0.0
    %666 = vmatpush.msra.mxu0 0.0
    %667 = vmatpush.msra.mxu0 0.0
    %668 = vmatpush.msra.mxu0 0.0
    %669 = vmatpush.msra.mxu0 0.0
    %670 = vmatpush.msra.mxu0 0.0
    %671 = vmatpush.msra.mxu0 0.0
    %672 = vmatpush.msra.mxu0 0.0
    %673 = vmatpush.msra.mxu0 0.0
    %674 = vmatpush.msra.mxu0 %v125
    %675 = vmatpush.msra.mxu0 %v124
    %676 = vmatpush.msra.mxu0 %v123
    %677 = vmatpush.msra.mxu0 %v122
    %678 = vmatmul.f32.gmra.mxu0 %v660
    %v679 = vpop.f32.mrf.mxu0
    %v680 = vadd.f32 %v371, %v679
    %681 = vdwg.mxu0
    %v682 = vsel %vm398, %v680, -inf
    %683 = vmax.xlane.f32.xlu0 %v682
    %v684 = vpop.xlane.xlu0 %683
    %v685 = vsub.f32 %v680, %v684
    %v686 = vmul.f32 %v685, 1.442695
    %v687 = vpow.pop %v686
    %v688 = vsel %vm398, %v687, 0.0
    %689 = vadd.xlane.f32.xlu0 %v688
    %v690 = vpop.xlane.xlu0 %689
    %v691 = vlog2.pop %v690
    %v692 = vmul.f32 %v691, 0.6931472
    %v693 = vadd.f32 %v692, %v684
    %v694 = vsub.f32 %v680, %v693
    %v695 = vsel %vm398, %v694, -inf
    %696 = vmax.xlane.f32.xlu0 %v695
    %v697 = vpop.xlane.xlu0 %696
    %vm698 = vcmp.eq.f32.partialorder %v694, %v697
    %v699 = vsel %vm698, %v128, 16
    %v700 = vsel %vm398, %v699, 2147483647
    %v701 = vand.u32 %v700, 65535
    %v702 = vshra.s32 %v700, 16
    %v703 = vcvt.s32.f32 %v701
    %v704 = vcvt.s32.f32 %v702
    %705 = vmin.xlane.f32.xlu0 %v704
    %v706 = vpop.xlane.xlu0 %705
    %vm707 = vcmp.eq.f32.partialorder %v704, %v706
    %v708 = vsel %vm707, %v703, inf
    %709 = vmin.xlane.f32.xlu0 %v708
    %v710 = vpop.xlane.xlu0 %709
    %v711 = vcvt.f32.s32 %v710
    %v712 = vcvt.f32.s32 %v706
    %v713 = vshll.u32 %v712, 16
    %v714 = vadd.s32 %v713, %v711
    %vm715 = vcmp.eq.s32.totalorder %v128, %v714
    %v716 = vsel %vm715, 1, 0
    %v717 = vcvt.s32.f32 %v716
    %vm718 = vcmp.eq.s32.totalorder %v128, 1
    %v719 = vsel %vm718, %v714, 0
    %v720 = vadd.s32 %v435, %v719
    %v721 = vsel %vm718, 1, 0
    %v722 = vcvt.s32.f32 %v721
    %v723 = vmul.f32 %v538, %v722
    %v724 = vmul.f32 %v553, %v722
    %v725 = vadd.f32 %v438, %v723
    %v726 = vadd.f32 %v439, %v724
    %s727 = scalar_lea.vmem [#allocation8], 2
    %v728 = vld [vmem:[%s727] sm:$0x3]
    %v729 = vmul.f32 %v728, %v694
    %v730 = vsel %vm398, %v729, 0.0
    %731 = vadd.xlane.f32.xlu0 %v730
    %v732 = vpop.xlane.xlu0 %731
    %v733 = vsub.f32 0.0, %v732
    %v734 = vadd.f32 %v446, %v733
    %735 = vmatpush.msra.mxu0 0.0
    %736 = vmatpush.msra.mxu0 0.0
    %737 = vmatpush.msra.mxu0 0.0
    %738 = vmatpush.msra.mxu0 0.0
    %739 = vmatpush.msra.mxu0 0.0
    %740 = vmatpush.msra.mxu0 0.0
    %741 = vmatpush.msra.mxu0 0.0
    %742 = vmatpush.msra.mxu0 0.0
    %743 = vmatpush.msra.mxu0 0.0
    %744 = vmatpush.msra.mxu0 0.0
    %745 = vmatpush.msra.mxu0 0.0
    %746 = vmatpush.msra.mxu0 0.0
    %747 = vmatpush.msra.mxu0 %v116
    %748 = vmatpush.msra.mxu0 %v115
    %749 = vmatpush.msra.mxu0 %v114
    %750 = vmatpush.msra.mxu0 %v113
    %751 = vmatmul.f32.gmra.mxu0 %v660
    %v752 = vpop.f32.mrf.mxu0
    %v753 = vadd.f32 0.0, %v752
    %754 = vdwg.mxu0
    %v755 = vadd.f32 %v753, %v160
    %v757 = vrot.slane %v753, 1
    %v758 = vperm.slane %v753, 0
    %v759 = vperm.slane %v757, 0
    %v762 = vadd.f32 %v758, %v172
    %v763 = vadd.f32 %v759, %v174
    %v764 = vtanh.pop %v762
    %v765 = vtanh.pop %v763
    %v766 = vmul.f32 %v764, %v184
    %v767 = vmul.f32 %v765, %v184
    %770 = vrot.lane.b32.xlu0 %v766, 32
    %v771 = vpop.permute.xlu0 %770
    %772 = vrot.lane.b32.xlu0 %v767, 32
    %v773 = vpop.permute.xlu0 %772
    %v776 = vsel %vm133, %v771, 0.0
    %777 = vadd.xlane.f32.xlu0 %v776
    %v778 = vpop.xlane.xlu0 %777
    %v779 = vsel %vm133, %v773, 0.0
    %780 = vadd.xlane.f32.xlu0 %v779
    %v781 = vpop.xlane.xlu0 %780
    %v782 = vrot.slane %v778, 4
    %v783 = vmax.f32 %v778, %v782
    %v784 = vrot.slane %v783, 2
    %v785 = vmax.f32 %v783, %v784
    %v786 = vrot.slane %v785, 1
    %v787 = vmax.f32 %v785, %v786
    %v788 = vrot.slane %v781, 4
    %v789 = vmax.f32 %v781, %v788
    %v790 = vrot.slane %v789, 2
    %v791 = vmax.f32 %v789, %v790
    %v792 = vrot.slane %v791, 1
    %v793 = vmax.f32 %v791, %v792
    %v794 = vsub.f32 %v778, %v787
    %v795 = vsub.f32 %v781, %v793
    %v796 = vmul.f32 %v794, 1.442695
    %v797 = vpow.pop %v796
    %v798 = vmul.f32 %v795, 1.442695
    %v799 = vpow.pop %v798
    %v800 = vrot.slane %v797, 4
    %v801 = vadd.f32 %v797, %v800
    %v802 = vrot.slane %v801, 2
    %v803 = vadd.f32 %v801, %v802
    %v804 = vrot.slane %v803, 1
    %v805 = vadd.f32 %v803, %v804
    %v806 = vrot.slane %v799, 4
    %v807 = vadd.f32 %v799, %v806
    %v808 = vrot.slane %v807, 2
    %v809 = vadd.f32 %v807, %v808
    %v810 = vrot.slane %v809, 1
    %v811 = vadd.f32 %v809, %v810
    %v812 = vrcp.pop %v805
    %v813 = vmul.f32 %v805, %v812
    %v814 = vsub.f32 1.0, %v813
    %v815 = vmul.f32 %v812, %v814
    %v816 = vadd.f32 %v812, %v815
    %vm817 = vweird.f32 %v805
    %vm818 = vweird.f32 %v812
    %vm819 = vmor %vm817, %vm818
    %v820 = vsel %vm819, %v812, %v816
    %v821 = vand.u32 2147483647, %v805
    %vm822 = vcmp.eq.f32.partialorder %v821, 8.507059e+37
    %v823 = vand.u32 %v805, 2147483648
    %v824 = vor.u32 1.1754944e-38, %v823
    %v825 = vsel %vm822, %v824, %v820
    %v826 = vmul.f32 %v797, %v825
    %v827 = vrcp.pop %v811
    %v828 = vmul.f32 %v811, %v827
    %v829 = vsub.f32 1.0, %v828
    %v830 = vmul.f32 %v827, %v829
    %v831 = vadd.f32 %v827, %v830
    %vm832 = vweird.f32 %v811
    %vm833 = vweird.f32 %v827
    %vm834 = vmor %vm832, %vm833
    %v835 = vsel %vm834, %v827, %v831
    %v836 = vand.u32 2147483647, %v811
    %vm837 = vcmp.eq.f32.partialorder %v836, 8.507059e+37
    %v838 = vand.u32 %v811, 2147483648
    %v839 = vor.u32 1.1754944e-38, %v838
    %v840 = vsel %vm837, %v839, %v835
    %v841 = vmul.f32 %v799, %v840
    %v842 = vmul.f32 %v826, %v106
    %v843 = vmul.f32 %v841, %v107
    %v844 = vsel %vm133, %v842, 0.0
    %v845 = vrot.slane %v844, 4
    %v846 = vadd.f32 %v844, %v845
    %v847 = vrot.slane %v846, 2
    %v848 = vadd.f32 %v846, %v847
    %v849 = vrot.slane %v848, 1
    %v850 = vadd.f32 %v848, %v849
    %v851 = vsel %vm133, %v843, 0.0
    %v852 = vrot.slane %v851, 4
    %v853 = vadd.f32 %v851, %v852
    %v854 = vrot.slane %v853, 2
    %v855 = vadd.f32 %v853, %v854
    %v856 = vrot.slane %v855, 1
    %v857 = vadd.f32 %v855, %v856
    %v860 = vsel %vm280, %v857, %v850
    %v861 = vsel %vm133, %v860, 0
    %863 = vmatpush.msra.mxu0 0.0
    %864 = vmatpush.msra.mxu0 0.0
    %865 = vmatpush.msra.mxu0 0.0
    %866 = vmatpush.msra.mxu0 0.0
    %867 = vmatpush.msra.mxu0 0.0
    %868 = vmatpush.msra.mxu0 0.0
    %869 = vmatpush.msra.mxu0 0.0
    %870 = vmatpush.msra.mxu0 0.0
    %871 = vmatpush.msra.mxu0 0.0
    %872 = vmatpush.msra.mxu0 0.0
    %873 = vmatpush.msra.mxu0 0.0
    %874 = vmatpush.msra.mxu0 0.0
    %875 = vmatpush.msra.mxu0 %v120
    %876 = vmatpush.msra.mxu0 %v119
    %877 = vmatpush.msra.mxu0 %v118
    %878 = vmatpush.msra.mxu0 %v117
    %879 = vmatmul.f32.gmra.mxu0 %v861
    %v880 = vpop.f32.mrf.mxu0
    %v881 = vadd.f32 0.0, %v880
    %882 = vdwg.mxu0
    %v884 = vsel %vm304, %v717, 0
    %886 = vmatpush.msra.mxu0 0.0
    %887 = vmatpush.msra.mxu0 0.0
    %888 = vmatpush.msra.mxu0 0.0
    %889 = vmatpush.msra.mxu0 0.0
    %890 = vmatpush.msra.mxu0 0.0
    %891 = vmatpush.msra.mxu0 0.0
    %892 = vmatpush.msra.mxu0 0.0
    %893 = vmatpush.msra.mxu0 0.0
    %894 = vmatpush.msra.mxu0 0.0
    %895 = vmatpush.msra.mxu0 0.0
    %896 = vmatpush.msra.mxu0 0.0
    %897 = vmatpush.msra.mxu0 0.0
    %898 = vmatpush.msra.mxu0 0.0
    %899 = vmatpush.msra.mxu0 0.0
    %900 = vmatpush.msra.mxu0 %v111
    %901 = vmatpush.msra.mxu0 %v110
    %902 = vmatmul.f32.gmra.mxu0 %v884
    %v903 = vpop.f32.mrf.mxu0
    %v904 = vadd.f32 %v881, %v903
    %905 = vdwg.mxu0
    %v906 = vadd.f32 %v904, %v753
    %v907 = vxor.u32 %v906, 2147483648
    %v908 = vmul.f32 %v907, 1.442695
    %v909 = vpow.pop %v908
    %v910 = vadd.f32 %v909, 1.0
    %v911 = vrcp.pop %v910
    %v912 = vmul.f32 %v910, %v911
    %v913 = vsub.f32 1.0, %v912
    %v914 = vmul.f32 %v911, %v913
    %v915 = vadd.f32 %v911, %v914
    %vm916 = vweird.f32 %v910
    %vm917 = vweird.f32 %v911
    %vm918 = vmor %vm916, %vm917
    %v919 = vsel %vm918, %v911, %v915
    %v920 = vand.u32 2147483647, %v910
    %vm921 = vcmp.eq.f32.partialorder %v920, 8.507059e+37
    %v922 = vand.u32 %v910, 2147483648
    %v923 = vor.u32 1.1754944e-38, %v922
    %v924 = vsel %vm921, %v923, %v919
    %v925 = vmul.f32 1.0, %v924
    %927 = vrot.lane.b32.xlu0 %v755, 64
    %v928 = vpop.permute.xlu0 %927
    %v930 = vmul.f32 %v925, %v928
    %932 = vrot.lane.b32.xlu0 %v930, 64
    %v933 = vpop.permute.xlu0 %932
    %v935 = vadd.f32 %v904, %v933
    %v936 = vtanh.pop %v935
    %v937 = vsub.f32 1.0, %v925
    %939 = vrot.lane.b32.xlu0 %v936, 96
    %v940 = vpop.permute.xlu0 %939
    %v942 = vmul.f32 %v937, %v940
    %v943 = vmul.f32 %v925, %v656
    %v944 = vadd.f32 %v942, %v943
    %946 = vrot.lane.b32.xlu0 %v944, 96
    %v947 = vpop.permute.xlu0 %946
    %v948 = vsel %vm133, %v947, 0
    %950 = vmatpush.msra.mxu0 0.0
    %951 = vmatpush.msra.mxu0 0.0
    %952 = vmatpush.msra.mxu0 0.0
    %953 = vmatpush.msra.mxu0 0.0
    %954 = vmatpush.msra.mxu0 0.0
    %955 = vmatpush.msra.mxu0 0.0
    %956 = vmatpush.msra.mxu0 0.0
    %957 = vmatpush.msra.mxu0 0.0
    %958 = vmatpush.msra.mxu0 0.0
    %959 = vmatpush.msra.mxu0 0.0
    %960 = vmatpush.msra.mxu0 0.0
    %961 = vmatpush.msra.mxu0 0.0
    %962 = vmatpush.msra.mxu0 %v125
    %963 = vmatpush.msra.mxu0 %v124
    %964 = vmatpush.msra.mxu0 %v123
    %965 = vmatpush.msra.mxu0 %v122
    %966 = vmatmul.f32.gmra.mxu0 %v948
    %v967 = vpop.f32.mrf.mxu0
    %v968 = vadd.f32 %v371, %v967
    %969 = vdwg.mxu0
    %v970 = vsel %vm398, %v968, -inf
    %971 = vmax.xlane.f32.xlu0 %v970
    %v972 = vpop.xlane.xlu0 %971
    %v973 = vsub.f32 %v968, %v972
    %v974 = vmul.f32 %v973, 1.442695
    %v975 = vpow.pop %v974
    %v976 = vsel %vm398, %v975, 0.0
    %977 = vadd.xlane.f32.xlu0 %v976
    %v978 = vpop.xlane.xlu0 %977
    %v979 = vlog2.pop %v978
    %v980 = vmul.f32 %v979, 0.6931472
    %v981 = vadd.f32 %v980, %v972
    %v982 = vsub.f32 %v968, %v981
    %v983 = vsel %vm398, %v982, -inf
    %984 = vmax.xlane.f32.xlu0 %v983
    %v985 = vpop.xlane.xlu0 %984
    %vm986 = vcmp.eq.f32.partialorder %v982, %v985
    %v987 = vsel %vm986, %v128, 16
    %v988 = vsel %vm398, %v987, 2147483647
    %v989 = vand.u32 %v988, 65535
    %v990 = vshra.s32 %v988, 16
    %v991 = vcvt.s32.f32 %v989
    %v992 = vcvt.s32.f32 %v990
    %993 = vmin.xlane.f32.xlu0 %v992
    %v994 = vpop.xlane.xlu0 %993
    %vm995 = vcmp.eq.f32.partialorder %v992, %v994
    %v996 = vsel %vm995, %v991, inf
    %997 = vmin.xlane.f32.xlu0 %v996
    %v998 = vpop.xlane.xlu0 %997
    %v999 = vcvt.f32.s32 %v998
    %v1000 = vcvt.f32.s32 %v994
    %v1001 = vshll.u32 %v1000, 16
    %v1002 = vadd.s32 %v1001, %v999
    %vm1003 = vcmp.eq.s32.totalorder %v128, %v1002
    %v1004 = vsel %vm1003, 1, 0
    %v1005 = vcvt.s32.f32 %v1004
    %vm1006 = vcmp.eq.s32.totalorder %v128, 2
    %v1007 = vsel %vm1006, %v1002, 0
    %v1008 = vadd.s32 %v720, %v1007
    %v1009 = vsel %vm1006, 1, 0
    %v1010 = vcvt.s32.f32 %v1009
    %v1011 = vmul.f32 %v826, %v1010
    %v1012 = vmul.f32 %v841, %v1010
    %v1013 = vadd.f32 %v725, %v1011
    %v1014 = vadd.f32 %v726, %v1012
    %s1015 = scalar_lea.vmem [#allocation8], 4
    %v1016 = vld [vmem:[%s1015] sm:$0x3]
    %v1017 = vmul.f32 %v1016, %v982
    %v1018 = vsel %vm398, %v1017, 0.0
    %1019 = vadd.xlane.f32.xlu0 %v1018
    %v1020 = vpop.xlane.xlu0 %1019
    %v1021 = vsub.f32 0.0, %v1020
    %v1022 = vadd.f32 %v734, %v1021
    %1023 = vmatpush.msra.mxu0 0.0
    %1024 = vmatpush.msra.mxu0 0.0
    %1025 = vmatpush.msra.mxu0 0.0
    %1026 = vmatpush.msra.mxu0 0.0
    %1027 = vmatpush.msra.mxu0 0.0
    %1028 = vmatpush.msra.mxu0 0.0
    %1029 = vmatpush.msra.mxu0 0.0
    %1030 = vmatpush.msra.mxu0 0.0
    %1031 = vmatpush.msra.mxu0 0.0
    %1032 = vmatpush.msra.mxu0 0.0
    %1033 = vmatpush.msra.mxu0 0.0
    %1034 = vmatpush.msra.mxu0 0.0
    %1035 = vmatpush.msra.mxu0 %v116
    %1036 = vmatpush.msra.mxu0 %v115
    %1037 = vmatpush.msra.mxu0 %v114
    %1038 = vmatpush.msra.mxu0 %v113
    %1039 = vmatmul.f32.gmra.mxu0 %v948
    %v1040 = vpop.f32.mrf.mxu0
    %v1041 = vadd.f32 0.0, %v1040
    %1042 = vdwg.mxu0
    %v1043 = vadd.f32 %v1041, %v160
    %v1045 = vrot.slane %v1041, 1
    %v1046 = vperm.slane %v1041, 0
    %v1047 = vperm.slane %v1045, 0
    %v1050 = vadd.f32 %v1046, %v172
    %v1051 = vadd.f32 %v1047, %v174
    %v1052 = vtanh.pop %v1050
    %v1053 = vtanh.pop %v1051
    %v1054 = vmul.f32 %v1052, %v184
    %v1055 = vmul.f32 %v1053, %v184
    %1058 = vrot.lane.b32.xlu0 %v1054, 32
    %v1059 = vpop.permute.xlu0 %1058
    %1060 = vrot.lane.b32.xlu0 %v1055, 32
    %v1061 = vpop.permute.xlu0 %1060
    %v1064 = vsel %vm133, %v1059, 0.0
    %1065 = vadd.xlane.f32.xlu0 %v1064
    %v1066 = vpop.xlane.xlu0 %1065
    %v1067 = vsel %vm133, %v1061, 0.0
    %1068 = vadd.xlane.f32.xlu0 %v1067
    %v1069 = vpop.xlane.xlu0 %1068
    %v1070 = vrot.slane %v1066, 4
    %v1071 = vmax.f32 %v1066, %v1070
    %v1072 = vrot.slane %v1071, 2
    %v1073 = vmax.f32 %v1071, %v1072
    %v1074 = vrot.slane %v1073, 1
    %v1075 = vmax.f32 %v1073, %v1074
    %v1076 = vrot.slane %v1069, 4
    %v1077 = vmax.f32 %v1069, %v1076
    %v1078 = vrot.slane %v1077, 2
    %v1079 = vmax.f32 %v1077, %v1078
    %v1080 = vrot.slane %v1079, 1
    %v1081 = vmax.f32 %v1079, %v1080
    %v1082 = vsub.f32 %v1066, %v1075
    %v1083 = vsub.f32 %v1069, %v1081
    %v1084 = vmul.f32 %v1082, 1.442695
    %v1085 = vpow.pop %v1084
    %v1086 = vmul.f32 %v1083, 1.442695
    %v1087 = vpow.pop %v1086
    %v1088 = vrot.slane %v1085, 4
    %v1089 = vadd.f32 %v1085, %v1088
    %v1090 = vrot.slane %v1089, 2
    %v1091 = vadd.f32 %v1089, %v1090
    %v1092 = vrot.slane %v1091, 1
    %v1093 = vadd.f32 %v1091, %v1092
    %v1094 = vrot.slane %v1087, 4
    %v1095 = vadd.f32 %v1087, %v1094
    %v1096 = vrot.slane %v1095, 2
    %v1097 = vadd.f32 %v1095, %v1096
    %v1098 = vrot.slane %v1097, 1
    %v1099 = vadd.f32 %v1097, %v1098
    %v1100 = vrcp.pop %v1093
    %v1101 = vmul.f32 %v1093, %v1100
    %v1102 = vsub.f32 1.0, %v1101
    %v1103 = vmul.f32 %v1100, %v1102
    %v1104 = vadd.f32 %v1100, %v1103
    %vm1105 = vweird.f32 %v1093
    %vm1106 = vweird.f32 %v1100
    %vm1107 = vmor %vm1105, %vm1106
    %v1108 = vsel %vm1107, %v1100, %v1104
    %v1109 = vand.u32 2147483647, %v1093
    %vm1110 = vcmp.eq.f32.partialorder %v1109, 8.507059e+37
    %v1111 = vand.u32 %v1093, 2147483648
    %v1112 = vor.u32 1.1754944e-38, %v1111
    %v1113 = vsel %vm1110, %v1112, %v1108
    %v1114 = vmul.f32 %v1085, %v1113
    %v1115 = vrcp.pop %v1099
    %v1116 = vmul.f32 %v1099, %v1115
    %v1117 = vsub.f32 1.0, %v1116
    %v1118 = vmul.f32 %v1115, %v1117
    %v1119 = vadd.f32 %v1115, %v1118
    %vm1120 = vweird.f32 %v1099
    %vm1121 = vweird.f32 %v1115
    %vm1122 = vmor %vm1120, %vm1121
    %v1123 = vsel %vm1122, %v1115, %v1119
    %v1124 = vand.u32 2147483647, %v1099
    %vm1125 = vcmp.eq.f32.partialorder %v1124, 8.507059e+37
    %v1126 = vand.u32 %v1099, 2147483648
    %v1127 = vor.u32 1.1754944e-38, %v1126
    %v1128 = vsel %vm1125, %v1127, %v1123
    %v1129 = vmul.f32 %v1087, %v1128
    %v1130 = vmul.f32 %v1114, %v106
    %v1131 = vmul.f32 %v1129, %v107
    %v1132 = vsel %vm133, %v1130, 0.0
    %v1133 = vrot.slane %v1132, 4
    %v1134 = vadd.f32 %v1132, %v1133
    %v1135 = vrot.slane %v1134, 2
    %v1136 = vadd.f32 %v1134, %v1135
    %v1137 = vrot.slane %v1136, 1
    %v1138 = vadd.f32 %v1136, %v1137
    %v1139 = vsel %vm133, %v1131, 0.0
    %v1140 = vrot.slane %v1139, 4
    %v1141 = vadd.f32 %v1139, %v1140
    %v1142 = vrot.slane %v1141, 2
    %v1143 = vadd.f32 %v1141, %v1142
    %v1144 = vrot.slane %v1143, 1
    %v1145 = vadd.f32 %v1143, %v1144
    %v1148 = vsel %vm280, %v1145, %v1138
    %v1149 = vsel %vm133, %v1148, 0
    %1151 = vmatpush.msra.mxu0 0.0
    %1152 = vmatpush.msra.mxu0 0.0
    %1153 = vmatpush.msra.mxu0 0.0
    %1154 = vmatpush.msra.mxu0 0.0
    %1155 = vmatpush.msra.mxu0 0.0
    %1156 = vmatpush.msra.mxu0 0.0
    %1157 = vmatpush.msra.mxu0 0.0
    %1158 = vmatpush.msra.mxu0 0.0
    %1159 = vmatpush.msra.mxu0 0.0
    %1160 = vmatpush.msra.mxu0 0.0
    %1161 = vmatpush.msra.mxu0 0.0
    %1162 = vmatpush.msra.mxu0 0.0
    %1163 = vmatpush.msra.mxu0 %v120
    %1164 = vmatpush.msra.mxu0 %v119
    %1165 = vmatpush.msra.mxu0 %v118
    %1166 = vmatpush.msra.mxu0 %v117
    %1167 = vmatmul.f32.gmra.mxu0 %v1149
    %v1168 = vpop.f32.mrf.mxu0
    %v1169 = vadd.f32 0.0, %v1168
    %1170 = vdwg.mxu0
    %v1172 = vsel %vm304, %v1005, 0
    %1174 = vmatpush.msra.mxu0 0.0
    %1175 = vmatpush.msra.mxu0 0.0
    %1176 = vmatpush.msra.mxu0 0.0
    %1177 = vmatpush.msra.mxu0 0.0
    %1178 = vmatpush.msra.mxu0 0.0
    %1179 = vmatpush.msra.mxu0 0.0
    %1180 = vmatpush.msra.mxu0 0.0
    %1181 = vmatpush.msra.mxu0 0.0
    %1182 = vmatpush.msra.mxu0 0.0
    %1183 = vmatpush.msra.mxu0 0.0
    %1184 = vmatpush.msra.mxu0 0.0
    %1185 = vmatpush.msra.mxu0 0.0
    %1186 = vmatpush.msra.mxu0 0.0
    %1187 = vmatpush.msra.mxu0 0.0
    %1188 = vmatpush.msra.mxu0 %v111
    %1189 = vmatpush.msra.mxu0 %v110
    %1190 = vmatmul.f32.gmra.mxu0 %v1172
    %v1191 = vpop.f32.mrf.mxu0
    %v1192 = vadd.f32 %v1169, %v1191
    %1193 = vdwg.mxu0
    %v1194 = vadd.f32 %v1192, %v1041
    %v1195 = vxor.u32 %v1194, 2147483648
    %v1196 = vmul.f32 %v1195, 1.442695
    %v1197 = vpow.pop %v1196
    %v1198 = vadd.f32 %v1197, 1.0
    %v1199 = vrcp.pop %v1198
    %v1200 = vmul.f32 %v1198, %v1199
    %v1201 = vsub.f32 1.0, %v1200
    %v1202 = vmul.f32 %v1199, %v1201
    %v1203 = vadd.f32 %v1199, %v1202
    %vm1204 = vweird.f32 %v1198
    %vm1205 = vweird.f32 %v1199
    %vm1206 = vmor %vm1204, %vm1205
    %v1207 = vsel %vm1206, %v1199, %v1203
    %v1208 = vand.u32 2147483647, %v1198
    %vm1209 = vcmp.eq.f32.partialorder %v1208, 8.507059e+37
    %v1210 = vand.u32 %v1198, 2147483648
    %v1211 = vor.u32 1.1754944e-38, %v1210
    %v1212 = vsel %vm1209, %v1211, %v1207
    %v1213 = vmul.f32 1.0, %v1212
    %1215 = vrot.lane.b32.xlu0 %v1043, 64
    %v1216 = vpop.permute.xlu0 %1215
    %v1218 = vmul.f32 %v1213, %v1216
    %1220 = vrot.lane.b32.xlu0 %v1218, 64
    %v1221 = vpop.permute.xlu0 %1220
    %v1223 = vadd.f32 %v1192, %v1221
    %v1224 = vtanh.pop %v1223
    %v1225 = vsub.f32 1.0, %v1213
    %1227 = vrot.lane.b32.xlu0 %v1224, 96
    %v1228 = vpop.permute.xlu0 %1227
    %v1230 = vmul.f32 %v1225, %v1228
    %v1231 = vmul.f32 %v1213, %v944
    %v1232 = vadd.f32 %v1230, %v1231
    %1234 = vrot.lane.b32.xlu0 %v1232, 96
    %v1235 = vpop.permute.xlu0 %1234
    %v1236 = vsel %vm133, %v1235, 0
    %1238 = vmatpush.msra.mxu0 0.0
    %1239 = vmatpush.msra.mxu0 0.0
    %1240 = vmatpush.msra.mxu0 0.0
    %1241 = vmatpush.msra.mxu0 0.0
    %1242 = vmatpush.msra.mxu0 0.0
    %1243 = vmatpush.msra.mxu0 0.0
    %1244 = vmatpush.msra.mxu0 0.0
    %1245 = vmatpush.msra.mxu0 0.0
    %1246 = vmatpush.msra.mxu0 0.0
    %1247 = vmatpush.msra.mxu0 0.0
    %1248 = vmatpush.msra.mxu0 0.0
    %1249 = vmatpush.msra.mxu0 0.0
    %1250 = vmatpush.msra.mxu0 %v125
    %1251 = vmatpush.msra.mxu0 %v124
    %1252 = vmatpush.msra.mxu0 %v123
    %1253 = vmatpush.msra.mxu0 %v122
    %1254 = vmatmul.f32.gmra.mxu0 %v1236
    %v1255 = vpop.f32.mrf.mxu0
    %v1256 = vadd.f32 %v371, %v1255
    %1257 = vdwg.mxu0
    %v1258 = vsel %vm398, %v1256, -inf
    %1259 = vmax.xlane.f32.xlu0 %v1258
    %v1260 = vpop.xlane.xlu0 %1259
    %v1261 = vsub.f32 %v1256, %v1260
    %v1262 = vmul.f32 %v1261, 1.442695
    %v1263 = vpow.pop %v1262
    %v1264 = vsel %vm398, %v1263, 0.0
    %1265 = vadd.xlane.f32.xlu0 %v1264
    %v1266 = vpop.xlane.xlu0 %1265
    %v1267 = vlog2.pop %v1266
    %v1268 = vmul.f32 %v1267, 0.6931472
    %v1269 = vadd.f32 %v1268, %v1260
    %v1270 = vsub.f32 %v1256, %v1269
    %v1271 = vsel %vm398, %v1270, -inf
    %1272 = vmax.xlane.f32.xlu0 %v1271
    %v1273 = vpop.xlane.xlu0 %1272
    %vm1274 = vcmp.eq.f32.partialorder %v1270, %v1273
    %v1275 = vsel %vm1274, %v128, 16
    %v1276 = vsel %vm398, %v1275, 2147483647
    %v1277 = vand.u32 %v1276, 65535
    %v1278 = vshra.s32 %v1276, 16
    %v1279 = vcvt.s32.f32 %v1277
    %v1280 = vcvt.s32.f32 %v1278
    %1281 = vmin.xlane.f32.xlu0 %v1280
    %v1282 = vpop.xlane.xlu0 %1281
    %vm1283 = vcmp.eq.f32.partialorder %v1280, %v1282
    %v1284 = vsel %vm1283, %v1279, inf
    %1285 = vmin.xlane.f32.xlu0 %v1284
    %v1286 = vpop.xlane.xlu0 %1285
    %v1287 = vcvt.f32.s32 %v1286
    %v1288 = vcvt.f32.s32 %v1282
    %v1289 = vshll.u32 %v1288, 16
    %v1290 = vadd.s32 %v1289, %v1287
    %vm1291 = vcmp.eq.s32.totalorder %v128, %v1290
    %v1292 = vsel %vm1291, 1, 0
    %v1293 = vcvt.s32.f32 %v1292
    %vm1294 = vcmp.eq.s32.totalorder %v128, 3
    %v1295 = vsel %vm1294, %v1290, 0
    %v1296 = vadd.s32 %v1008, %v1295
    %v1297 = vsel %vm1294, 1, 0
    %v1298 = vcvt.s32.f32 %v1297
    %v1299 = vmul.f32 %v1114, %v1298
    %v1300 = vmul.f32 %v1129, %v1298
    %v1301 = vadd.f32 %v1013, %v1299
    %v1302 = vadd.f32 %v1014, %v1300
    %s1303 = scalar_lea.vmem [#allocation8], 6
    %v1304 = vld [vmem:[%s1303] sm:$0x3]
    %v1305 = vmul.f32 %v1304, %v1270
    %v1306 = vsel %vm398, %v1305, 0.0
    %1307 = vadd.xlane.f32.xlu0 %v1306
    %v1308 = vpop.xlane.xlu0 %1307
    %v1309 = vsub.f32 0.0, %v1308
    %v1310 = vadd.f32 %v1022, %v1309
    %1311 = vmatpush.msra.mxu0 0.0
    %1312 = vmatpush.msra.mxu0 0.0
    %1313 = vmatpush.msra.mxu0 0.0
    %1314 = vmatpush.msra.mxu0 0.0
    %1315 = vmatpush.msra.mxu0 0.0
    %1316 = vmatpush.msra.mxu0 0.0
    %1317 = vmatpush.msra.mxu0 0.0
    %1318 = vmatpush.msra.mxu0 0.0
    %1319 = vmatpush.msra.mxu0 0.0
    %1320 = vmatpush.msra.mxu0 0.0
    %1321 = vmatpush.msra.mxu0 0.0
    %1322 = vmatpush.msra.mxu0 0.0
    %1323 = vmatpush.msra.mxu0 %v116
    %1324 = vmatpush.msra.mxu0 %v115
    %1325 = vmatpush.msra.mxu0 %v114
    %1326 = vmatpush.msra.mxu0 %v113
    %1327 = vmatmul.f32.gmra.mxu0 %v1236
    %v1328 = vpop.f32.mrf.mxu0
    %v1329 = vadd.f32 0.0, %v1328
    %1330 = vdwg.mxu0
    %v1331 = vadd.f32 %v1329, %v160
    %v1333 = vrot.slane %v1329, 1
    %v1334 = vperm.slane %v1329, 0
    %v1335 = vperm.slane %v1333, 0
    %v1338 = vadd.f32 %v1334, %v172
    %v1339 = vadd.f32 %v1335, %v174
    %v1340 = vtanh.pop %v1338
    %v1341 = vtanh.pop %v1339
    %v1342 = vmul.f32 %v1340, %v184
    %v1343 = vmul.f32 %v1341, %v184
    %1346 = vrot.lane.b32.xlu0 %v1342, 32
    %v1347 = vpop.permute.xlu0 %1346
    %1348 = vrot.lane.b32.xlu0 %v1343, 32
    %v1349 = vpop.permute.xlu0 %1348
    %v1352 = vsel %vm133, %v1347, 0.0
    %1353 = vadd.xlane.f32.xlu0 %v1352
    %v1354 = vpop.xlane.xlu0 %1353
    %v1355 = vsel %vm133, %v1349, 0.0
    %1356 = vadd.xlane.f32.xlu0 %v1355
    %v1357 = vpop.xlane.xlu0 %1356
    %v1358 = vrot.slane %v1354, 4
    %v1359 = vmax.f32 %v1354, %v1358
    %v1360 = vrot.slane %v1359, 2
    %v1361 = vmax.f32 %v1359, %v1360
    %v1362 = vrot.slane %v1361, 1
    %v1363 = vmax.f32 %v1361, %v1362
    %v1364 = vrot.slane %v1357, 4
    %v1365 = vmax.f32 %v1357, %v1364
    %v1366 = vrot.slane %v1365, 2
    %v1367 = vmax.f32 %v1365, %v1366
    %v1368 = vrot.slane %v1367, 1
    %v1369 = vmax.f32 %v1367, %v1368
    %v1370 = vsub.f32 %v1354, %v1363
    %v1371 = vsub.f32 %v1357, %v1369
    %v1372 = vmul.f32 %v1370, 1.442695
    %v1373 = vpow.pop %v1372
    %v1374 = vmul.f32 %v1371, 1.442695
    %v1375 = vpow.pop %v1374
    %v1376 = vrot.slane %v1373, 4
    %v1377 = vadd.f32 %v1373, %v1376
    %v1378 = vrot.slane %v1377, 2
    %v1379 = vadd.f32 %v1377, %v1378
    %v1380 = vrot.slane %v1379, 1
    %v1381 = vadd.f32 %v1379, %v1380
    %v1382 = vrot.slane %v1375, 4
    %v1383 = vadd.f32 %v1375, %v1382
    %v1384 = vrot.slane %v1383, 2
    %v1385 = vadd.f32 %v1383, %v1384
    %v1386 = vrot.slane %v1385, 1
    %v1387 = vadd.f32 %v1385, %v1386
    %v1388 = vrcp.pop %v1381
    %v1389 = vmul.f32 %v1381, %v1388
    %v1390 = vsub.f32 1.0, %v1389
    %v1391 = vmul.f32 %v1388, %v1390
    %v1392 = vadd.f32 %v1388, %v1391
    %vm1393 = vweird.f32 %v1381
    %vm1394 = vweird.f32 %v1388
    %vm1395 = vmor %vm1393, %vm1394
    %v1396 = vsel %vm1395, %v1388, %v1392
    %v1397 = vand.u32 2147483647, %v1381
    %vm1398 = vcmp.eq.f32.partialorder %v1397, 8.507059e+37
    %v1399 = vand.u32 %v1381, 2147483648
    %v1400 = vor.u32 1.1754944e-38, %v1399
    %v1401 = vsel %vm1398, %v1400, %v1396
    %v1402 = vmul.f32 %v1373, %v1401
    %v1403 = vrcp.pop %v1387
    %v1404 = vmul.f32 %v1387, %v1403
    %v1405 = vsub.f32 1.0, %v1404
    %v1406 = vmul.f32 %v1403, %v1405
    %v1407 = vadd.f32 %v1403, %v1406
    %vm1408 = vweird.f32 %v1387
    %vm1409 = vweird.f32 %v1403
    %vm1410 = vmor %vm1408, %vm1409
    %v1411 = vsel %vm1410, %v1403, %v1407
    %v1412 = vand.u32 2147483647, %v1387
    %vm1413 = vcmp.eq.f32.partialorder %v1412, 8.507059e+37
    %v1414 = vand.u32 %v1387, 2147483648
    %v1415 = vor.u32 1.1754944e-38, %v1414
    %v1416 = vsel %vm1413, %v1415, %v1411
    %v1417 = vmul.f32 %v1375, %v1416
    %v1418 = vmul.f32 %v1402, %v106
    %v1419 = vmul.f32 %v1417, %v107
    %v1420 = vsel %vm133, %v1418, 0.0
    %v1421 = vrot.slane %v1420, 4
    %v1422 = vadd.f32 %v1420, %v1421
    %v1423 = vrot.slane %v1422, 2
    %v1424 = vadd.f32 %v1422, %v1423
    %v1425 = vrot.slane %v1424, 1
    %v1426 = vadd.f32 %v1424, %v1425
    %v1427 = vsel %vm133, %v1419, 0.0
    %v1428 = vrot.slane %v1427, 4
    %v1429 = vadd.f32 %v1427, %v1428
    %v1430 = vrot.slane %v1429, 2
    %v1431 = vadd.f32 %v1429, %v1430
    %v1432 = vrot.slane %v1431, 1
    %v1433 = vadd.f32 %v1431, %v1432
    %v1436 = vsel %vm280, %v1433, %v1426
    %v1437 = vsel %vm133, %v1436, 0
    %1439 = vmatpush.msra.mxu0 0.0
    %1440 = vmatpush.msra.mxu0 0.0
    %1441 = vmatpush.msra.mxu0 0.0
    %1442 = vmatpush.msra.mxu0 0.0
    %1443 = vmatpush.msra.mxu0 0.0
    %1444 = vmatpush.msra.mxu0 0.0
    %1445 = vmatpush.msra.mxu0 0.0
    %1446 = vmatpush.msra.mxu0 0.0
    %1447 = vmatpush.msra.mxu0 0.0
    %1448 = vmatpush.msra.mxu0 0.0
    %1449 = vmatpush.msra.mxu0 0.0
    %1450 = vmatpush.msra.mxu0 0.0
    %1451 = vmatpush.msra.mxu0 %v120
    %1452 = vmatpush.msra.mxu0 %v119
    %1453 = vmatpush.msra.mxu0 %v118
    %1454 = vmatpush.msra.mxu0 %v117
    %1455 = vmatmul.f32.gmra.mxu0 %v1437
    %v1456 = vpop.f32.mrf.mxu0
    %v1457 = vadd.f32 0.0, %v1456
    %1458 = vdwg.mxu0
    %v1460 = vsel %vm304, %v1293, 0
    %1462 = vmatpush.msra.mxu0 0.0
    %1463 = vmatpush.msra.mxu0 0.0
    %1464 = vmatpush.msra.mxu0 0.0
    %1465 = vmatpush.msra.mxu0 0.0
    %1466 = vmatpush.msra.mxu0 0.0
    %1467 = vmatpush.msra.mxu0 0.0
    %1468 = vmatpush.msra.mxu0 0.0
    %1469 = vmatpush.msra.mxu0 0.0
    %1470 = vmatpush.msra.mxu0 0.0
    %1471 = vmatpush.msra.mxu0 0.0
    %1472 = vmatpush.msra.mxu0 0.0
    %1473 = vmatpush.msra.mxu0 0.0
    %1474 = vmatpush.msra.mxu0 0.0
    %1475 = vmatpush.msra.mxu0 0.0
    %1476 = vmatpush.msra.mxu0 %v111
    %1477 = vmatpush.msra.mxu0 %v110
    %1478 = vmatmul.f32.gmra.mxu0 %v1460
    %v1479 = vpop.f32.mrf.mxu0
    %v1480 = vadd.f32 %v1457, %v1479
    %1481 = vdwg.mxu0
    %v1482 = vadd.f32 %v1480, %v1329
    %v1483 = vxor.u32 %v1482, 2147483648
    %v1484 = vmul.f32 %v1483, 1.442695
    %v1485 = vpow.pop %v1484
    %v1486 = vadd.f32 %v1485, 1.0
    %v1487 = vrcp.pop %v1486
    %v1488 = vmul.f32 %v1486, %v1487
    %v1489 = vsub.f32 1.0, %v1488
    %v1490 = vmul.f32 %v1487, %v1489
    %v1491 = vadd.f32 %v1487, %v1490
    %vm1492 = vweird.f32 %v1486
    %vm1493 = vweird.f32 %v1487
    %vm1494 = vmor %vm1492, %vm1493
    %v1495 = vsel %vm1494, %v1487, %v1491
    %v1496 = vand.u32 2147483647, %v1486
    %vm1497 = vcmp.eq.f32.partialorder %v1496, 8.507059e+37
    %v1498 = vand.u32 %v1486, 2147483648
    %v1499 = vor.u32 1.1754944e-38, %v1498
    %v1500 = vsel %vm1497, %v1499, %v1495
    %v1501 = vmul.f32 1.0, %v1500
    %1503 = vrot.lane.b32.xlu0 %v1331, 64
    %v1504 = vpop.permute.xlu0 %1503
    %v1506 = vmul.f32 %v1501, %v1504
    %1508 = vrot.lane.b32.xlu0 %v1506, 64
    %v1509 = vpop.permute.xlu0 %1508
    %v1511 = vadd.f32 %v1480, %v1509
    %v1512 = vtanh.pop %v1511
    %v1513 = vsub.f32 1.0, %v1501
    %1515 = vrot.lane.b32.xlu0 %v1512, 96
    %v1516 = vpop.permute.xlu0 %1515
    %v1518 = vmul.f32 %v1513, %v1516
    %v1519 = vmul.f32 %v1501, %v1232
    %v1520 = vadd.f32 %v1518, %v1519
    %1522 = vrot.lane.b32.xlu0 %v1520, 96
    %v1523 = vpop.permute.xlu0 %1522
    %v1524 = vsel %vm133, %v1523, 0
    %1526 = vmatpush.msra.mxu0 0.0
    %1527 = vmatpush.msra.mxu0 0.0
    %1528 = vmatpush.msra.mxu0 0.0
    %1529 = vmatpush.msra.mxu0 0.0
    %1530 = vmatpush.msra.mxu0 0.0
    %1531 = vmatpush.msra.mxu0 0.0
    %1532 = vmatpush.msra.mxu0 0.0
    %1533 = vmatpush.msra.mxu0 0.0
    %1534 = vmatpush.msra.mxu0 0.0
    %1535 = vmatpush.msra.mxu0 0.0
    %1536 = vmatpush.msra.mxu0 0.0
    %1537 = vmatpush.msra.mxu0 0.0
    %1538 = vmatpush.msra.mxu0 %v125
    %1539 = vmatpush.msra.mxu0 %v124
    %1540 = vmatpush.msra.mxu0 %v123
    %1541 = vmatpush.msra.mxu0 %v122
    %1542 = vmatmul.f32.gmra.mxu0 %v1524
    %v1543 = vpop.f32.mrf.mxu0
    %v1544 = vadd.f32 %v371, %v1543
    %1545 = vdwg.mxu0
    %v1546 = vsel %vm398, %v1544, -inf
    %1547 = vmax.xlane.f32.xlu0 %v1546
    %v1548 = vpop.xlane.xlu0 %1547
    %v1549 = vsub.f32 %v1544, %v1548
    %v1550 = vmul.f32 %v1549, 1.442695
    %v1551 = vpow.pop %v1550
    %v1552 = vsel %vm398, %v1551, 0.0
    %1553 = vadd.xlane.f32.xlu0 %v1552
    %v1554 = vpop.xlane.xlu0 %1553
    %v1555 = vlog2.pop %v1554
    %v1556 = vmul.f32 %v1555, 0.6931472
    %v1557 = vadd.f32 %v1556, %v1548
    %v1558 = vsub.f32 %v1544, %v1557
    %v1559 = vsel %vm398, %v1558, -inf
    %1560 = vmax.xlane.f32.xlu0 %v1559
    %v1561 = vpop.xlane.xlu0 %1560
    %vm1562 = vcmp.eq.f32.partialorder %v1558, %v1561
    %v1563 = vsel %vm1562, %v128, 16
    %v1564 = vsel %vm398, %v1563, 2147483647
    %v1565 = vand.u32 %v1564, 65535
    %v1566 = vshra.s32 %v1564, 16
    %v1567 = vcvt.s32.f32 %v1565
    %v1568 = vcvt.s32.f32 %v1566
    %1569 = vmin.xlane.f32.xlu0 %v1568
    %v1570 = vpop.xlane.xlu0 %1569
    %vm1571 = vcmp.eq.f32.partialorder %v1568, %v1570
    %v1572 = vsel %vm1571, %v1567, inf
    %1573 = vmin.xlane.f32.xlu0 %v1572
    %v1574 = vpop.xlane.xlu0 %1573
    %v1575 = vcvt.f32.s32 %v1574
    %v1576 = vcvt.f32.s32 %v1570
    %v1577 = vshll.u32 %v1576, 16
    %v1578 = vadd.s32 %v1577, %v1575
    %vm1579 = vcmp.eq.s32.totalorder %v128, %v1578
    %v1580 = vsel %vm1579, 1, 0
    %v1581 = vcvt.s32.f32 %v1580
    %vm1582 = vcmp.eq.s32.totalorder %v128, 4
    %v1583 = vsel %vm1582, %v1578, 0
    %v1584 = vadd.s32 %v1296, %v1583
    %v1585 = vsel %vm1582, 1, 0
    %v1586 = vcvt.s32.f32 %v1585
    %v1587 = vmul.f32 %v1402, %v1586
    %v1588 = vmul.f32 %v1417, %v1586
    %v1589 = vadd.f32 %v1301, %v1587
    %v1590 = vadd.f32 %v1302, %v1588
    %s1591 = scalar_lea.vmem [#allocation8], 8
    %v1592 = vld [vmem:[%s1591] sm:$0x3]
    %v1593 = vmul.f32 %v1592, %v1558
    %v1594 = vsel %vm398, %v1593, 0.0
    %1595 = vadd.xlane.f32.xlu0 %v1594
    %v1596 = vpop.xlane.xlu0 %1595
    %v1597 = vsub.f32 0.0, %v1596
    %v1598 = vadd.f32 %v1310, %v1597
    %1599 = vmatpush.msra.mxu0 0.0
    %1600 = vmatpush.msra.mxu0 0.0
    %1601 = vmatpush.msra.mxu0 0.0
    %1602 = vmatpush.msra.mxu0 0.0
    %1603 = vmatpush.msra.mxu0 0.0
    %1604 = vmatpush.msra.mxu0 0.0
    %1605 = vmatpush.msra.mxu0 0.0
    %1606 = vmatpush.msra.mxu0 0.0
    %1607 = vmatpush.msra.mxu0 0.0
    %1608 = vmatpush.msra.mxu0 0.0
    %1609 = vmatpush.msra.mxu0 0.0
    %1610 = vmatpush.msra.mxu0 0.0
    %1611 = vmatpush.msra.mxu0 %v116
    %1612 = vmatpush.msra.mxu0 %v115
    %1613 = vmatpush.msra.mxu0 %v114
    %1614 = vmatpush.msra.mxu0 %v113
    %1615 = vmatmul.f32.gmra.mxu0 %v1524
    %v1616 = vpop.f32.mrf.mxu0
    %v1617 = vadd.f32 0.0, %v1616
    %1618 = vdwg.mxu0
    %v1619 = vadd.f32 %v1617, %v160
    %v1621 = vrot.slane %v1617, 1
    %v1622 = vperm.slane %v1617, 0
    %v1623 = vperm.slane %v1621, 0
    %v1626 = vadd.f32 %v1622, %v172
    %v1627 = vadd.f32 %v1623, %v174
    %v1628 = vtanh.pop %v1626
    %v1629 = vtanh.pop %v1627
    %v1630 = vmul.f32 %v1628, %v184
    %v1631 = vmul.f32 %v1629, %v184
    %1634 = vrot.lane.b32.xlu0 %v1630, 32
    %v1635 = vpop.permute.xlu0 %1634
    %1636 = vrot.lane.b32.xlu0 %v1631, 32
    %v1637 = vpop.permute.xlu0 %1636
    %v1640 = vsel %vm133, %v1635, 0.0
    %1641 = vadd.xlane.f32.xlu0 %v1640
    %v1642 = vpop.xlane.xlu0 %1641
    %v1643 = vsel %vm133, %v1637, 0.0
    %1644 = vadd.xlane.f32.xlu0 %v1643
    %v1645 = vpop.xlane.xlu0 %1644
    %v1646 = vrot.slane %v1642, 4
    %v1647 = vmax.f32 %v1642, %v1646
    %v1648 = vrot.slane %v1647, 2
    %v1649 = vmax.f32 %v1647, %v1648
    %v1650 = vrot.slane %v1649, 1
    %v1651 = vmax.f32 %v1649, %v1650
    %v1652 = vrot.slane %v1645, 4
    %v1653 = vmax.f32 %v1645, %v1652
    %v1654 = vrot.slane %v1653, 2
    %v1655 = vmax.f32 %v1653, %v1654
    %v1656 = vrot.slane %v1655, 1
    %v1657 = vmax.f32 %v1655, %v1656
    %v1658 = vsub.f32 %v1642, %v1651
    %v1659 = vsub.f32 %v1645, %v1657
    %v1660 = vmul.f32 %v1658, 1.442695
    %v1661 = vpow.pop %v1660
    %v1662 = vmul.f32 %v1659, 1.442695
    %v1663 = vpow.pop %v1662
    %v1664 = vrot.slane %v1661, 4
    %v1665 = vadd.f32 %v1661, %v1664
    %v1666 = vrot.slane %v1665, 2
    %v1667 = vadd.f32 %v1665, %v1666
    %v1668 = vrot.slane %v1667, 1
    %v1669 = vadd.f32 %v1667, %v1668
    %v1670 = vrot.slane %v1663, 4
    %v1671 = vadd.f32 %v1663, %v1670
    %v1672 = vrot.slane %v1671, 2
    %v1673 = vadd.f32 %v1671, %v1672
    %v1674 = vrot.slane %v1673, 1
    %v1675 = vadd.f32 %v1673, %v1674
    %v1676 = vrcp.pop %v1669
    %v1677 = vmul.f32 %v1669, %v1676
    %v1678 = vsub.f32 1.0, %v1677
    %v1679 = vmul.f32 %v1676, %v1678
    %v1680 = vadd.f32 %v1676, %v1679
    %vm1681 = vweird.f32 %v1669
    %vm1682 = vweird.f32 %v1676
    %vm1683 = vmor %vm1681, %vm1682
    %v1684 = vsel %vm1683, %v1676, %v1680
    %v1685 = vand.u32 2147483647, %v1669
    %vm1686 = vcmp.eq.f32.partialorder %v1685, 8.507059e+37
    %v1687 = vand.u32 %v1669, 2147483648
    %v1688 = vor.u32 1.1754944e-38, %v1687
    %v1689 = vsel %vm1686, %v1688, %v1684
    %v1690 = vmul.f32 %v1661, %v1689
    %v1691 = vrcp.pop %v1675
    %v1692 = vmul.f32 %v1675, %v1691
    %v1693 = vsub.f32 1.0, %v1692
    %v1694 = vmul.f32 %v1691, %v1693
    %v1695 = vadd.f32 %v1691, %v1694
    %vm1696 = vweird.f32 %v1675
    %vm1697 = vweird.f32 %v1691
    %vm1698 = vmor %vm1696, %vm1697
    %v1699 = vsel %vm1698, %v1691, %v1695
    %v1700 = vand.u32 2147483647, %v1675
    %vm1701 = vcmp.eq.f32.partialorder %v1700, 8.507059e+37
    %v1702 = vand.u32 %v1675, 2147483648
    %v1703 = vor.u32 1.1754944e-38, %v1702
    %v1704 = vsel %vm1701, %v1703, %v1699
    %v1705 = vmul.f32 %v1663, %v1704
    %v1706 = vmul.f32 %v1690, %v106
    %v1707 = vmul.f32 %v1705, %v107
    %v1708 = vsel %vm133, %v1706, 0.0
    %v1709 = vrot.slane %v1708, 4
    %v1710 = vadd.f32 %v1708, %v1709
    %v1711 = vrot.slane %v1710, 2
    %v1712 = vadd.f32 %v1710, %v1711
    %v1713 = vrot.slane %v1712, 1
    %v1714 = vadd.f32 %v1712, %v1713
    %v1715 = vsel %vm133, %v1707, 0.0
    %v1716 = vrot.slane %v1715, 4
    %v1717 = vadd.f32 %v1715, %v1716
    %v1718 = vrot.slane %v1717, 2
    %v1719 = vadd.f32 %v1717, %v1718
    %v1720 = vrot.slane %v1719, 1
    %v1721 = vadd.f32 %v1719, %v1720
    %v1724 = vsel %vm280, %v1721, %v1714
    %v1725 = vsel %vm133, %v1724, 0
    %1727 = vmatpush.msra.mxu0 0.0
    %1728 = vmatpush.msra.mxu0 0.0
    %1729 = vmatpush.msra.mxu0 0.0
    %1730 = vmatpush.msra.mxu0 0.0
    %1731 = vmatpush.msra.mxu0 0.0
    %1732 = vmatpush.msra.mxu0 0.0
    %1733 = vmatpush.msra.mxu0 0.0
    %1734 = vmatpush.msra.mxu0 0.0
    %1735 = vmatpush.msra.mxu0 0.0
    %1736 = vmatpush.msra.mxu0 0.0
    %1737 = vmatpush.msra.mxu0 0.0
    %1738 = vmatpush.msra.mxu0 0.0
    %1739 = vmatpush.msra.mxu0 %v120
    %1740 = vmatpush.msra.mxu0 %v119
    %1741 = vmatpush.msra.mxu0 %v118
    %1742 = vmatpush.msra.mxu0 %v117
    %1743 = vmatmul.f32.gmra.mxu0 %v1725
    %v1744 = vpop.f32.mrf.mxu0
    %v1745 = vadd.f32 0.0, %v1744
    %1746 = vdwg.mxu0
    %v1748 = vsel %vm304, %v1581, 0
    %1750 = vmatpush.msra.mxu0 0.0
    %1751 = vmatpush.msra.mxu0 0.0
    %1752 = vmatpush.msra.mxu0 0.0
    %1753 = vmatpush.msra.mxu0 0.0
    %1754 = vmatpush.msra.mxu0 0.0
    %1755 = vmatpush.msra.mxu0 0.0
    %1756 = vmatpush.msra.mxu0 0.0
    %1757 = vmatpush.msra.mxu0 0.0
    %1758 = vmatpush.msra.mxu0 0.0
    %1759 = vmatpush.msra.mxu0 0.0
    %1760 = vmatpush.msra.mxu0 0.0
    %1761 = vmatpush.msra.mxu0 0.0
    %1762 = vmatpush.msra.mxu0 0.0
    %1763 = vmatpush.msra.mxu0 0.0
    %1764 = vmatpush.msra.mxu0 %v111
    %1765 = vmatpush.msra.mxu0 %v110
    %1766 = vmatmul.f32.gmra.mxu0 %v1748
    %v1767 = vpop.f32.mrf.mxu0
    %v1768 = vadd.f32 %v1745, %v1767
    %1769 = vdwg.mxu0
    %v1770 = vadd.f32 %v1768, %v1617
    %v1771 = vxor.u32 %v1770, 2147483648
    %v1772 = vmul.f32 %v1771, 1.442695
    %v1773 = vpow.pop %v1772
    %v1774 = vadd.f32 %v1773, 1.0
    %v1775 = vrcp.pop %v1774
    %v1776 = vmul.f32 %v1774, %v1775
    %v1777 = vsub.f32 1.0, %v1776
    %v1778 = vmul.f32 %v1775, %v1777
    %v1779 = vadd.f32 %v1775, %v1778
    %vm1780 = vweird.f32 %v1774
    %vm1781 = vweird.f32 %v1775
    %vm1782 = vmor %vm1780, %vm1781
    %v1783 = vsel %vm1782, %v1775, %v1779
    %v1784 = vand.u32 2147483647, %v1774
    %vm1785 = vcmp.eq.f32.partialorder %v1784, 8.507059e+37
    %v1786 = vand.u32 %v1774, 2147483648
    %v1787 = vor.u32 1.1754944e-38, %v1786
    %v1788 = vsel %vm1785, %v1787, %v1783
    %v1789 = vmul.f32 1.0, %v1788
    %1791 = vrot.lane.b32.xlu0 %v1619, 64
    %v1792 = vpop.permute.xlu0 %1791
    %v1794 = vmul.f32 %v1789, %v1792
    %1796 = vrot.lane.b32.xlu0 %v1794, 64
    %v1797 = vpop.permute.xlu0 %1796
    %v1799 = vadd.f32 %v1768, %v1797
    %v1800 = vtanh.pop %v1799
    %v1801 = vsub.f32 1.0, %v1789
    %1803 = vrot.lane.b32.xlu0 %v1800, 96
    %v1804 = vpop.permute.xlu0 %1803
    %v1806 = vmul.f32 %v1801, %v1804
    %v1807 = vmul.f32 %v1789, %v1520
    %v1808 = vadd.f32 %v1806, %v1807
    %1810 = vrot.lane.b32.xlu0 %v1808, 96
    %v1811 = vpop.permute.xlu0 %1810
    %v1812 = vsel %vm133, %v1811, 0
    %1814 = vmatpush.msra.mxu0 0.0
    %1815 = vmatpush.msra.mxu0 0.0
    %1816 = vmatpush.msra.mxu0 0.0
    %1817 = vmatpush.msra.mxu0 0.0
    %1818 = vmatpush.msra.mxu0 0.0
    %1819 = vmatpush.msra.mxu0 0.0
    %1820 = vmatpush.msra.mxu0 0.0
    %1821 = vmatpush.msra.mxu0 0.0
    %1822 = vmatpush.msra.mxu0 0.0
    %1823 = vmatpush.msra.mxu0 0.0
    %1824 = vmatpush.msra.mxu0 0.0
    %1825 = vmatpush.msra.mxu0 0.0
    %1826 = vmatpush.msra.mxu0 %v125
    %1827 = vmatpush.msra.mxu0 %v124
    %1828 = vmatpush.msra.mxu0 %v123
    %1829 = vmatpush.msra.mxu0 %v122
    %1830 = vmatmul.f32.gmra.mxu0 %v1812
    %v1831 = vpop.f32.mrf.mxu0
    %v1832 = vadd.f32 %v371, %v1831
    %1833 = vdwg.mxu0
    %v1834 = vsel %vm398, %v1832, -inf
    %1835 = vmax.xlane.f32.xlu0 %v1834
    %v1836 = vpop.xlane.xlu0 %1835
    %v1837 = vsub.f32 %v1832, %v1836
    %v1838 = vmul.f32 %v1837, 1.442695
    %v1839 = vpow.pop %v1838
    %v1840 = vsel %vm398, %v1839, 0.0
    %1841 = vadd.xlane.f32.xlu0 %v1840
    %v1842 = vpop.xlane.xlu0 %1841
    %v1843 = vlog2.pop %v1842
    %v1844 = vmul.f32 %v1843, 0.6931472
    %v1845 = vadd.f32 %v1844, %v1836
    %v1846 = vsub.f32 %v1832, %v1845
    %v1847 = vsel %vm398, %v1846, -inf
    %1848 = vmax.xlane.f32.xlu0 %v1847
    %v1849 = vpop.xlane.xlu0 %1848
    %vm1850 = vcmp.eq.f32.partialorder %v1846, %v1849
    %v1851 = vsel %vm1850, %v128, 16
    %v1852 = vsel %vm398, %v1851, 2147483647
    %v1853 = vand.u32 %v1852, 65535
    %v1854 = vshra.s32 %v1852, 16
    %v1855 = vcvt.s32.f32 %v1853
    %v1856 = vcvt.s32.f32 %v1854
    %1857 = vmin.xlane.f32.xlu0 %v1856
    %v1858 = vpop.xlane.xlu0 %1857
    %vm1859 = vcmp.eq.f32.partialorder %v1856, %v1858
    %v1860 = vsel %vm1859, %v1855, inf
    %1861 = vmin.xlane.f32.xlu0 %v1860
    %v1862 = vpop.xlane.xlu0 %1861
    %v1863 = vcvt.f32.s32 %v1862
    %v1864 = vcvt.f32.s32 %v1858
    %v1865 = vshll.u32 %v1864, 16
    %v1866 = vadd.s32 %v1865, %v1863
    %vm1867 = vcmp.eq.s32.totalorder %v128, %v1866
    %v1868 = vsel %vm1867, 1, 0
    %v1869 = vcvt.s32.f32 %v1868
    %vm1870 = vcmp.eq.s32.totalorder %v128, 5
    %v1871 = vsel %vm1870, %v1866, 0
    %v1872 = vadd.s32 %v1584, %v1871
    %v1873 = vsel %vm1870, 1, 0
    %v1874 = vcvt.s32.f32 %v1873
    %v1875 = vmul.f32 %v1690, %v1874
    %v1876 = vmul.f32 %v1705, %v1874
    %v1877 = vadd.f32 %v1589, %v1875
    %v1878 = vadd.f32 %v1590, %v1876
    %s1879 = scalar_lea.vmem [#allocation8], 10
    %v1880 = vld [vmem:[%s1879] sm:$0x3]
    %v1881 = vmul.f32 %v1880, %v1846
    %v1882 = vsel %vm398, %v1881, 0.0
    %1883 = vadd.xlane.f32.xlu0 %v1882
    %v1884 = vpop.xlane.xlu0 %1883
    %v1885 = vsub.f32 0.0, %v1884
    %v1886 = vadd.f32 %v1598, %v1885
    %1887 = vmatpush.msra.mxu0 0.0
    %1888 = vmatpush.msra.mxu0 0.0
    %1889 = vmatpush.msra.mxu0 0.0
    %1890 = vmatpush.msra.mxu0 0.0
    %1891 = vmatpush.msra.mxu0 0.0
    %1892 = vmatpush.msra.mxu0 0.0
    %1893 = vmatpush.msra.mxu0 0.0
    %1894 = vmatpush.msra.mxu0 0.0
    %1895 = vmatpush.msra.mxu0 0.0
    %1896 = vmatpush.msra.mxu0 0.0
    %1897 = vmatpush.msra.mxu0 0.0
    %1898 = vmatpush.msra.mxu0 0.0
    %1899 = vmatpush.msra.mxu0 %v116
    %1900 = vmatpush.msra.mxu0 %v115
    %1901 = vmatpush.msra.mxu0 %v114
    %1902 = vmatpush.msra.mxu0 %v113
    %1903 = vmatmul.f32.gmra.mxu0 %v1812
    %v1904 = vpop.f32.mrf.mxu0
    %v1905 = vadd.f32 0.0, %v1904
    %1906 = vdwg.mxu0
    %v1907 = vadd.f32 %v1905, %v160
    %v1909 = vrot.slane %v1905, 1
    %v1910 = vperm.slane %v1905, 0
    %v1911 = vperm.slane %v1909, 0
    %v1914 = vadd.f32 %v1910, %v172
    %v1915 = vadd.f32 %v1911, %v174
    %v1916 = vtanh.pop %v1914
    %v1917 = vtanh.pop %v1915
    %v1918 = vmul.f32 %v1916, %v184
    %v1919 = vmul.f32 %v1917, %v184
    %1922 = vrot.lane.b32.xlu0 %v1918, 32
    %v1923 = vpop.permute.xlu0 %1922
    %1924 = vrot.lane.b32.xlu0 %v1919, 32
    %v1925 = vpop.permute.xlu0 %1924
    %v1928 = vsel %vm133, %v1923, 0.0
    %1929 = vadd.xlane.f32.xlu0 %v1928
    %v1930 = vpop.xlane.xlu0 %1929
    %v1931 = vsel %vm133, %v1925, 0.0
    %1932 = vadd.xlane.f32.xlu0 %v1931
    %v1933 = vpop.xlane.xlu0 %1932
    %v1934 = vrot.slane %v1930, 4
    %v1935 = vmax.f32 %v1930, %v1934
    %v1936 = vrot.slane %v1935, 2
    %v1937 = vmax.f32 %v1935, %v1936
    %v1938 = vrot.slane %v1937, 1
    %v1939 = vmax.f32 %v1937, %v1938
    %v1940 = vrot.slane %v1933, 4
    %v1941 = vmax.f32 %v1933, %v1940
    %v1942 = vrot.slane %v1941, 2
    %v1943 = vmax.f32 %v1941, %v1942
    %v1944 = vrot.slane %v1943, 1
    %v1945 = vmax.f32 %v1943, %v1944
    %v1946 = vsub.f32 %v1930, %v1939
    %v1947 = vsub.f32 %v1933, %v1945
    %v1948 = vmul.f32 %v1946, 1.442695
    %v1949 = vpow.pop %v1948
    %v1950 = vmul.f32 %v1947, 1.442695
    %v1951 = vpow.pop %v1950
    %v1952 = vrot.slane %v1949, 4
    %v1953 = vadd.f32 %v1949, %v1952
    %v1954 = vrot.slane %v1953, 2
    %v1955 = vadd.f32 %v1953, %v1954
    %v1956 = vrot.slane %v1955, 1
    %v1957 = vadd.f32 %v1955, %v1956
    %v1958 = vrot.slane %v1951, 4
    %v1959 = vadd.f32 %v1951, %v1958
    %v1960 = vrot.slane %v1959, 2
    %v1961 = vadd.f32 %v1959, %v1960
    %v1962 = vrot.slane %v1961, 1
    %v1963 = vadd.f32 %v1961, %v1962
    %v1964 = vrcp.pop %v1957
    %v1965 = vmul.f32 %v1957, %v1964
    %v1966 = vsub.f32 1.0, %v1965
    %v1967 = vmul.f32 %v1964, %v1966
    %v1968 = vadd.f32 %v1964, %v1967
    %vm1969 = vweird.f32 %v1957
    %vm1970 = vweird.f32 %v1964
    %vm1971 = vmor %vm1969, %vm1970
    %v1972 = vsel %vm1971, %v1964, %v1968
    %v1973 = vand.u32 2147483647, %v1957
    %vm1974 = vcmp.eq.f32.partialorder %v1973, 8.507059e+37
    %v1975 = vand.u32 %v1957, 2147483648
    %v1976 = vor.u32 1.1754944e-38, %v1975
    %v1977 = vsel %vm1974, %v1976, %v1972
    %v1978 = vmul.f32 %v1949, %v1977
    %v1979 = vrcp.pop %v1963
    %v1980 = vmul.f32 %v1963, %v1979
    %v1981 = vsub.f32 1.0, %v1980
    %v1982 = vmul.f32 %v1979, %v1981
    %v1983 = vadd.f32 %v1979, %v1982
    %vm1984 = vweird.f32 %v1963
    %vm1985 = vweird.f32 %v1979
    %vm1986 = vmor %vm1984, %vm1985
    %v1987 = vsel %vm1986, %v1979, %v1983
    %v1988 = vand.u32 2147483647, %v1963
    %vm1989 = vcmp.eq.f32.partialorder %v1988, 8.507059e+37
    %v1990 = vand.u32 %v1963, 2147483648
    %v1991 = vor.u32 1.1754944e-38, %v1990
    %v1992 = vsel %vm1989, %v1991, %v1987
    %v1993 = vmul.f32 %v1951, %v1992
    %v1994 = vmul.f32 %v1978, %v106
    %v1995 = vmul.f32 %v1993, %v107
    %v1996 = vsel %vm133, %v1994, 0.0
    %v1997 = vrot.slane %v1996, 4
    %v1998 = vadd.f32 %v1996, %v1997
    %v1999 = vrot.slane %v1998, 2
    %v2000 = vadd.f32 %v1998, %v1999
    %v2001 = vrot.slane %v2000, 1
    %v2002 = vadd.f32 %v2000, %v2001
    %v2003 = vsel %vm133, %v1995, 0.0
    %v2004 = vrot.slane %v2003, 4
    %v2005 = vadd.f32 %v2003, %v2004
    %v2006 = vrot.slane %v2005, 2
    %v2007 = vadd.f32 %v2005, %v2006
    %v2008 = vrot.slane %v2007, 1
    %v2009 = vadd.f32 %v2007, %v2008
    %v2012 = vsel %vm280, %v2009, %v2002
    %v2013 = vsel %vm133, %v2012, 0
    %2015 = vmatpush.msra.mxu0 0.0
    %2016 = vmatpush.msra.mxu0 0.0
    %2017 = vmatpush.msra.mxu0 0.0
    %2018 = vmatpush.msra.mxu0 0.0
    %2019 = vmatpush.msra.mxu0 0.0
    %2020 = vmatpush.msra.mxu0 0.0
    %2021 = vmatpush.msra.mxu0 0.0
    %2022 = vmatpush.msra.mxu0 0.0
    %2023 = vmatpush.msra.mxu0 0.0
    %2024 = vmatpush.msra.mxu0 0.0
    %2025 = vmatpush.msra.mxu0 0.0
    %2026 = vmatpush.msra.mxu0 0.0
    %2027 = vmatpush.msra.mxu0 %v120
    %2028 = vmatpush.msra.mxu0 %v119
    %2029 = vmatpush.msra.mxu0 %v118
    %2030 = vmatpush.msra.mxu0 %v117
    %2031 = vmatmul.f32.gmra.mxu0 %v2013
    %v2032 = vpop.f32.mrf.mxu0
    %v2033 = vadd.f32 0.0, %v2032
    %2034 = vdwg.mxu0
    %v2036 = vsel %vm304, %v1869, 0
    %2038 = vmatpush.msra.mxu0 0.0
    %2039 = vmatpush.msra.mxu0 0.0
    %2040 = vmatpush.msra.mxu0 0.0
    %2041 = vmatpush.msra.mxu0 0.0
    %2042 = vmatpush.msra.mxu0 0.0
    %2043 = vmatpush.msra.mxu0 0.0
    %2044 = vmatpush.msra.mxu0 0.0
    %2045 = vmatpush.msra.mxu0 0.0
    %2046 = vmatpush.msra.mxu0 0.0
    %2047 = vmatpush.msra.mxu0 0.0
    %2048 = vmatpush.msra.mxu0 0.0
    %2049 = vmatpush.msra.mxu0 0.0
    %2050 = vmatpush.msra.mxu0 0.0
    %2051 = vmatpush.msra.mxu0 0.0
    %2052 = vmatpush.msra.mxu0 %v111
    %2053 = vmatpush.msra.mxu0 %v110
    %2054 = vmatmul.f32.gmra.mxu0 %v2036
    %v2055 = vpop.f32.mrf.mxu0
    %v2056 = vadd.f32 %v2033, %v2055
    %2057 = vdwg.mxu0
    %v2058 = vadd.f32 %v2056, %v1905
    %v2059 = vxor.u32 %v2058, 2147483648
    %v2060 = vmul.f32 %v2059, 1.442695
    %v2061 = vpow.pop %v2060
    %v2062 = vadd.f32 %v2061, 1.0
    %v2063 = vrcp.pop %v2062
    %v2064 = vmul.f32 %v2062, %v2063
    %v2065 = vsub.f32 1.0, %v2064
    %v2066 = vmul.f32 %v2063, %v2065
    %v2067 = vadd.f32 %v2063, %v2066
    %vm2068 = vweird.f32 %v2062
    %vm2069 = vweird.f32 %v2063
    %vm2070 = vmor %vm2068, %vm2069
    %v2071 = vsel %vm2070, %v2063, %v2067
    %v2072 = vand.u32 2147483647, %v2062
    %vm2073 = vcmp.eq.f32.partialorder %v2072, 8.507059e+37
    %v2074 = vand.u32 %v2062, 2147483648
    %v2075 = vor.u32 1.1754944e-38, %v2074
    %v2076 = vsel %vm2073, %v2075, %v2071
    %v2077 = vmul.f32 1.0, %v2076
    %2079 = vrot.lane.b32.xlu0 %v1907, 64
    %v2080 = vpop.permute.xlu0 %2079
    %v2082 = vmul.f32 %v2077, %v2080
    %2084 = vrot.lane.b32.xlu0 %v2082, 64
    %v2085 = vpop.permute.xlu0 %2084
    %v2087 = vadd.f32 %v2056, %v2085
    %v2088 = vtanh.pop %v2087
    %v2089 = vsub.f32 1.0, %v2077
    %2091 = vrot.lane.b32.xlu0 %v2088, 96
    %v2092 = vpop.permute.xlu0 %2091
    %v2094 = vmul.f32 %v2089, %v2092
    %v2095 = vmul.f32 %v2077, %v1808
    %v2096 = vadd.f32 %v2094, %v2095
    %2098 = vrot.lane.b32.xlu0 %v2096, 96
    %v2099 = vpop.permute.xlu0 %2098
    %v2100 = vsel %vm133, %v2099, 0
    %2102 = vmatpush.msra.mxu0 0.0
    %2103 = vmatpush.msra.mxu0 0.0
    %2104 = vmatpush.msra.mxu0 0.0
    %2105 = vmatpush.msra.mxu0 0.0
    %2106 = vmatpush.msra.mxu0 0.0
    %2107 = vmatpush.msra.mxu0 0.0
    %2108 = vmatpush.msra.mxu0 0.0
    %2109 = vmatpush.msra.mxu0 0.0
    %2110 = vmatpush.msra.mxu0 0.0
    %2111 = vmatpush.msra.mxu0 0.0
    %2112 = vmatpush.msra.mxu0 0.0
    %2113 = vmatpush.msra.mxu0 0.0
    %2114 = vmatpush.msra.mxu0 %v125
    %2115 = vmatpush.msra.mxu0 %v124
    %2116 = vmatpush.msra.mxu0 %v123
    %2117 = vmatpush.msra.mxu0 %v122
    %2118 = vmatmul.f32.gmra.mxu0 %v2100
    %v2119 = vpop.f32.mrf.mxu0
    %v2120 = vadd.f32 %v371, %v2119
    %2121 = vdwg.mxu0
    %v2122 = vsel %vm398, %v2120, -inf
    %2123 = vmax.xlane.f32.xlu0 %v2122
    %v2124 = vpop.xlane.xlu0 %2123
    %v2125 = vsub.f32 %v2120, %v2124
    %v2126 = vmul.f32 %v2125, 1.442695
    %v2127 = vpow.pop %v2126
    %v2128 = vsel %vm398, %v2127, 0.0
    %2129 = vadd.xlane.f32.xlu0 %v2128
    %v2130 = vpop.xlane.xlu0 %2129
    %v2131 = vlog2.pop %v2130
    %v2132 = vmul.f32 %v2131, 0.6931472
    %v2133 = vadd.f32 %v2132, %v2124
    %v2134 = vsub.f32 %v2120, %v2133
    %v2135 = vsel %vm398, %v2134, -inf
    %2136 = vmax.xlane.f32.xlu0 %v2135
    %v2137 = vpop.xlane.xlu0 %2136
    %vm2138 = vcmp.eq.f32.partialorder %v2134, %v2137
    %v2139 = vsel %vm2138, %v128, 16
    %v2140 = vsel %vm398, %v2139, 2147483647
    %v2141 = vand.u32 %v2140, 65535
    %v2142 = vshra.s32 %v2140, 16
    %v2143 = vcvt.s32.f32 %v2141
    %v2144 = vcvt.s32.f32 %v2142
    %2145 = vmin.xlane.f32.xlu0 %v2144
    %v2146 = vpop.xlane.xlu0 %2145
    %vm2147 = vcmp.eq.f32.partialorder %v2144, %v2146
    %v2148 = vsel %vm2147, %v2143, inf
    %2149 = vmin.xlane.f32.xlu0 %v2148
    %v2150 = vpop.xlane.xlu0 %2149
    %v2151 = vcvt.f32.s32 %v2150
    %v2152 = vcvt.f32.s32 %v2146
    %v2153 = vshll.u32 %v2152, 16
    %v2154 = vadd.s32 %v2153, %v2151
    %vm2155 = vcmp.eq.s32.totalorder %v128, %v2154
    %v2156 = vsel %vm2155, 1, 0
    %v2157 = vcvt.s32.f32 %v2156
    %vm2158 = vcmp.eq.s32.totalorder %v128, 6
    %v2159 = vsel %vm2158, %v2154, 0
    %v2160 = vadd.s32 %v1872, %v2159
    %v2161 = vsel %vm2158, 1, 0
    %v2162 = vcvt.s32.f32 %v2161
    %v2163 = vmul.f32 %v1978, %v2162
    %v2164 = vmul.f32 %v1993, %v2162
    %v2165 = vadd.f32 %v1877, %v2163
    %v2166 = vadd.f32 %v1878, %v2164
    %s2167 = scalar_lea.vmem [#allocation8], 12
    %v2168 = vld [vmem:[%s2167] sm:$0x3]
    %v2169 = vmul.f32 %v2168, %v2134
    %v2170 = vsel %vm398, %v2169, 0.0
    %2171 = vadd.xlane.f32.xlu0 %v2170
    %v2172 = vpop.xlane.xlu0 %2171
    %v2173 = vsub.f32 0.0, %v2172
    %v2174 = vadd.f32 %v1886, %v2173
    %2175 = vmatpush.msra.mxu0 0.0
    %2176 = vmatpush.msra.mxu0 0.0
    %2177 = vmatpush.msra.mxu0 0.0
    %2178 = vmatpush.msra.mxu0 0.0
    %2179 = vmatpush.msra.mxu0 0.0
    %2180 = vmatpush.msra.mxu0 0.0
    %2181 = vmatpush.msra.mxu0 0.0
    %2182 = vmatpush.msra.mxu0 0.0
    %2183 = vmatpush.msra.mxu0 0.0
    %2184 = vmatpush.msra.mxu0 0.0
    %2185 = vmatpush.msra.mxu0 0.0
    %2186 = vmatpush.msra.mxu0 0.0
    %2187 = vmatpush.msra.mxu0 %v116
    %2188 = vmatpush.msra.mxu0 %v115
    %2189 = vmatpush.msra.mxu0 %v114
    %2190 = vmatpush.msra.mxu0 %v113
    %2191 = vmatmul.f32.gmra.mxu0 %v2100
    %v2192 = vpop.f32.mrf.mxu0
    %v2193 = vadd.f32 0.0, %v2192
    %2194 = vdwg.mxu0
    %v2195 = vadd.f32 %v2193, %v160
    %v2197 = vrot.slane %v2193, 1
    %v2198 = vperm.slane %v2193, 0
    %v2199 = vperm.slane %v2197, 0
    %v2202 = vadd.f32 %v2198, %v172
    %v2203 = vadd.f32 %v2199, %v174
    %v2204 = vtanh.pop %v2202
    %v2205 = vtanh.pop %v2203
    %v2206 = vmul.f32 %v2204, %v184
    %v2207 = vmul.f32 %v2205, %v184
    %2210 = vrot.lane.b32.xlu0 %v2206, 32
    %v2211 = vpop.permute.xlu0 %2210
    %2212 = vrot.lane.b32.xlu0 %v2207, 32
    %v2213 = vpop.permute.xlu0 %2212
    %v2216 = vsel %vm133, %v2211, 0.0
    %2217 = vadd.xlane.f32.xlu0 %v2216
    %v2218 = vpop.xlane.xlu0 %2217
    %v2219 = vsel %vm133, %v2213, 0.0
    %2220 = vadd.xlane.f32.xlu0 %v2219
    %v2221 = vpop.xlane.xlu0 %2220
    %v2222 = vrot.slane %v2218, 4
    %v2223 = vmax.f32 %v2218, %v2222
    %v2224 = vrot.slane %v2223, 2
    %v2225 = vmax.f32 %v2223, %v2224
    %v2226 = vrot.slane %v2225, 1
    %v2227 = vmax.f32 %v2225, %v2226
    %v2228 = vrot.slane %v2221, 4
    %v2229 = vmax.f32 %v2221, %v2228
    %v2230 = vrot.slane %v2229, 2
    %v2231 = vmax.f32 %v2229, %v2230
    %v2232 = vrot.slane %v2231, 1
    %v2233 = vmax.f32 %v2231, %v2232
    %v2234 = vsub.f32 %v2218, %v2227
    %v2235 = vsub.f32 %v2221, %v2233
    %v2236 = vmul.f32 %v2234, 1.442695
    %v2237 = vpow.pop %v2236
    %v2238 = vmul.f32 %v2235, 1.442695
    %v2239 = vpow.pop %v2238
    %v2240 = vrot.slane %v2237, 4
    %v2241 = vadd.f32 %v2237, %v2240
    %v2242 = vrot.slane %v2241, 2
    %v2243 = vadd.f32 %v2241, %v2242
    %v2244 = vrot.slane %v2243, 1
    %v2245 = vadd.f32 %v2243, %v2244
    %v2246 = vrot.slane %v2239, 4
    %v2247 = vadd.f32 %v2239, %v2246
    %v2248 = vrot.slane %v2247, 2
    %v2249 = vadd.f32 %v2247, %v2248
    %v2250 = vrot.slane %v2249, 1
    %v2251 = vadd.f32 %v2249, %v2250
    %v2252 = vrcp.pop %v2245
    %v2253 = vmul.f32 %v2245, %v2252
    %v2254 = vsub.f32 1.0, %v2253
    %v2255 = vmul.f32 %v2252, %v2254
    %v2256 = vadd.f32 %v2252, %v2255
    %vm2257 = vweird.f32 %v2245
    %vm2258 = vweird.f32 %v2252
    %vm2259 = vmor %vm2257, %vm2258
    %v2260 = vsel %vm2259, %v2252, %v2256
    %v2261 = vand.u32 2147483647, %v2245
    %vm2262 = vcmp.eq.f32.partialorder %v2261, 8.507059e+37
    %v2263 = vand.u32 %v2245, 2147483648
    %v2264 = vor.u32 1.1754944e-38, %v2263
    %v2265 = vsel %vm2262, %v2264, %v2260
    %v2266 = vmul.f32 %v2237, %v2265
    %v2267 = vrcp.pop %v2251
    %v2268 = vmul.f32 %v2251, %v2267
    %v2269 = vsub.f32 1.0, %v2268
    %v2270 = vmul.f32 %v2267, %v2269
    %v2271 = vadd.f32 %v2267, %v2270
    %vm2272 = vweird.f32 %v2251
    %vm2273 = vweird.f32 %v2267
    %vm2274 = vmor %vm2272, %vm2273
    %v2275 = vsel %vm2274, %v2267, %v2271
    %v2276 = vand.u32 2147483647, %v2251
    %vm2277 = vcmp.eq.f32.partialorder %v2276, 8.507059e+37
    %v2278 = vand.u32 %v2251, 2147483648
    %v2279 = vor.u32 1.1754944e-38, %v2278
    %v2280 = vsel %vm2277, %v2279, %v2275
    %v2281 = vmul.f32 %v2239, %v2280
    %v2282 = vmul.f32 %v2266, %v106
    %v2283 = vmul.f32 %v2281, %v107
    %v2284 = vsel %vm133, %v2282, 0.0
    %v2285 = vrot.slane %v2284, 4
    %v2286 = vadd.f32 %v2284, %v2285
    %v2287 = vrot.slane %v2286, 2
    %v2288 = vadd.f32 %v2286, %v2287
    %v2289 = vrot.slane %v2288, 1
    %v2290 = vadd.f32 %v2288, %v2289
    %v2291 = vsel %vm133, %v2283, 0.0
    %v2292 = vrot.slane %v2291, 4
    %v2293 = vadd.f32 %v2291, %v2292
    %v2294 = vrot.slane %v2293, 2
    %v2295 = vadd.f32 %v2293, %v2294
    %v2296 = vrot.slane %v2295, 1
    %v2297 = vadd.f32 %v2295, %v2296
    %v2300 = vsel %vm280, %v2297, %v2290
    %v2301 = vsel %vm133, %v2300, 0
    %2303 = vmatpush.msra.mxu0 0.0
    %2304 = vmatpush.msra.mxu0 0.0
    %2305 = vmatpush.msra.mxu0 0.0
    %2306 = vmatpush.msra.mxu0 0.0
    %2307 = vmatpush.msra.mxu0 0.0
    %2308 = vmatpush.msra.mxu0 0.0
    %2309 = vmatpush.msra.mxu0 0.0
    %2310 = vmatpush.msra.mxu0 0.0
    %2311 = vmatpush.msra.mxu0 0.0
    %2312 = vmatpush.msra.mxu0 0.0
    %2313 = vmatpush.msra.mxu0 0.0
    %2314 = vmatpush.msra.mxu0 0.0
    %2315 = vmatpush.msra.mxu0 %v120
    %2316 = vmatpush.msra.mxu0 %v119
    %2317 = vmatpush.msra.mxu0 %v118
    %2318 = vmatpush.msra.mxu0 %v117
    %2319 = vmatmul.f32.gmra.mxu0 %v2301
    %v2320 = vpop.f32.mrf.mxu0
    %v2321 = vadd.f32 0.0, %v2320
    %2322 = vdwg.mxu0
    %v2324 = vsel %vm304, %v2157, 0
    %2326 = vmatpush.msra.mxu0 0.0
    %2327 = vmatpush.msra.mxu0 0.0
    %2328 = vmatpush.msra.mxu0 0.0
    %2329 = vmatpush.msra.mxu0 0.0
    %2330 = vmatpush.msra.mxu0 0.0
    %2331 = vmatpush.msra.mxu0 0.0
    %2332 = vmatpush.msra.mxu0 0.0
    %2333 = vmatpush.msra.mxu0 0.0
    %2334 = vmatpush.msra.mxu0 0.0
    %2335 = vmatpush.msra.mxu0 0.0
    %2336 = vmatpush.msra.mxu0 0.0
    %2337 = vmatpush.msra.mxu0 0.0
    %2338 = vmatpush.msra.mxu0 0.0
    %2339 = vmatpush.msra.mxu0 0.0
    %2340 = vmatpush.msra.mxu0 %v111
    %2341 = vmatpush.msra.mxu0 %v110
    %2342 = vmatmul.f32.gmra.mxu0 %v2324
    %v2343 = vpop.f32.mrf.mxu0
    %v2344 = vadd.f32 %v2321, %v2343
    %2345 = vdwg.mxu0
    %v2346 = vadd.f32 %v2344, %v2193
    %v2347 = vxor.u32 %v2346, 2147483648
    %v2348 = vmul.f32 %v2347, 1.442695
    %v2349 = vpow.pop %v2348
    %v2350 = vadd.f32 %v2349, 1.0
    %v2351 = vrcp.pop %v2350
    %v2352 = vmul.f32 %v2350, %v2351
    %v2353 = vsub.f32 1.0, %v2352
    %v2354 = vmul.f32 %v2351, %v2353
    %v2355 = vadd.f32 %v2351, %v2354
    %vm2356 = vweird.f32 %v2350
    %vm2357 = vweird.f32 %v2351
    %vm2358 = vmor %vm2356, %vm2357
    %v2359 = vsel %vm2358, %v2351, %v2355
    %v2360 = vand.u32 2147483647, %v2350
    %vm2361 = vcmp.eq.f32.partialorder %v2360, 8.507059e+37
    %v2362 = vand.u32 %v2350, 2147483648
    %v2363 = vor.u32 1.1754944e-38, %v2362
    %v2364 = vsel %vm2361, %v2363, %v2359
    %v2365 = vmul.f32 1.0, %v2364
    %2367 = vrot.lane.b32.xlu0 %v2195, 64
    %v2368 = vpop.permute.xlu0 %2367
    %v2370 = vmul.f32 %v2365, %v2368
    %2372 = vrot.lane.b32.xlu0 %v2370, 64
    %v2373 = vpop.permute.xlu0 %2372
    %v2375 = vadd.f32 %v2344, %v2373
    %v2376 = vtanh.pop %v2375
    %v2377 = vsub.f32 1.0, %v2365
    %2379 = vrot.lane.b32.xlu0 %v2376, 96
    %v2380 = vpop.permute.xlu0 %2379
    %v2382 = vmul.f32 %v2377, %v2380
    %v2383 = vmul.f32 %v2365, %v2096
    %v2384 = vadd.f32 %v2382, %v2383
    %2386 = vrot.lane.b32.xlu0 %v2384, 96
    %v2387 = vpop.permute.xlu0 %2386
    %v2388 = vsel %vm133, %v2387, 0
    %2390 = vmatpush.msra.mxu0 0.0
    %2391 = vmatpush.msra.mxu0 0.0
    %2392 = vmatpush.msra.mxu0 0.0
    %2393 = vmatpush.msra.mxu0 0.0
    %2394 = vmatpush.msra.mxu0 0.0
    %2395 = vmatpush.msra.mxu0 0.0
    %2396 = vmatpush.msra.mxu0 0.0
    %2397 = vmatpush.msra.mxu0 0.0
    %2398 = vmatpush.msra.mxu0 0.0
    %2399 = vmatpush.msra.mxu0 0.0
    %2400 = vmatpush.msra.mxu0 0.0
    %2401 = vmatpush.msra.mxu0 0.0
    %2402 = vmatpush.msra.mxu0 %v125
    %2403 = vmatpush.msra.mxu0 %v124
    %2404 = vmatpush.msra.mxu0 %v123
    %2405 = vmatpush.msra.mxu0 %v122
    %2406 = vmatmul.f32.gmra.mxu0 %v2388
    %v2407 = vpop.f32.mrf.mxu0
    %v2408 = vadd.f32 %v371, %v2407
    %2409 = vdwg.mxu0
    %v2410 = vsel %vm398, %v2408, -inf
    %2411 = vmax.xlane.f32.xlu0 %v2410
    %v2412 = vpop.xlane.xlu0 %2411
    %v2413 = vsub.f32 %v2408, %v2412
    %v2414 = vmul.f32 %v2413, 1.442695
    %v2415 = vpow.pop %v2414
    %v2416 = vsel %vm398, %v2415, 0.0
    %2417 = vadd.xlane.f32.xlu0 %v2416
    %v2418 = vpop.xlane.xlu0 %2417
    %v2419 = vlog2.pop %v2418
    %v2420 = vmul.f32 %v2419, 0.6931472
    %v2421 = vadd.f32 %v2420, %v2412
    %v2422 = vsub.f32 %v2408, %v2421
    %v2423 = vsel %vm398, %v2422, -inf
    %2424 = vmax.xlane.f32.xlu0 %v2423
    %v2425 = vpop.xlane.xlu0 %2424
    %vm2426 = vcmp.eq.f32.partialorder %v2422, %v2425
    %v2427 = vsel %vm2426, %v128, 16
    %v2428 = vsel %vm398, %v2427, 2147483647
    %v2429 = vand.u32 %v2428, 65535
    %v2430 = vshra.s32 %v2428, 16
    %v2431 = vcvt.s32.f32 %v2429
    %v2432 = vcvt.s32.f32 %v2430
    %2433 = vmin.xlane.f32.xlu0 %v2432
    %v2434 = vpop.xlane.xlu0 %2433
    %vm2435 = vcmp.eq.f32.partialorder %v2432, %v2434
    %v2436 = vsel %vm2435, %v2431, inf
    %2437 = vmin.xlane.f32.xlu0 %v2436
    %v2438 = vpop.xlane.xlu0 %2437
    %v2439 = vcvt.f32.s32 %v2438
    %v2440 = vcvt.f32.s32 %v2434
    %v2441 = vshll.u32 %v2440, 16
    %v2442 = vadd.s32 %v2441, %v2439
    %vm2443 = vcmp.eq.s32.totalorder %v128, 7
    %v2444 = vsel %vm2443, %v2442, 0
    %v2445 = vadd.s32 %v2160, %v2444
    %v2446 = vsel %vm2443, 1, 0
    %v2447 = vcvt.s32.f32 %v2446
    %v2448 = vmul.f32 %v2266, %v2447
    %v2449 = vmul.f32 %v2281, %v2447
    %v2450 = vadd.f32 %v2165, %v2448
    %v2451 = vadd.f32 %v2166, %v2449
    %s2452 = scalar_lea.vmem [#allocation8], 14
    %v2453 = vld [vmem:[%s2452] sm:$0x3]
    %v2454 = vmul.f32 %v2453, %v2422
    %v2455 = vsel %vm398, %v2454, 0.0
    %2456 = vadd.xlane.f32.xlu0 %v2455
    %v2457 = vpop.xlane.xlu0 %2456
    %v2458 = vsub.f32 0.0, %v2457
    %v2459 = vadd.f32 %v2174, %v2458
    %vm2460 = vcmask 58368
    %2461 = vst.msk [vmem:[#allocation10] sm:$0x3] %vm2460, %v2445
    %vm2462 = vcmask 64512
    %2463 = vst.msk [vmem:[#allocation11] sm:$0xff] %vm2462, %v2450
    %2464 = vst.msk [vmem:[#allocation11 + $0x8] sm:$0xff] %vm2462, %v2451
    %vm2465 = vcmask 1041408
    %v2466 = vsel %vm2465, %v2459, 0.0
    %v2467 = vrot.slane %v2466, 4
    %v2468 = vadd.f32 %v2466, %v2467
    %v2469 = vrot.slane %v2468, 2
    %v2470 = vadd.f32 %v2468, %v2469
    %v2471 = vrot.slane %v2470, 1
    %v2472 = vadd.f32 %v2470, %v2471
    %v2473 = vmul.f32 %v2472, 0.5
    %vm2474 = vcmask 0
    %2475 = vst.msk [vmem:[#allocation13] sm:$0x1] %vm2474, %v2473
    // Predicated region
    $region62: #{tpu_custom_call.1} parent=1 // pred_check
      _
    $region63: #{tpu_custom_call.1} parent=1 // pred_check_branch
      %2477 = sbr.rel (0) target = $region65
    $region64: #{tpu_custom_call.1} parent=1 // pred_region
      %2479 = vsyncadd [#allocation4], 0
      %s2481 = sshll.u32 [#allocation10], 4
      %s2482 = int_to_ptr.vmem [resolvable:$true] %s2481
      %s2483 = sshll.u32 %s11, 4
      %s2484 = int_to_ptr.hbm [resolvable:$true] %s2483
      %2486 = dma.vmem_to_hbm [thread:$0]  %s2482, 32, %s2484, [#allocation4]
    $region65: #{tpu_custom_call.1} parent=1 // pred_fallthru
      _
    // Predicated region
    $region66: #{tpu_custom_call.1} parent=1 // pred_check
      _
    $region67: #{tpu_custom_call.1} parent=1 // pred_check_branch
      %2488 = sbr.rel (0) target = $region69
    $region68: #{tpu_custom_call.1} parent=1 // pred_region
      %2490 = vsyncadd [#allocation12], 0
      %s2491 = sshll.u32 [#allocation11], 4
      %s2492 = int_to_ptr.vmem [resolvable:$true] %s2491
      %s2493 = sshll.u32 %s12, 4
      %s2494 = int_to_ptr.hbm [resolvable:$true] %s2493
      %2499 = dma.vmem_to_hbm [thread:$0]  %s2492, 256, %s2494, [#allocation12], 128, 128, 8
    $region69: #{tpu_custom_call.1} parent=1 // pred_fallthru
      _
    // Predicated region
    $region70: #{tpu_custom_call.1} parent=1 // pred_check
      _
    $region71: #{tpu_custom_call.1} parent=1 // pred_check_branch
      %2501 = sbr.rel (0) target = $region73
    $region72: #{tpu_custom_call.1} parent=1 // pred_region
      %2503 = vsyncadd [#allocation12], 0
      %s2505 = sshll.u32 [#allocation13], 4
      %s2506 = int_to_ptr.vmem [resolvable:$true] %s2505
      %s2507 = sshll.u32 %s13, 4
      %s2508 = int_to_ptr.hbm [resolvable:$true] %s2507
      %2510 = dma.vmem_to_hbm [thread:$0]  %s2506, 16, %s2508, [#allocation12]
    $region73: #{tpu_custom_call.1} parent=1 // pred_fallthru
      _
    // Predicated region
    $region74: #{tpu_custom_call.1} parent=1 // pred_check
      _
    $region75: #{tpu_custom_call.1} parent=1 // pred_check_branch
      %2512 = sbr.rel (0) target = $region77
    $region76: #{tpu_custom_call.1} parent=1 // pred_region
      %2514 = dma.done [#allocation4], 32
    $region77: #{tpu_custom_call.1} parent=1 // pred_fallthru
      _
    // Predicated region
    $region78: #{tpu_custom_call.1} parent=1 // pred_check
      _
    $region79: #{tpu_custom_call.1} parent=1 // pred_check_branch
      %2516 = sbr.rel (0) target = $region81
    $region80: #{tpu_custom_call.1} parent=1 // pred_region
      %2518 = dma.done [#allocation12], 256
    $region81: #{tpu_custom_call.1} parent=1 // pred_fallthru
      _
    // Predicated region
    $region82: #{tpu_custom_call.1} parent=1 // pred_check
      _
    $region83: #{tpu_custom_call.1} parent=1 // pred_check_branch
      %2520 = sbr.rel (0) target = $region85
    $region84: #{tpu_custom_call.1} parent=1 // pred_region
      %2522 = dma.done [#allocation12], 16
    $region85: #{tpu_custom_call.1} parent=1 // pred_fallthru
      _
    %2523 = vsyncpa [#allocation3], 1
    %2524 = vsyncpa [#allocation6], 1
    %2525 = vsyncpa [#allocation9], 1
    %2526 = vsyncpa [#allocation4], 1
    %2527 = vsyncpa [#allocation12], 1

</llo_original>
